<compile_context>
chip_gen: v6e
topology: v6e:2x2x1
jax: 0.10.0
libtpu: 0.0.40
codegen_flags: <defaults>
</compile_context>

<pallas_src>
import functools

import jax
import jax.numpy as jnp
from jax import lax
from jax.experimental import pallas as pl
from jax.experimental.pallas import tpu as pltpu


# ---------------------------------------------------------------------------
# Helpers
# ---------------------------------------------------------------------------
def _round_up(x, m):
    return (x + m - 1) // m * m


def _pick_div_tile(dim, desired, align):
    """Largest tile <= desired that divides `dim` and is a multiple of `align`;
    falls back to the full dim (a full-extent block is always legal)."""
    if dim <= desired:
        return dim
    t = (desired // align) * align
    while t >= align:
        if dim % t == 0:
            return t
        t -= align
    return dim


def _choose_row_tiling(M, desired):
    """Row (M) tiling that avoids a pad copy whenever possible. Returns (tile, Mp)."""
    if M <= desired:
        return M, M
    t = (desired // 8) * 8
    while t >= 8:
        if M % t == 0:
            return t, M
        t -= 8
    return desired, _round_up(M, desired)   # rare fallback: pad once


@functools.lru_cache(maxsize=None)
def _hw_config():
    """Per-generation VMEM budget / tile defaults (conservative on 64-MiB-VMEM v7x)."""
    try:
        cap = pltpu.get_tpu_info().vmem_capacity_bytes
    except Exception:
        cap = 0
    if cap >= 100 * 1024 * 1024:      # v5e / v6e: 128 MiB physical VMEM
        return {"vmem": 64 * 1024 * 1024, "tm": 512, "tn": 512, "tk": 512}
    # v7x (64 MiB per TC) or unknown backend: stay conservative.
    return {"vmem": 32 * 1024 * 1024, "tm": 256, "tn": 512, "tk": 512}


# ---------------------------------------------------------------------------
# Kernel 1: tiled matmul (+ optional bias, + optional fused GELU)
# ---------------------------------------------------------------------------
def _matmul_epilogue(acc, b_ref, activation):
    out = acc
    if b_ref is not None:
        out = out + b_ref[...].astype(jnp.float32)     # (1, tn) broadcasts
    if activation == "gelu":
        # TODO(synk): PyTorch nn.GELU is erf-exact; tanh approximation used here.
        out = jax.nn.gelu(out, approximate=True)
    return out


def _matmul_bias_kernel(x_ref, w_ref, b_ref, o_ref, acc_ref, *, activation):
    @pl.when(pl.program_id(2) == 0)
    def _init():
        acc_ref[...] = jnp.zeros_like(acc_ref)

    # bf16 MXU feed, f32 accumulation.
    acc_ref[...] += jnp.dot(x_ref[...].astype(jnp.bfloat16),
                            w_ref[...].astype(jnp.bfloat16),
                            preferred_element_type=jnp.float32)

    @pl.when(pl.program_id(2) == pl.num_programs(2) - 1)
    def _finalize():
        o_ref[...] = _matmul_epilogue(acc_ref[...], b_ref, activation).astype(o_ref.dtype)


def _matmul_nobias_kernel(x_ref, w_ref, o_ref, acc_ref, *, activation):
    @pl.when(pl.program_id(2) == 0)
    def _init():
        acc_ref[...] = jnp.zeros_like(acc_ref)

    acc_ref[...] += jnp.dot(x_ref[...].astype(jnp.bfloat16),
                            w_ref[...].astype(jnp.bfloat16),
                            preferred_element_type=jnp.float32)

    @pl.when(pl.program_id(2) == pl.num_programs(2) - 1)
    def _finalize():
        o_ref[...] = _matmul_epilogue(acc_ref[...], None, activation).astype(o_ref.dtype)


def pallas_matmul(x, w, bias=None, activation=None, out_dtype=None):
    """y = activation(x @ w [+ bias]); tiled, double-buffered, f32 accumulation."""
    M, K = x.shape
    K2, N = w.shape
    assert K == K2
    out_dtype = out_dtype or x.dtype
    cfg = _hw_config()

    tm_eff, Mp = _choose_row_tiling(M, cfg["tm"])
    tk_eff = _pick_div_tile(K, cfg["tk"], 128)
    tn_eff = _pick_div_tile(N, cfg["tn"], 128)
    xp = x if Mp == M else jnp.pad(x, ((0, Mp - M), (0, 0)))

    in_specs = [pl.BlockSpec((tm_eff, tk_eff), lambda i, j, k: (i, k)),
                pl.BlockSpec((tk_eff, tn_eff), lambda i, j, k: (k, j))]
    args = [xp, w]
    if bias is not None:
        in_specs.append(pl.BlockSpec((1, tn_eff), lambda i, j, k: (0, j)))
        args.append(bias.reshape(1, N))
        kern = functools.partial(_matmul_bias_kernel, activation=activation)
    else:
        kern = functools.partial(_matmul_nobias_kernel, activation=activation)

    grid = (Mp // tm_eff, N // tn_eff, K // tk_eff)
    out = pl.pallas_call(
        kern,
        out_shape=jax.ShapeDtypeStruct((Mp, N), out_dtype),
        grid_spec=pltpu.PrefetchScalarGridSpec(
            num_scalar_prefetch=0,
            grid=grid,
            in_specs=in_specs,
            out_specs=pl.BlockSpec((tm_eff, tn_eff), lambda i, j, k: (i, j)),
            scratch_shapes=[pltpu.VMEM((tm_eff, tn_eff), jnp.float32)],
        ),
        compiler_params=pltpu.CompilerParams(
            dimension_semantics=("parallel", "parallel", "arbitrary"),
            vmem_limit_bytes=cfg["vmem"],
        ),
    )(*args)
    return out[:M] if Mp != M else out


# ---------------------------------------------------------------------------
# Kernel 2: matmul with residual-add + LayerNorm fused into the epilogue
# ---------------------------------------------------------------------------
def _matmul_res_ln_kernel(x_ref, w_ref, b_ref, r_ref, g_ref, be_ref,
                          s_ref, h_ref, acc_ref, *, eps):
    @pl.when(pl.program_id(1) == 0)
    def _init():
        acc_ref[...] = jnp.zeros_like(acc_ref)

    acc_ref[...] += jnp.dot(x_ref[...].astype(jnp.bfloat16),
                            w_ref[...].astype(jnp.bfloat16),
                            preferred_element_type=jnp.float32)

    @pl.when(pl.program_id(1) == pl.num_programs(1) - 1)
    def _finalize():
        s = acc_ref[...] + b_ref[...].astype(jnp.float32) + r_ref[...].astype(jnp.float32)
        mu = jnp.mean(s, axis=-1, keepdims=True)
        c = s - mu
        var = jnp.mean(c * c, axis=-1, keepdims=True)
        h = c * lax.rsqrt(var + eps)
        h = h * g_ref[...].astype(jnp.float32) + be_ref[...].astype(jnp.float32)
        s_ref[...] = s.astype(s_ref.dtype)
        h_ref[...] = h.astype(h_ref.dtype)


def pallas_matmul_residual_ln(x, w, bias, residual, gamma, beta, *, eps=1e-5,
                              ln_dtype=jnp.bfloat16):
    """s = residual + (x @ w + bias); h = LayerNorm(s).
    Output tile is full-D (lane-dense), so LN is computed in the matmul epilogue."""
    M, K = x.shape
    K2, D = w.shape
    assert K == K2 and residual.shape == (M, D)
    cfg = _hw_config()

    tm_eff, Mp = _choose_row_tiling(M, cfg["tm"])
    tk_eff = _pick_div_tile(K, cfg["tk"], 128)
    if Mp != M:
        pad = ((0, Mp - M), (0, 0))
        x, residual = jnp.pad(x, pad), jnp.pad(residual, pad)

    grid = (Mp // tm_eff, K // tk_eff)
    s, h = pl.pallas_call(
        functools.partial(_matmul_res_ln_kernel, eps=eps),
        out_shape=(jax.ShapeDtypeStruct((Mp, D), jnp.float32),
                   jax.ShapeDtypeStruct((Mp, D), ln_dtype)),
        grid_spec=pltpu.PrefetchScalarGridSpec(
            num_scalar_prefetch=0,
            grid=grid,
            in_specs=[
                pl.BlockSpec((tm_eff, tk_eff), lambda i, k: (i, k)),
                pl.BlockSpec((tk_eff, D), lambda i, k: (k, 0)),
                pl.BlockSpec((1, D), lambda i, k: (0, 0)),
                pl.BlockSpec((tm_eff, D), lambda i, k: (i, 0)),   # residual (no k re-DMA)
                pl.BlockSpec((1, D), lambda i, k: (0, 0)),
                pl.BlockSpec((1, D), lambda i, k: (0, 0)),
            ],
            out_specs=[pl.BlockSpec((tm_eff, D), lambda i, k: (i, 0)),
                       pl.BlockSpec((tm_eff, D), lambda i, k: (i, 0))],
            scratch_shapes=[pltpu.VMEM((tm_eff, D), jnp.float32)],
        ),
        compiler_params=pltpu.CompilerParams(
            dimension_semantics=("parallel", "arbitrary"),
            vmem_limit_bytes=cfg["vmem"],
        ),
    )(x, w, bias.reshape(1, D), residual, gamma.reshape(1, D), beta.reshape(1, D))
    if Mp != M:
        s, h = s[:M], h[:M]
    return s, h


# ---------------------------------------------------------------------------
# Kernel 3: pos-emb add + LayerNorm (pos_emb never broadcast across batch in HBM)
# ---------------------------------------------------------------------------
def _posemb_ln_kernel(x_ref, pe_ref, g_ref, b_ref, s_ref, h_ref, *, eps):
    s = x_ref[...].astype(jnp.float32) + pe_ref[...].astype(jnp.float32)
    mu = jnp.mean(s, axis=-1, keepdims=True)
    c = s - mu
    var = jnp.mean(c * c, axis=-1, keepdims=True)
    h = c * lax.rsqrt(var + eps)
    h = h * g_ref[...].astype(jnp.float32) + b_ref[...].astype(jnp.float32)
    s_ref[...] = s.astype(s_ref.dtype)
    h_ref[...] = h.astype(h_ref.dtype)


def pallas_posemb_layernorm(x, pos_emb, gamma, beta, *, eps=1e-5, ln_dtype=jnp.bfloat16):
    """s = x + pos_emb ; h = LayerNorm(s).  pos_emb stays (1, N, D) (indexed at batch 0)."""
    B, N, D = x.shape
    cfg = _hw_config()
    tr = _pick_div_tile(N, 256, 8)
    pe = pos_emb.reshape(1, N, D)
    g3, b3 = gamma.reshape(1, 1, D), beta.reshape(1, 1, D)

    row_spec = pl.BlockSpec((1, tr, D), lambda b, i: (b, i, 0))
    s, h = pl.pallas_call(
        functools.partial(_posemb_ln_kernel, eps=eps),
        out_shape=(jax.ShapeDtypeStruct((B, N, D), jnp.float32),
                   jax.ShapeDtypeStruct((B, N, D), ln_dtype)),
        grid=(B, N // tr),
        in_specs=[row_spec,
                  pl.BlockSpec((1, tr, D), lambda b, i: (0, i, 0)),
                  pl.BlockSpec((1, 1, D), lambda b, i: (0, 0, 0)),
                  pl.BlockSpec((1, 1, D), lambda b, i: (0, 0, 0))],
        out_specs=(row_spec, row_spec),
        compiler_params=pltpu.CompilerParams(
            dimension_semantics=("parallel", "parallel"),
            vmem_limit_bytes=cfg["vmem"],
        ),
    )(x, pe, g3, b3)
    return s, h


# ---------------------------------------------------------------------------
# Kernel 4: multi-head attention core
# ---------------------------------------------------------------------------
def _single_head_attention(q, k, v, scale):
    # QK^T contracting the last dims of both operands (no k transpose / relayout).
    s = lax.dot_general(q.astype(jnp.bfloat16), k.astype(jnp.bfloat16),
                        (((1,), (1,)), ((), ())),
                        preferred_element_type=jnp.float32) * scale
    s = s - jnp.max(s, axis=-1, keepdims=True)
    # TODO(synk): on v6e/v7x a bf16 exp would double EUP throughput; kept f32 (safe on v5e).
    p = jnp.exp(s)
    p = p * pl.reciprocal(jnp.sum(p, axis=-1, keepdims=True), approx=True)
    return jnp.dot(p.astype(jnp.bfloat16), v.astype(jnp.bfloat16),
                   preferred_element_type=jnp.float32)


def _attn_group_kernel(q_ref, k_ref, v_ref, o_ref, *, num_heads, dim_head, scale):
    """One (batch, head-group) step; q/k/v refs are (1, N, num_heads*dim_head)."""
    for h in range(num_heads):                      # static, unrolled
        lo = h * dim_head
        out = _single_head_attention(q_ref[0, :, lo:lo + dim_head],
                                     k_ref[0, :, lo:lo + dim_head],
                                     v_ref[0, :, lo:lo + dim_head], scale)
        o_ref[0, :, lo:lo + dim_head] = out.astype(o_ref.dtype)   # direct, no concat


def _attn_full_kernel(qkv_ref, o_ref, *, heads, dim_head, scale):
    """Fallback: one (1, N, 3*inner) block per batch element; all heads per step."""
    inner = heads * dim_head
    for h in range(heads):
        lo = h * dim_head
        out = _single_head_attention(
            qkv_ref[0, :, lo:lo + dim_head],
            qkv_ref[0, :, inner + lo:inner + lo + dim_head],
            qkv_ref[0, :, 2 * inner + lo:2 * inner + lo + dim_head], scale)
        o_ref[0, :, lo:lo + dim_head] = out.astype(o_ref.dtype)


def pallas_attention_core(qkv, *, heads, dim_head, scale):
    # TODO(synk): for long sequences (N >= ~512) switch to flash-style KV tiling with
    # online-softmax scratch; for ViT-scale N the monolithic (N, N) score tile is fine.
    B, N, I3 = qkv.shape
    inner = heads * dim_head
    assert I3 == 3 * inner
    out_dtype = qkv.dtype
    cfg = _hw_config()

    # Smallest head group whose column width is a multiple of 128: gives unmasked
    # (lane-aligned) q/k/v slices and a 2nd parallel grid axis (v7x megacore).
    hpg = None
    for g in range(1, heads + 1):
        if heads % g == 0 and (g * dim_head) % 128 == 0:
            hpg = g
            break

    if hpg is not None:
        G = heads // hpg
        gw = hpg * dim_head
        kern = functools.partial(_attn_group_kernel, num_heads=hpg,
                                 dim_head=dim_head, scale=scale)
        return pl.pallas_call(
            kern,
            out_shape=jax.ShapeDtypeStruct((B, N, inner), out_dtype),
            grid=(B, G),
            in_specs=[
                pl.BlockSpec((1, N, gw), lambda b, gi: (b, 0, gi)),            # q cols
                pl.BlockSpec((1, N, gw), lambda b, gi: (b, 0, G + gi)),        # k cols
                pl.BlockSpec((1, N, gw), lambda b, gi: (b, 0, 2 * G + gi)),    # v cols
            ],
            out_specs=pl.BlockSpec((1, N, gw), lambda b, gi: (b, 0, gi)),
            compiler_params=pltpu.CompilerParams(
                dimension_semantics=("parallel", "parallel"),
                vmem_limit_bytes=cfg["vmem"],
            ),
        )(qkv, qkv, qkv)

    # Fallback (head width not 128-lane alignable): full-width block per batch element.
    kern = functools.partial(_attn_full_kernel, heads=heads, dim_head=dim_head, scale=scale)
    return pl.pallas_call(
        kern,
        out_shape=jax.ShapeDtypeStruct((B, N, inner), out_dtype),
        grid=(B,),
        in_specs=[pl.BlockSpec((1, N, 3 * inner), lambda b: (b, 0, 0))],
        out_specs=pl.BlockSpec((1, N, inner), lambda b: (b, 0, 0)),
        compiler_params=pltpu.CompilerParams(
            dimension_semantics=("parallel",),
            vmem_limit_bytes=cfg["vmem"],
        ),
    )(qkv)


# ---------------------------------------------------------------------------
# Encoder forward (inference)
# ---------------------------------------------------------------------------
def encoder_forward(inputs, params, *, heads, dim_head, num_layers, eps=1e-5):
    """Encoder.forward (eval): pos-emb add, num_layers Encoder1DBlocks, final LN.
    nn.Dropout layers are identity at inference and are skipped."""
    B, N, D = inputs.shape
    inner = heads * dim_head
    scale = dim_head ** (-0.5)
    layers = params["layers"]

    if num_layers == 0:
        _, h = pallas_posemb_layernorm(inputs, params["pos_emb"], params["lnf_g"],
                                       params["lnf_b"], eps=eps, ln_dtype=jnp.float32)
        return h

    # x = inputs + pos_emb ; h = LN1^{(0)}(x)   (fused add + LN kernel)
    x3, h3 = pallas_posemb_layernorm(inputs, params["pos_emb"],
                                     layers[0]["ln1_g"], layers[0]["ln1_b"], eps=eps)
    x = x3.reshape(B * N, D)          # f32 residual stream
    h = h3.reshape(B * N, D)          # bf16 LN output (matmul feed)

    for l in range(num_layers):
        lp = layers[l]
        # ---- Attention ----
        qkv = pallas_matmul(h, lp["w_qkv"], out_dtype=jnp.bfloat16)       # bias-less
        a = pallas_attention_core(qkv.reshape(B, N, 3 * inner),
                                  heads=heads, dim_head=dim_head, scale=scale)
        # out-projection fused with residual add + LN2
        x, h = pallas_matmul_residual_ln(a.reshape(B * N, inner), lp["w_out"],
                                         lp["b_out"], x, lp["ln2_g"], lp["ln2_b"],
                                         eps=eps)
        # ---- MLP ----
        m = pallas_matmul(h, lp["w_mlp1"], lp["b_mlp1"], activation="gelu",
                          out_dtype=jnp.bfloat16)
        if l + 1 < num_layers:
            g_nxt, b_nxt, ln_dt = layers[l + 1]["ln1_g"], layers[l + 1]["ln1_b"], jnp.bfloat16
        else:
            g_nxt, b_nxt, ln_dt = params["lnf_g"], params["lnf_b"], jnp.float32
        # fc2 fused with residual add + (next block's LN1 / final LN)
        x, h = pallas_matmul_residual_ln(m, lp["w_mlp2"], lp["b_mlp2"], x,
                                         g_nxt, b_nxt, eps=eps, ln_dtype=ln_dt)

    return h.reshape(B, N, D)


# ---------------------------------------------------------------------------
# Pure-JAX f32 reference for sanity checking
# ---------------------------------------------------------------------------
def encoder_reference(inputs, params, *, heads, dim_head, num_layers, eps=1e-5):
    def ln(t, g, b):
        mu = jnp.mean(t, axis=-1, keepdims=True)
        var = jnp.mean((t - mu) ** 2, axis=-1, keepdims=True)
        return (t - mu) / jnp.sqrt(var + eps) * g + b

    B, N, D = inputs.shape
    inner = heads * dim_head
    scale = dim_head ** (-0.5)
    x = inputs + params["pos_emb"]
    for l in range(num_layers):
        lp = params["layers"][l]
        h = ln(x, lp["ln1_g"], lp["ln1_b"])
        qkv = h @ lp["w_qkv"]
        q, k, v = jnp.split(qkv, 3, axis=-1)
        rh = lambda t: jnp.transpose(t.reshape(B, N, heads, dim_head), (0, 2, 1, 3))
        q, k, v = rh(q), rh(k), rh(v)
        dots = jnp.einsum("bhid,bhjd->bhij", q, k) * scale
        attn = jax.nn.softmax(dots, axis=-1)
        o = jnp.einsum("bhij,bhjd->bhid", attn, v)
        o = jnp.transpose(o, (0, 2, 1, 3)).reshape(B, N, inner)
        x = x + (o @ lp["w_out"] + lp["b_out"])
        h2 = ln(x, lp["ln2_g"], lp["ln2_b"])
        m = jax.nn.gelu(h2 @ lp["w_mlp1"] + lp["b_mlp1"], approximate=True)
        m = m @ lp["w_mlp2"] + lp["b_mlp2"]
        x = x + m
    return ln(x, params["lnf_g"], params["lnf_b"])


# ---------------------------------------------------------------------------
if __name__ == "__main__":
    def run_config(seed, B, N, Dim, heads, dim_head, mlp_dim, num_layers):
        inner = heads * dim_head
        key = jax.random.PRNGKey(seed)
        key, kx, kpe = jax.random.split(key, 3)
        x = jax.random.normal(kx, (B, N, Dim), jnp.float32)

        def uniform(k, shape, fan_in):
            bound = 1.0 / (fan_in ** 0.5)
            return jax.random.uniform(k, shape, jnp.float32, -bound, bound)

        # TODO(synk): the PyTorch module re-creates its Linear/LayerNorm/pos-emb params
        # inside forward() with random init; one deterministic init is used instead.
        params = {
            "pos_emb": jax.random.normal(kpe, (1, N, Dim), jnp.float32),
            "lnf_g": jnp.ones((Dim,), jnp.float32),
            "lnf_b": jnp.zeros((Dim,), jnp.float32),
            "layers": [],
        }
        for _ in range(num_layers):
            key, k1, k2, k3, k4, k5, k6, k7 = jax.random.split(key, 8)
            params["layers"].append({
                "ln1_g": jnp.ones((Dim,), jnp.float32),
                "ln1_b": jnp.zeros((Dim,), jnp.float32),
                "w_qkv": uniform(k1, (Dim, 3 * inner), Dim),   # pre-transposed: y = x @ W
                "w_out": uniform(k2, (inner, Dim), inner),
                "b_out": uniform(k3, (Dim,), inner),
                "ln2_g": jnp.ones((Dim,), jnp.float32),
                "ln2_b": jnp.zeros((Dim,), jnp.float32),
                "w_mlp1": uniform(k4, (Dim, mlp_dim), Dim),
                "b_mlp1": uniform(k5, (mlp_dim,), Dim),
                "w_mlp2": uniform(k6, (mlp_dim, Dim), mlp_dim),
                "b_mlp2": uniform(k7, (Dim,), mlp_dim),
            })

        fwd = jax.jit(functools.partial(
            encoder_forward, heads=heads, dim_head=dim_head, num_layers=num_layers))
        y = jax.block_until_ready(fwd(x, params))
        y_ref = encoder_reference(x, params, heads=heads, dim_head=dim_head,
                                  num_layers=num_layers)
        assert y.shape == (B, N, Dim)
        assert y.dtype == jnp.float32
        # bf16 MXU feeds + bf16 intermediate activations => ~1e-2-level deviation vs f32 ref.
        err = float(jnp.max(jnp.abs(y - y_ref)))
        assert jnp.allclose(y, y_ref, atol=1e-1, rtol=1e-1), f"mismatch (max abs err {err})"

    # Primary small config (exercises the full-width attention fallback path).
    run_config(0, B=2, N=8, Dim=32, heads=4, dim_head=8, mlp_dim=64, num_layers=2)
    # Second tiny config exercising the 128-lane-aligned head-group path (2 grid axes).
    run_config(1, B=2, N=16, Dim=64, heads=2, dim_head=128, mlp_dim=32, num_layers=1)

    print("KERNEL_OK")
</pallas_src>

<mosaic_0001>
module attributes {stable_mosaic.version = 11 : i64} {
  func.func @_matmul_res_ln_kernel(%arg0: i32, %arg1: i32, %arg2: memref<16x32xbf16, #tpu.memory_space<vmem>>, %arg3: memref<32x32xf32, #tpu.memory_space<vmem>>, %arg4: memref<1x32xf32, #tpu.memory_space<vmem>>, %arg5: memref<16x32xf32, #tpu.memory_space<vmem>>, %arg6: memref<1x32xf32, #tpu.memory_space<vmem>>, %arg7: memref<1x32xf32, #tpu.memory_space<vmem>>, %arg8: memref<16x32xf32, #tpu.memory_space<vmem>>, %arg9: memref<16x32xbf16, #tpu.memory_space<vmem>>, %arg10: memref<16x32xf32, #tpu.memory_space<vmem>>) attributes {dimension_semantics = [#tpu.dimension_semantics<parallel>, #tpu.dimension_semantics<arbitrary>], iteration_bounds = array<i64: 1, 1>, scalar_prefetch = 0 : i64, scratch_operands = 1 : i64, tpu.core_type = #tpu.core_type<tc>, window_params = [{transform_indices = @transform_0, window_bounds = array<i64: 16, 32>}, {transform_indices = @transform_1, window_bounds = array<i64: 32, 32>}, {pipeline_mode = #tpu.pipeline_mode<synchronous>, transform_indices = @transform_2, window_bounds = array<i64: 1, 32>}, {transform_indices = @transform_3, window_bounds = array<i64: 16, 32>}, {pipeline_mode = #tpu.pipeline_mode<synchronous>, transform_indices = @transform_4, window_bounds = array<i64: 1, 32>}, {pipeline_mode = #tpu.pipeline_mode<synchronous>, transform_indices = @transform_5, window_bounds = array<i64: 1, 32>}, {transform_indices = @transform_6, window_bounds = array<i64: 16, 32>}, {transform_indices = @transform_7, window_bounds = array<i64: 16, 32>}]} {
    %c0_i32 = arith.constant 0 : i32
    %0 = arith.cmpi eq, %arg1, %c0_i32 : i32
    %1 = arith.extui %0 : i1 to i32
    %c0_i32_0 = arith.constant 0 : i32
    %2 = arith.cmpi ne, %1, %c0_i32_0 : i32
    scf.if %2 {
      %cst_10 = arith.constant 0.000000e+00 : f32
      %13 = vector.broadcast %cst_10 : f32 to vector<16x32xf32>
      %c0_11 = arith.constant 0 : index
      %c0_12 = arith.constant 0 : index
      %14 = vector.load %arg10[%c0_11, %c0_12] : memref<16x32xf32, #tpu.memory_space<vmem>>, vector<16x32xf32>
      tpu.vector_store %arg10[%c0_11, %c0_12], %13 {strides = array<i32>} : memref<16x32xf32, #tpu.memory_space<vmem>>, vector<16x32xf32>,
    } else {
    }
    %c0 = arith.constant 0 : index
    %c0_1 = arith.constant 0 : index
    %3 = vector.load %arg10[%c0, %c0_1] : memref<16x32xf32, #tpu.memory_space<vmem>>, vector<16x32xf32>
    %c0_2 = arith.constant 0 : index
    %c0_3 = arith.constant 0 : index
    %4 = vector.load %arg2[%c0_2, %c0_3] : memref<16x32xbf16, #tpu.memory_space<vmem>>, vector<16x32xbf16>
    %c0_4 = arith.constant 0 : index
    %c0_5 = arith.constant 0 : index
    %5 = vector.load %arg3[%c0_4, %c0_5] : memref<32x32xf32, #tpu.memory_space<vmem>>, vector<32x32xf32>
    %6 = arith.truncf %5 : vector<32x32xf32> to vector<32x32xbf16>
    %cst = arith.constant dense<0.000000e+00> : vector<16x32xf32>
    %7 = tpu.matmul %4, %6, %cst {dimension_numbers = #tpu.dot_dimension_numbers<[1], [0], [0], [1], [0, 0, 1, 1], [], []>} : vector<16x32xbf16>, vector<32x32xbf16>, vector<16x32xf32> -> vector<16x32xf32>
    %8 = arith.addf %3, %7 : vector<16x32xf32>
    %c0_6 = arith.constant 0 : index
    %c0_7 = arith.constant 0 : index
    %9 = vector.load %arg10[%c0_6, %c0_7] : memref<16x32xf32, #tpu.memory_space<vmem>>, vector<16x32xf32>
    tpu.vector_store %arg10[%c0_6, %c0_7], %8 {strides = array<i32>} : memref<16x32xf32, #tpu.memory_space<vmem>>, vector<16x32xf32>,
    %c0_i32_8 = arith.constant 0 : i32
    %10 = arith.cmpi eq, %arg1, %c0_i32_8 : i32
    %11 = arith.extui %10 : i1 to i32
    %c0_i32_9 = arith.constant 0 : i32
    %12 = arith.cmpi ne, %11, %c0_i32_9 : i32
    scf.if %12 {
      %c0_10 = arith.constant 0 : index
      %c0_11 = arith.constant 0 : index
      %13 = vector.load %arg10[%c0_10, %c0_11] : memref<16x32xf32, #tpu.memory_space<vmem>>, vector<16x32xf32>
      %c0_12 = arith.constant 0 : index
      %c0_13 = arith.constant 0 : index
      %14 = vector.load %arg4[%c0_12, %c0_13] : memref<1x32xf32, #tpu.memory_space<vmem>>, vector<1x32xf32>
      %15 = vector.broadcast %14 : vector<1x32xf32> to vector<16x32xf32>
      %16 = arith.addf %13, %15 : vector<16x32xf32>
      %c0_14 = arith.constant 0 : index
      %c0_15 = arith.constant 0 : index
      %17 = vector.load %arg5[%c0_14, %c0_15] : memref<16x32xf32, #tpu.memory_space<vmem>>, vector<16x32xf32>
      %18 = arith.addf %16, %17 : vector<16x32xf32>
      %cst_16 = arith.constant dense<0.000000e+00> : vector<16xf32>
      %19 = vector.multi_reduction <add>, %18, %cst_16 [1] : vector<16x32xf32> to vector<16xf32>
      %20 = vector.shape_cast %19 : vector<16xf32> to vector<16x1xf32>
      %cst_17 = arith.constant 3.200000e+01 : f32
      %21 = vector.broadcast %cst_17 : f32 to vector<16x1xf32>
      %22 = arith.divf %20, %21 : vector<16x1xf32>
      %23 = vector.broadcast %22 : vector<16x1xf32> to vector<16x32xf32>
      %24 = arith.subf %18, %23 : vector<16x32xf32>
      %25 = arith.mulf %24, %24 : vector<16x32xf32>
      %cst_18 = arith.constant dense<0.000000e+00> : vector<16xf32>
      %26 = vector.multi_reduction <add>, %25, %cst_18 [1] : vector<16x32xf32> to vector<16xf32>
      %27 = vector.shape_cast %26 : vector<16xf32> to vector<16x1xf32>
      %cst_19 = arith.constant 3.200000e+01 : f32
      %28 = vector.broadcast %cst_19 : f32 to vector<16x1xf32>
      %29 = arith.divf %27, %28 : vector<16x1xf32>
      %cst_20 = arith.constant 9.99999974E-6 : f32
      %30 = vector.broadcast %cst_20 : f32 to vector<16x1xf32>
      %31 = arith.addf %29, %30 : vector<16x1xf32>
      %32 = math.rsqrt %31 : vector<16x1xf32>
      %33 = vector.broadcast %32 : vector<16x1xf32> to vector<16x32xf32>
      %34 = arith.mulf %24, %33 : vector<16x32xf32>
      %c0_21 = arith.constant 0 : index
      %c0_22 = arith.constant 0 : index
      %35 = vector.load %arg6[%c0_21, %c0_22] : memref<1x32xf32, #tpu.memory_space<vmem>>, vector<1x32xf32>
      %36 = vector.broadcast %35 : vector<1x32xf32> to vector<16x32xf32>
      %37 = arith.mulf %34, %36 : vector<16x32xf32>
      %c0_23 = arith.constant 0 : index
      %c0_24 = arith.constant 0 : index
      %38 = vector.load %arg7[%c0_23, %c0_24] : memref<1x32xf32, #tpu.memory_space<vmem>>, vector<1x32xf32>
      %39 = vector.broadcast %38 : vector<1x32xf32> to vector<16x32xf32>
      %40 = arith.addf %37, %39 : vector<16x32xf32>
      %c0_25 = arith.constant 0 : index
      %c0_26 = arith.constant 0 : index
      %41 = vector.load %arg8[%c0_25, %c0_26] : memref<16x32xf32, #tpu.memory_space<vmem>>, vector<16x32xf32>
      tpu.vector_store %arg8[%c0_25, %c0_26], %18 {strides = array<i32>} : memref<16x32xf32, #tpu.memory_space<vmem>>, vector<16x32xf32>,
      %42 = arith.truncf %40 : vector<16x32xf32> to vector<16x32xbf16>
      %c0_27 = arith.constant 0 : index
      %c0_28 = arith.constant 0 : index
      %43 = vector.load %arg9[%c0_27, %c0_28] : memref<16x32xbf16, #tpu.memory_space<vmem>>, vector<16x32xbf16>
      tpu.vector_store %arg9[%c0_27, %c0_28], %42 {strides = array<i32>} : memref<16x32xbf16, #tpu.memory_space<vmem>>, vector<16x32xbf16>,
    } else {
    }
    return
  }
  func.func @transform_0(%arg0: i32, %arg1: i32) -> (i32, i32) {
    %c0_i32 = arith.constant 0 : i32
    return %arg0, %arg1 : i32, i32
  }
  func.func @transform_1(%arg0: i32, %arg1: i32) -> (i32, i32) {
    %c0_i32 = arith.constant 0 : i32
    %c0_i32_0 = arith.constant 0 : i32
    return %arg1, %c0_i32 : i32, i32
  }
  func.func @transform_2(%arg0: i32, %arg1: i32) -> (i32, i32) {
    %c0_i32 = arith.constant 0 : i32
    %c0_i32_0 = arith.constant 0 : i32
    %c0_i32_1 = arith.constant 0 : i32
    return %c0_i32, %c0_i32_0 : i32, i32
  }
  func.func @transform_3(%arg0: i32, %arg1: i32) -> (i32, i32) {
    %c0_i32 = arith.constant 0 : i32
    %c0_i32_0 = arith.constant 0 : i32
    return %arg0, %c0_i32 : i32, i32
  }
  func.func @transform_4(%arg0: i32, %arg1: i32) -> (i32, i32) {
    %c0_i32 = arith.constant 0 : i32
    %c0_i32_0 = arith.constant 0 : i32
    %c0_i32_1 = arith.constant 0 : i32
    return %c0_i32, %c0_i32_0 : i32, i32
  }
  func.func @transform_5(%arg0: i32, %arg1: i32) -> (i32, i32) {
    %c0_i32 = arith.constant 0 : i32
    %c0_i32_0 = arith.constant 0 : i32
    %c0_i32_1 = arith.constant 0 : i32
    return %c0_i32, %c0_i32_0 : i32, i32
  }
  func.func @transform_6(%arg0: i32, %arg1: i32) -> (i32, i32) {
    %c0_i32 = arith.constant 0 : i32
    %c0_i32_0 = arith.constant 0 : i32
    return %arg0, %c0_i32 : i32, i32
  }
  func.func @transform_7(%arg0: i32, %arg1: i32) -> (i32, i32) {
    %c0_i32 = arith.constant 0 : i32
    %c0_i32_0 = arith.constant 0 : i32
    return %arg0, %c0_i32 : i32, i32
  }
}

module attributes {stable_mosaic.version = 11 : i64} {
  func.func @_attn_full_kernel(%arg0: i32, %arg1: memref<1x8x96xbf16, #tpu.memory_space<vmem>>, %arg2: memref<1x8x32xbf16, #tpu.memory_space<vmem>>) attributes {dimension_semantics = [#tpu.dimension_semantics<parallel>], iteration_bounds = array<i64: 2>, scalar_prefetch = 0 : i64, scratch_operands = 0 : i64, tpu.core_type = #tpu.core_type<tc>, window_params = [{transform_indices = @transform_0, window_bounds = array<i64: 1, 8, 96>}, {transform_indices = @transform_1, window_bounds = array<i64: 1, 8, 32>}]} {
    %c0 = arith.constant 0 : index
    %c0_0 = arith.constant 0 : index
    %c0_1 = arith.constant 0 : index
    %0 = vector.load %arg1[%c0, %c0_0, %c0_1] : memref<1x8x96xbf16, #tpu.memory_space<vmem>>, vector<1x8x8xbf16>
    %1 = vector.shape_cast %0 : vector<1x8x8xbf16> to vector<8x8xbf16>
    %c0_2 = arith.constant 0 : index
    %c0_3 = arith.constant 0 : index
    %c32 = arith.constant 32 : index
    %2 = vector.load %arg1[%c0_2, %c0_3, %c32] : memref<1x8x96xbf16, #tpu.memory_space<vmem>>, vector<1x8x8xbf16>
    %3 = vector.shape_cast %2 : vector<1x8x8xbf16> to vector<8x8xbf16>
    %c0_4 = arith.constant 0 : index
    %c0_5 = arith.constant 0 : index
    %c64 = arith.constant 64 : index
    %4 = vector.load %arg1[%c0_4, %c0_5, %c64] : memref<1x8x96xbf16, #tpu.memory_space<vmem>>, vector<1x8x8xbf16>
    %5 = vector.shape_cast %4 : vector<1x8x8xbf16> to vector<8x8xbf16>
    %cst = arith.constant dense<0.000000e+00> : vector<8x8xf32>
    %6 = tpu.matmul %1, %3, %cst {dimension_numbers = #tpu.dot_dimension_numbers<[1], [1], [0], [0], [0, 0, 1, 0], [], []>} : vector<8x8xbf16>, vector<8x8xbf16>, vector<8x8xf32> -> vector<8x8xf32>
    %cst_6 = arith.constant 0.353553385 : f32
    %7 = vector.broadcast %cst_6 : f32 to vector<8x8xf32>
    %8 = arith.mulf %6, %7 : vector<8x8xf32>
    %cst_7 = arith.constant dense<0xFF800000> : vector<8xf32>
    %9 = vector.multi_reduction <maximumf>, %8, %cst_7 [1] : vector<8x8xf32> to vector<8xf32>
    %10 = vector.shape_cast %9 : vector<8xf32> to vector<8x1xf32>
    %11 = vector.broadcast %10 : vector<8x1xf32> to vector<8x8xf32>
    %12 = arith.subf %8, %11 : vector<8x8xf32>
    %13 = math.exp %12 : vector<8x8xf32>
    %cst_8 = arith.constant dense<0.000000e+00> : vector<8xf32>
    %14 = vector.multi_reduction <add>, %13, %cst_8 [1] : vector<8x8xf32> to vector<8xf32>
    %15 = vector.shape_cast %14 : vector<8xf32> to vector<8x1xf32>
    %16 = tpu.reciprocal %15 {approx = true} : vector<8x1xf32> -> vector<8x1xf32>
    %17 = vector.broadcast %16 : vector<8x1xf32> to vector<8x8xf32>
    %18 = arith.mulf %13, %17 : vector<8x8xf32>
    %19 = arith.truncf %18 : vector<8x8xf32> to vector<8x8xbf16>
    %cst_9 = arith.constant dense<0.000000e+00> : vector<8x8xf32>
    %20 = tpu.matmul %19, %5, %cst_9 {dimension_numbers = #tpu.dot_dimension_numbers<[1], [0], [0], [1], [0, 0, 1, 1], [], []>} : vector<8x8xbf16>, vector<8x8xbf16>, vector<8x8xf32> -> vector<8x8xf32>
    %21 = arith.truncf %20 : vector<8x8xf32> to vector<8x8xbf16>
    %c0_10 = arith.constant 0 : index
    %c0_11 = arith.constant 0 : index
    %c0_12 = arith.constant 0 : index
    %22 = vector.load %arg2[%c0_10, %c0_11, %c0_12] : memref<1x8x32xbf16, #tpu.memory_space<vmem>>, vector<1x8x8xbf16>
    %23 = vector.shape_cast %22 : vector<1x8x8xbf16> to vector<8x8xbf16>
    %24 = vector.shape_cast %21 : vector<8x8xbf16> to vector<1x8x8xbf16>
    tpu.vector_store %arg2[%c0_10, %c0_11, %c0_12], %24 {strides = array<i32>} : memref<1x8x32xbf16, #tpu.memory_space<vmem>>, vector<1x8x8xbf16>,
    %c0_13 = arith.constant 0 : index
    %c0_14 = arith.constant 0 : index
    %c8 = arith.constant 8 : index
    %25 = vector.load %arg1[%c0_13, %c0_14, %c8] : memref<1x8x96xbf16, #tpu.memory_space<vmem>>, vector<1x8x8xbf16>
    %26 = vector.shape_cast %25 : vector<1x8x8xbf16> to vector<8x8xbf16>
    %c0_15 = arith.constant 0 : index
    %c0_16 = arith.constant 0 : index
    %c40 = arith.constant 40 : index
    %27 = vector.load %arg1[%c0_15, %c0_16, %c40] : memref<1x8x96xbf16, #tpu.memory_space<vmem>>, vector<1x8x8xbf16>
    %28 = vector.shape_cast %27 : vector<1x8x8xbf16> to vector<8x8xbf16>
    %c0_17 = arith.constant 0 : index
    %c0_18 = arith.constant 0 : index
    %c72 = arith.constant 72 : index
    %29 = vector.load %arg1[%c0_17, %c0_18, %c72] : memref<1x8x96xbf16, #tpu.memory_space<vmem>>, vector<1x8x8xbf16>
    %30 = vector.shape_cast %29 : vector<1x8x8xbf16> to vector<8x8xbf16>
    %cst_19 = arith.constant dense<0.000000e+00> : vector<8x8xf32>
    %31 = tpu.matmul %26, %28, %cst_19 {dimension_numbers = #tpu.dot_dimension_numbers<[1], [1], [0], [0], [0, 0, 1, 0], [], []>} : vector<8x8xbf16>, vector<8x8xbf16>, vector<8x8xf32> -> vector<8x8xf32>
    %cst_20 = arith.constant 0.353553385 : f32
    %32 = vector.broadcast %cst_20 : f32 to vector<8x8xf32>
    %33 = arith.mulf %31, %32 : vector<8x8xf32>
    %cst_21 = arith.constant dense<0xFF800000> : vector<8xf32>
    %34 = vector.multi_reduction <maximumf>, %33, %cst_21 [1] : vector<8x8xf32> to vector<8xf32>
    %35 = vector.shape_cast %34 : vector<8xf32> to vector<8x1xf32>
    %36 = vector.broadcast %35 : vector<8x1xf32> to vector<8x8xf32>
    %37 = arith.subf %33, %36 : vector<8x8xf32>
    %38 = math.exp %37 : vector<8x8xf32>
    %cst_22 = arith.constant dense<0.000000e+00> : vector<8xf32>
    %39 = vector.multi_reduction <add>, %38, %cst_22 [1] : vector<8x8xf32> to vector<8xf32>
    %40 = vector.shape_cast %39 : vector<8xf32> to vector<8x1xf32>
    %41 = tpu.reciprocal %40 {approx = true} : vector<8x1xf32> -> vector<8x1xf32>
    %42 = vector.broadcast %41 : vector<8x1xf32> to vector<8x8xf32>
    %43 = arith.mulf %38, %42 : vector<8x8xf32>
    %44 = arith.truncf %43 : vector<8x8xf32> to vector<8x8xbf16>
    %cst_23 = arith.constant dense<0.000000e+00> : vector<8x8xf32>
    %45 = tpu.matmul %44, %30, %cst_23 {dimension_numbers = #tpu.dot_dimension_numbers<[1], [0], [0], [1], [0, 0, 1, 1], [], []>} : vector<8x8xbf16>, vector<8x8xbf16>, vector<8x8xf32> -> vector<8x8xf32>
    %46 = arith.truncf %45 : vector<8x8xf32> to vector<8x8xbf16>
    %c0_24 = arith.constant 0 : index
    %c0_25 = arith.constant 0 : index
    %c8_26 = arith.constant 8 : index
    %47 = vector.load %arg2[%c0_24, %c0_25, %c8_26] : memref<1x8x32xbf16, #tpu.memory_space<vmem>>, vector<1x8x8xbf16>
    %48 = vector.shape_cast %47 : vector<1x8x8xbf16> to vector<8x8xbf16>
    %49 = vector.shape_cast %46 : vector<8x8xbf16> to vector<1x8x8xbf16>
    tpu.vector_store %arg2[%c0_24, %c0_25, %c8_26], %49 {strides = array<i32>} : memref<1x8x32xbf16, #tpu.memory_space<vmem>>, vector<1x8x8xbf16>,
    %c0_27 = arith.constant 0 : index
    %c0_28 = arith.constant 0 : index
    %c16 = arith.constant 16 : index
    %50 = vector.load %arg1[%c0_27, %c0_28, %c16] : memref<1x8x96xbf16, #tpu.memory_space<vmem>>, vector<1x8x8xbf16>
    %51 = vector.shape_cast %50 : vector<1x8x8xbf16> to vector<8x8xbf16>
    %c0_29 = arith.constant 0 : index
    %c0_30 = arith.constant 0 : index
    %c48 = arith.constant 48 : index
    %52 = vector.load %arg1[%c0_29, %c0_30, %c48] : memref<1x8x96xbf16, #tpu.memory_space<vmem>>, vector<1x8x8xbf16>
    %53 = vector.shape_cast %52 : vector<1x8x8xbf16> to vector<8x8xbf16>
    %c0_31 = arith.constant 0 : index
    %c0_32 = arith.constant 0 : index
    %c80 = arith.constant 80 : index
    %54 = vector.load %arg1[%c0_31, %c0_32, %c80] : memref<1x8x96xbf16, #tpu.memory_space<vmem>>, vector<1x8x8xbf16>
    %55 = vector.shape_cast %54 : vector<1x8x8xbf16> to vector<8x8xbf16>
    %cst_33 = arith.constant dense<0.000000e+00> : vector<8x8xf32>
    %56 = tpu.matmul %51, %53, %cst_33 {dimension_numbers = #tpu.dot_dimension_numbers<[1], [1], [0], [0], [0, 0, 1, 0], [], []>} : vector<8x8xbf16>, vector<8x8xbf16>, vector<8x8xf32> -> vector<8x8xf32>
    %cst_34 = arith.constant 0.353553385 : f32
    %57 = vector.broadcast %cst_34 : f32 to vector<8x8xf32>
    %58 = arith.mulf %56, %57 : vector<8x8xf32>
    %cst_35 = arith.constant dense<0xFF800000> : vector<8xf32>
    %59 = vector.multi_reduction <maximumf>, %58, %cst_35 [1] : vector<8x8xf32> to vector<8xf32>
    %60 = vector.shape_cast %59 : vector<8xf32> to vector<8x1xf32>
    %61 = vector.broadcast %60 : vector<8x1xf32> to vector<8x8xf32>
    %62 = arith.subf %58, %61 : vector<8x8xf32>
    %63 = math.exp %62 : vector<8x8xf32>
    %cst_36 = arith.constant dense<0.000000e+00> : vector<8xf32>
    %64 = vector.multi_reduction <add>, %63, %cst_36 [1] : vector<8x8xf32> to vector<8xf32>
    %65 = vector.shape_cast %64 : vector<8xf32> to vector<8x1xf32>
    %66 = tpu.reciprocal %65 {approx = true} : vector<8x1xf32> -> vector<8x1xf32>
    %67 = vector.broadcast %66 : vector<8x1xf32> to vector<8x8xf32>
    %68 = arith.mulf %63, %67 : vector<8x8xf32>
    %69 = arith.truncf %68 : vector<8x8xf32> to vector<8x8xbf16>
    %cst_37 = arith.constant dense<0.000000e+00> : vector<8x8xf32>
    %70 = tpu.matmul %69, %55, %cst_37 {dimension_numbers = #tpu.dot_dimension_numbers<[1], [0], [0], [1], [0, 0, 1, 1], [], []>} : vector<8x8xbf16>, vector<8x8xbf16>, vector<8x8xf32> -> vector<8x8xf32>
    %71 = arith.truncf %70 : vector<8x8xf32> to vector<8x8xbf16>
    %c0_38 = arith.constant 0 : index
    %c0_39 = arith.constant 0 : index
    %c16_40 = arith.constant 16 : index
    %72 = vector.load %arg2[%c0_38, %c0_39, %c16_40] : memref<1x8x32xbf16, #tpu.memory_space<vmem>>, vector<1x8x8xbf16>
    %73 = vector.shape_cast %72 : vector<1x8x8xbf16> to vector<8x8xbf16>
    %74 = vector.shape_cast %71 : vector<8x8xbf16> to vector<1x8x8xbf16>
    tpu.vector_store %arg2[%c0_38, %c0_39, %c16_40], %74 {strides = array<i32>} : memref<1x8x32xbf16, #tpu.memory_space<vmem>>, vector<1x8x8xbf16>,
    %c0_41 = arith.constant 0 : index
    %c0_42 = arith.constant 0 : index
    %c24 = arith.constant 24 : index
    %75 = vector.load %arg1[%c0_41, %c0_42, %c24] : memref<1x8x96xbf16, #tpu.memory_space<vmem>>, vector<1x8x8xbf16>
    %76 = vector.shape_cast %75 : vector<1x8x8xbf16> to vector<8x8xbf16>
    %c0_43 = arith.constant 0 : index
    %c0_44 = arith.constant 0 : index
    %c56 = arith.constant 56 : index
    %77 = vector.load %arg1[%c0_43, %c0_44, %c56] : memref<1x8x96xbf16, #tpu.memory_space<vmem>>, vector<1x8x8xbf16>
    %78 = vector.shape_cast %77 : vector<1x8x8xbf16> to vector<8x8xbf16>
    %c0_45 = arith.constant 0 : index
    %c0_46 = arith.constant 0 : index
    %c88 = arith.constant 88 : index
    %79 = vector.load %arg1[%c0_45, %c0_46, %c88] : memref<1x8x96xbf16, #tpu.memory_space<vmem>>, vector<1x8x8xbf16>
    %80 = vector.shape_cast %79 : vector<1x8x8xbf16> to vector<8x8xbf16>
    %cst_47 = arith.constant dense<0.000000e+00> : vector<8x8xf32>
    %81 = tpu.matmul %76, %78, %cst_47 {dimension_numbers = #tpu.dot_dimension_numbers<[1], [1], [0], [0], [0, 0, 1, 0], [], []>} : vector<8x8xbf16>, vector<8x8xbf16>, vector<8x8xf32> -> vector<8x8xf32>
    %cst_48 = arith.constant 0.353553385 : f32
    %82 = vector.broadcast %cst_48 : f32 to vector<8x8xf32>
    %83 = arith.mulf %81, %82 : vector<8x8xf32>
    %cst_49 = arith.constant dense<0xFF800000> : vector<8xf32>
    %84 = vector.multi_reduction <maximumf>, %83, %cst_49 [1] : vector<8x8xf32> to vector<8xf32>
    %85 = vector.shape_cast %84 : vector<8xf32> to vector<8x1xf32>
    %86 = vector.broadcast %85 : vector<8x1xf32> to vector<8x8xf32>
    %87 = arith.subf %83, %86 : vector<8x8xf32>
    %88 = math.exp %87 : vector<8x8xf32>
    %cst_50 = arith.constant dense<0.000000e+00> : vector<8xf32>
    %89 = vector.multi_reduction <add>, %88, %cst_50 [1] : vector<8x8xf32> to vector<8xf32>
    %90 = vector.shape_cast %89 : vector<8xf32> to vector<8x1xf32>
    %91 = tpu.reciprocal %90 {approx = true} : vector<8x1xf32> -> vector<8x1xf32>
    %92 = vector.broadcast %91 : vector<8x1xf32> to vector<8x8xf32>
    %93 = arith.mulf %88, %92 : vector<8x8xf32>
    %94 = arith.truncf %93 : vector<8x8xf32> to vector<8x8xbf16>
    %cst_51 = arith.constant dense<0.000000e+00> : vector<8x8xf32>
    %95 = tpu.matmul %94, %80, %cst_51 {dimension_numbers = #tpu.dot_dimension_numbers<[1], [0], [0], [1], [0, 0, 1, 1], [], []>} : vector<8x8xbf16>, vector<8x8xbf16>, vector<8x8xf32> -> vector<8x8xf32>
    %96 = arith.truncf %95 : vector<8x8xf32> to vector<8x8xbf16>
    %c0_52 = arith.constant 0 : index
    %c0_53 = arith.constant 0 : index
    %c24_54 = arith.constant 24 : index
    %97 = vector.load %arg2[%c0_52, %c0_53, %c24_54] : memref<1x8x32xbf16, #tpu.memory_space<vmem>>, vector<1x8x8xbf16>
    %98 = vector.shape_cast %97 : vector<1x8x8xbf16> to vector<8x8xbf16>
    %99 = vector.shape_cast %96 : vector<8x8xbf16> to vector<1x8x8xbf16>
    tpu.vector_store %arg2[%c0_52, %c0_53, %c24_54], %99 {strides = array<i32>} : memref<1x8x32xbf16, #tpu.memory_space<vmem>>, vector<1x8x8xbf16>,
    return
  }
  func.func @transform_0(%arg0: i32) -> (i32, i32, i32) {
    %c0_i32 = arith.constant 0 : i32
    %c0_i32_0 = arith.constant 0 : i32
    %c0_i32_1 = arith.constant 0 : i32
    return %arg0, %c0_i32, %c0_i32_0 : i32, i32, i32
  }
  func.func @transform_1(%arg0: i32) -> (i32, i32, i32) {
    %c0_i32 = arith.constant 0 : i32
    %c0_i32_0 = arith.constant 0 : i32
    %c0_i32_1 = arith.constant 0 : i32
    return %arg0, %c0_i32, %c0_i32_0 : i32, i32, i32
  }
}

module attributes {stable_mosaic.version = 11 : i64} {
  func.func @_matmul_nobias_kernel(%arg0: i32, %arg1: i32, %arg2: i32, %arg3: memref<16x32xbf16, #tpu.memory_space<vmem>>, %arg4: memref<32x96xf32, #tpu.memory_space<vmem>>, %arg5: memref<16x96xbf16, #tpu.memory_space<vmem>>, %arg6: memref<16x96xf32, #tpu.memory_space<vmem>>) attributes {dimension_semantics = [#tpu.dimension_semantics<parallel>, #tpu.dimension_semantics<parallel>, #tpu.dimension_semantics<arbitrary>], iteration_bounds = array<i64: 1, 1, 1>, scalar_prefetch = 0 : i64, scratch_operands = 1 : i64, tpu.core_type = #tpu.core_type<tc>, window_params = [{transform_indices = @transform_0, window_bounds = array<i64: 16, 32>}, {transform_indices = @transform_1, window_bounds = array<i64: 32, 96>}, {transform_indices = @transform_2, window_bounds = array<i64: 16, 96>}]} {
    %c0_i32 = arith.constant 0 : i32
    %0 = arith.cmpi eq, %arg2, %c0_i32 : i32
    %1 = arith.extui %0 : i1 to i32
    %c0_i32_0 = arith.constant 0 : i32
    %2 = arith.cmpi ne, %1, %c0_i32_0 : i32
    scf.if %2 {
      %cst_10 = arith.constant 0.000000e+00 : f32
      %13 = vector.broadcast %cst_10 : f32 to vector<16x96xf32>
      %c0_11 = arith.constant 0 : index
      %c0_12 = arith.constant 0 : index
      %14 = vector.load %arg6[%c0_11, %c0_12] : memref<16x96xf32, #tpu.memory_space<vmem>>, vector<16x96xf32>
      tpu.vector_store %arg6[%c0_11, %c0_12], %13 {strides = array<i32>} : memref<16x96xf32, #tpu.memory_space<vmem>>, vector<16x96xf32>,
    } else {
    }
    %c0 = arith.constant 0 : index
    %c0_1 = arith.constant 0 : index
    %3 = vector.load %arg6[%c0, %c0_1] : memref<16x96xf32, #tpu.memory_space<vmem>>, vector<16x96xf32>
    %c0_2 = arith.constant 0 : index
    %c0_3 = arith.constant 0 : index
    %4 = vector.load %arg3[%c0_2, %c0_3] : memref<16x32xbf16, #tpu.memory_space<vmem>>, vector<16x32xbf16>
    %c0_4 = arith.constant 0 : index
    %c0_5 = arith.constant 0 : index
    %5 = vector.load %arg4[%c0_4, %c0_5] : memref<32x96xf32, #tpu.memory_space<vmem>>, vector<32x96xf32>
    %6 = arith.truncf %5 : vector<32x96xf32> to vector<32x96xbf16>
    %cst = arith.constant dense<0.000000e+00> : vector<16x96xf32>
    %7 = tpu.matmul %4, %6, %cst {dimension_numbers = #tpu.dot_dimension_numbers<[1], [0], [0], [1], [0, 0, 1, 1], [], []>} : vector<16x32xbf16>, vector<32x96xbf16>, vector<16x96xf32> -> vector<16x96xf32>
    %8 = arith.addf %3, %7 : vector<16x96xf32>
    %c0_6 = arith.constant 0 : index
    %c0_7 = arith.constant 0 : index
    %9 = vector.load %arg6[%c0_6, %c0_7] : memref<16x96xf32, #tpu.memory_space<vmem>>, vector<16x96xf32>
    tpu.vector_store %arg6[%c0_6, %c0_7], %8 {strides = array<i32>} : memref<16x96xf32, #tpu.memory_space<vmem>>, vector<16x96xf32>,
    %c0_i32_8 = arith.constant 0 : i32
    %10 = arith.cmpi eq, %arg2, %c0_i32_8 : i32
    %11 = arith.extui %10 : i1 to i32
    %c0_i32_9 = arith.constant 0 : i32
    %12 = arith.cmpi ne, %11, %c0_i32_9 : i32
    scf.if %12 {
      %c0_10 = arith.constant 0 : index
      %c0_11 = arith.constant 0 : index
      %13 = vector.load %arg6[%c0_10, %c0_11] : memref<16x96xf32, #tpu.memory_space<vmem>>, vector<16x96xf32>
      %14 = arith.truncf %13 : vector<16x96xf32> to vector<16x96xbf16>
      %c0_12 = arith.constant 0 : index
      %c0_13 = arith.constant 0 : index
      %15 = vector.load %arg5[%c0_12, %c0_13] : memref<16x96xbf16, #tpu.memory_space<vmem>>, vector<16x96xbf16>
      tpu.vector_store %arg5[%c0_12, %c0_13], %14 {strides = array<i32>} : memref<16x96xbf16, #tpu.memory_space<vmem>>, vector<16x96xbf16>,
    } else {
    }
    return
  }
  func.func @transform_0(%arg0: i32, %arg1: i32, %arg2: i32) -> (i32, i32) {
    %c0_i32 = arith.constant 0 : i32
    return %arg0, %arg2 : i32, i32
  }
  func.func @transform_1(%arg0: i32, %arg1: i32, %arg2: i32) -> (i32, i32) {
    %c0_i32 = arith.constant 0 : i32
    return %arg2, %arg1 : i32, i32
  }
  func.func @transform_2(%arg0: i32, %arg1: i32, %arg2: i32) -> (i32, i32) {
    %c0_i32 = arith.constant 0 : i32
    return %arg0, %arg1 : i32, i32
  }
}

module attributes {stable_mosaic.version = 11 : i64} {
  func.func @_posemb_ln_kernel(%arg0: i32, %arg1: i32, %arg2: memref<1x8x32xf32, #tpu.memory_space<vmem>>, %arg3: memref<1x8x32xf32, #tpu.memory_space<vmem>>, %arg4: memref<1x1x32xf32, #tpu.memory_space<vmem>>, %arg5: memref<1x1x32xf32, #tpu.memory_space<vmem>>, %arg6: memref<1x8x32xf32, #tpu.memory_space<vmem>>, %arg7: memref<1x8x32xbf16, #tpu.memory_space<vmem>>) attributes {dimension_semantics = [#tpu.dimension_semantics<parallel>, #tpu.dimension_semantics<parallel>], iteration_bounds = array<i64: 2, 1>, scalar_prefetch = 0 : i64, scratch_operands = 0 : i64, tpu.core_type = #tpu.core_type<tc>, window_params = [{transform_indices = @transform_0, window_bounds = array<i64: 1, 8, 32>}, {transform_indices = @transform_1, window_bounds = array<i64: 1, 8, 32>}, {pipeline_mode = #tpu.pipeline_mode<synchronous>, transform_indices = @transform_2, window_bounds = array<i64: 1, 1, 32>}, {pipeline_mode = #tpu.pipeline_mode<synchronous>, transform_indices = @transform_3, window_bounds = array<i64: 1, 1, 32>}, {transform_indices = @transform_4, window_bounds = array<i64: 1, 8, 32>}, {transform_indices = @transform_5, window_bounds = array<i64: 1, 8, 32>}]} {
    %c0 = arith.constant 0 : index
    %c0_0 = arith.constant 0 : index
    %c0_1 = arith.constant 0 : index
    %0 = vector.load %arg2[%c0, %c0_0, %c0_1] : memref<1x8x32xf32, #tpu.memory_space<vmem>>, vector<1x8x32xf32>
    %c0_2 = arith.constant 0 : index
    %c0_3 = arith.constant 0 : index
    %c0_4 = arith.constant 0 : index
    %1 = vector.load %arg3[%c0_2, %c0_3, %c0_4] : memref<1x8x32xf32, #tpu.memory_space<vmem>>, vector<1x8x32xf32>
    %2 = arith.addf %0, %1 : vector<1x8x32xf32>
    %cst = arith.constant dense<0.000000e+00> : vector<1x8xf32>
    %3 = vector.multi_reduction <add>, %2, %cst [2] : vector<1x8x32xf32> to vector<1x8xf32>
    %4 = vector.shape_cast %3 : vector<1x8xf32> to vector<1x8x1xf32>
    %cst_5 = arith.constant 3.200000e+01 : f32
    %5 = vector.broadcast %cst_5 : f32 to vector<1x8x1xf32>
    %6 = arith.divf %4, %5 : vector<1x8x1xf32>
    %7 = vector.broadcast %6 : vector<1x8x1xf32> to vector<1x8x32xf32>
    %8 = arith.subf %2, %7 : vector<1x8x32xf32>
    %9 = arith.mulf %8, %8 : vector<1x8x32xf32>
    %cst_6 = arith.constant dense<0.000000e+00> : vector<1x8xf32>
    %10 = vector.multi_reduction <add>, %9, %cst_6 [2] : vector<1x8x32xf32> to vector<1x8xf32>
    %11 = vector.shape_cast %10 : vector<1x8xf32> to vector<1x8x1xf32>
    %cst_7 = arith.constant 3.200000e+01 : f32
    %12 = vector.broadcast %cst_7 : f32 to vector<1x8x1xf32>
    %13 = arith.divf %11, %12 : vector<1x8x1xf32>
    %cst_8 = arith.constant 9.99999974E-6 : f32
    %14 = vector.broadcast %cst_8 : f32 to vector<1x8x1xf32>
    %15 = arith.addf %13, %14 : vector<1x8x1xf32>
    %16 = math.rsqrt %15 : vector<1x8x1xf32>
    %17 = vector.broadcast %16 : vector<1x8x1xf32> to vector<1x8x32xf32>
    %18 = arith.mulf %8, %17 : vector<1x8x32xf32>
    %c0_9 = arith.constant 0 : index
    %c0_10 = arith.constant 0 : index
    %c0_11 = arith.constant 0 : index
    %19 = vector.load %arg4[%c0_9, %c0_10, %c0_11] : memref<1x1x32xf32, #tpu.memory_space<vmem>>, vector<1x1x32xf32>
    %20 = vector.broadcast %19 : vector<1x1x32xf32> to vector<1x8x32xf32>
    %21 = arith.mulf %18, %20 : vector<1x8x32xf32>
    %c0_12 = arith.constant 0 : index
    %c0_13 = arith.constant 0 : index
    %c0_14 = arith.constant 0 : index
    %22 = vector.load %arg5[%c0_12, %c0_13, %c0_14] : memref<1x1x32xf32, #tpu.memory_space<vmem>>, vector<1x1x32xf32>
    %23 = vector.broadcast %22 : vector<1x1x32xf32> to vector<1x8x32xf32>
    %24 = arith.addf %21, %23 : vector<1x8x32xf32>
    %c0_15 = arith.constant 0 : index
    %c0_16 = arith.constant 0 : index
    %c0_17 = arith.constant 0 : index
    %25 = vector.load %arg6[%c0_15, %c0_16, %c0_17] : memref<1x8x32xf32, #tpu.memory_space<vmem>>, vector<1x8x32xf32>
    tpu.vector_store %arg6[%c0_15, %c0_16, %c0_17], %2 {strides = array<i32>} : memref<1x8x32xf32, #tpu.memory_space<vmem>>, vector<1x8x32xf32>,
    %26 = arith.truncf %24 : vector<1x8x32xf32> to vector<1x8x32xbf16>
    %c0_18 = arith.constant 0 : index
    %c0_19 = arith.constant 0 : index
    %c0_20 = arith.constant 0 : index
    %27 = vector.load %arg7[%c0_18, %c0_19, %c0_20] : memref<1x8x32xbf16, #tpu.memory_space<vmem>>, vector<1x8x32xbf16>
    tpu.vector_store %arg7[%c0_18, %c0_19, %c0_20], %26 {strides = array<i32>} : memref<1x8x32xbf16, #tpu.memory_space<vmem>>, vector<1x8x32xbf16>,
    return
  }
  func.func @transform_0(%arg0: i32, %arg1: i32) -> (i32, i32, i32) {
    %c0_i32 = arith.constant 0 : i32
    %c0_i32_0 = arith.constant 0 : i32
    return %arg0, %arg1, %c0_i32 : i32, i32, i32
  }
  func.func @transform_1(%arg0: i32, %arg1: i32) -> (i32, i32, i32) {
    %c0_i32 = arith.constant 0 : i32
    %c0_i32_0 = arith.constant 0 : i32
    %c0_i32_1 = arith.constant 0 : i32
    return %c0_i32, %arg1, %c0_i32_0 : i32, i32, i32
  }
  func.func @transform_2(%arg0: i32, %arg1: i32) -> (i32, i32, i32) {
    %c0_i32 = arith.constant 0 : i32
    %c0_i32_0 = arith.constant 0 : i32
    %c0_i32_1 = arith.constant 0 : i32
    %c0_i32_2 = arith.constant 0 : i32
    return %c0_i32, %c0_i32_0, %c0_i32_1 : i32, i32, i32
  }
  func.func @transform_3(%arg0: i32, %arg1: i32) -> (i32, i32, i32) {
    %c0_i32 = arith.constant 0 : i32
    %c0_i32_0 = arith.constant 0 : i32
    %c0_i32_1 = arith.constant 0 : i32
    %c0_i32_2 = arith.constant 0 : i32
    return %c0_i32, %c0_i32_0, %c0_i32_1 : i32, i32, i32
  }
  func.func @transform_4(%arg0: i32, %arg1: i32) -> (i32, i32, i32) {
    %c0_i32 = arith.constant 0 : i32
    %c0_i32_0 = arith.constant 0 : i32
    return %arg0, %arg1, %c0_i32 : i32, i32, i32
  }
  func.func @transform_5(%arg0: i32, %arg1: i32) -> (i32, i32, i32) {
    %c0_i32 = arith.constant 0 : i32
    %c0_i32_0 = arith.constant 0 : i32
    return %arg0, %arg1, %c0_i32 : i32, i32, i32
  }
}

module attributes {stable_mosaic.version = 11 : i64} {
  func.func @_matmul_bias_kernel(%arg0: i32, %arg1: i32, %arg2: i32, %arg3: memref<16x32xbf16, #tpu.memory_space<vmem>>, %arg4: memref<32x64xf32, #tpu.memory_space<vmem>>, %arg5: memref<1x64xf32, #tpu.memory_space<vmem>>, %arg6: memref<16x64xbf16, #tpu.memory_space<vmem>>, %arg7: memref<16x64xf32, #tpu.memory_space<vmem>>) attributes {dimension_semantics = [#tpu.dimension_semantics<parallel>, #tpu.dimension_semantics<parallel>, #tpu.dimension_semantics<arbitrary>], iteration_bounds = array<i64: 1, 1, 1>, scalar_prefetch = 0 : i64, scratch_operands = 1 : i64, tpu.core_type = #tpu.core_type<tc>, window_params = [{transform_indices = @transform_0, window_bounds = array<i64: 16, 32>}, {transform_indices = @transform_1, window_bounds = array<i64: 32, 64>}, {transform_indices = @transform_2, window_bounds = array<i64: 1, 64>}, {transform_indices = @transform_3, window_bounds = array<i64: 16, 64>}]} {
    %c0_i32 = arith.constant 0 : i32
    %0 = arith.cmpi eq, %arg2, %c0_i32 : i32
    %1 = arith.extui %0 : i1 to i32
    %c0_i32_0 = arith.constant 0 : i32
    %2 = arith.cmpi ne, %1, %c0_i32_0 : i32
    scf.if %2 {
      %cst_10 = arith.constant 0.000000e+00 : f32
      %13 = vector.broadcast %cst_10 : f32 to vector<16x64xf32>
      %c0_11 = arith.constant 0 : index
      %c0_12 = arith.constant 0 : index
      %14 = vector.load %arg7[%c0_11, %c0_12] : memref<16x64xf32, #tpu.memory_space<vmem>>, vector<16x64xf32>
      tpu.vector_store %arg7[%c0_11, %c0_12], %13 {strides = array<i32>} : memref<16x64xf32, #tpu.memory_space<vmem>>, vector<16x64xf32>,
    } else {
    }
    %c0 = arith.constant 0 : index
    %c0_1 = arith.constant 0 : index
    %3 = vector.load %arg7[%c0, %c0_1] : memref<16x64xf32, #tpu.memory_space<vmem>>, vector<16x64xf32>
    %c0_2 = arith.constant 0 : index
    %c0_3 = arith.constant 0 : index
    %4 = vector.load %arg3[%c0_2, %c0_3] : memref<16x32xbf16, #tpu.memory_space<vmem>>, vector<16x32xbf16>
    %c0_4 = arith.constant 0 : index
    %c0_5 = arith.constant 0 : index
    %5 = vector.load %arg4[%c0_4, %c0_5] : memref<32x64xf32, #tpu.memory_space<vmem>>, vector<32x64xf32>
    %6 = arith.truncf %5 : vector<32x64xf32> to vector<32x64xbf16>
    %cst = arith.constant dense<0.000000e+00> : vector<16x64xf32>
    %7 = tpu.matmul %4, %6, %cst {dimension_numbers = #tpu.dot_dimension_numbers<[1], [0], [0], [1], [0, 0, 1, 1], [], []>} : vector<16x32xbf16>, vector<32x64xbf16>, vector<16x64xf32> -> vector<16x64xf32>
    %8 = arith.addf %3, %7 : vector<16x64xf32>
    %c0_6 = arith.constant 0 : index
    %c0_7 = arith.constant 0 : index
    %9 = vector.load %arg7[%c0_6, %c0_7] : memref<16x64xf32, #tpu.memory_space<vmem>>, vector<16x64xf32>
    tpu.vector_store %arg7[%c0_6, %c0_7], %8 {strides = array<i32>} : memref<16x64xf32, #tpu.memory_space<vmem>>, vector<16x64xf32>,
    %c0_i32_8 = arith.constant 0 : i32
    %10 = arith.cmpi eq, %arg2, %c0_i32_8 : i32
    %11 = arith.extui %10 : i1 to i32
    %c0_i32_9 = arith.constant 0 : i32
    %12 = arith.cmpi ne, %11, %c0_i32_9 : i32
    scf.if %12 {
      %c0_10 = arith.constant 0 : index
      %c0_11 = arith.constant 0 : index
      %13 = vector.load %arg7[%c0_10, %c0_11] : memref<16x64xf32, #tpu.memory_space<vmem>>, vector<16x64xf32>
      %c0_12 = arith.constant 0 : index
      %c0_13 = arith.constant 0 : index
      %14 = vector.load %arg5[%c0_12, %c0_13] : memref<1x64xf32, #tpu.memory_space<vmem>>, vector<1x64xf32>
      %15 = vector.broadcast %14 : vector<1x64xf32> to vector<16x64xf32>
      %16 = arith.addf %13, %15 : vector<16x64xf32>
      %17 = arith.mulf %16, %16 : vector<16x64xf32>
      %18 = arith.mulf %16, %17 : vector<16x64xf32>
      %cst_14 = arith.constant 4.471500e-02 : f32
      %19 = vector.broadcast %cst_14 : f32 to vector<16x64xf32>
      %20 = arith.mulf %19, %18 : vector<16x64xf32>
      %21 = arith.addf %16, %20 : vector<16x64xf32>
      %cst_15 = arith.constant 0.797884583 : f32
      %22 = vector.broadcast %cst_15 : f32 to vector<16x64xf32>
      %23 = arith.mulf %22, %21 : vector<16x64xf32>
      %24 = math.tanh %23 : vector<16x64xf32>
      %cst_16 = arith.constant 1.000000e+00 : f32
      %25 = vector.broadcast %cst_16 : f32 to vector<16x64xf32>
      %26 = arith.addf %25, %24 : vector<16x64xf32>
      %cst_17 = arith.constant 5.000000e-01 : f32
      %27 = vector.broadcast %cst_17 : f32 to vector<16x64xf32>
      %28 = arith.mulf %27, %26 : vector<16x64xf32>
      %29 = arith.mulf %16, %28 : vector<16x64xf32>
      %30 = arith.truncf %29 : vector<16x64xf32> to vector<16x64xbf16>
      %c0_18 = arith.constant 0 : index
      %c0_19 = arith.constant 0 : index
      %31 = vector.load %arg6[%c0_18, %c0_19] : memref<16x64xbf16, #tpu.memory_space<vmem>>, vector<16x64xbf16>
      tpu.vector_store %arg6[%c0_18, %c0_19], %30 {strides = array<i32>} : memref<16x64xbf16, #tpu.memory_space<vmem>>, vector<16x64xbf16>,
    } else {
    }
    return
  }
  func.func @transform_0(%arg0: i32, %arg1: i32, %arg2: i32) -> (i32, i32) {
    %c0_i32 = arith.constant 0 : i32
    return %arg0, %arg2 : i32, i32
  }
  func.func @transform_1(%arg0: i32, %arg1: i32, %arg2: i32) -> (i32, i32) {
    %c0_i32 = arith.constant 0 : i32
    return %arg2, %arg1 : i32, i32
  }
  func.func @transform_2(%arg0: i32, %arg1: i32, %arg2: i32) -> (i32, i32) {
    %c0_i32 = arith.constant 0 : i32
    %c0_i32_0 = arith.constant 0 : i32
    return %c0_i32, %arg1 : i32, i32
  }
  func.func @transform_3(%arg0: i32, %arg1: i32, %arg2: i32) -> (i32, i32) {
    %c0_i32 = arith.constant 0 : i32
    return %arg0, %arg1 : i32, i32
  }
}

module attributes {stable_mosaic.version = 11 : i64} {
  func.func @_matmul_res_ln_kernel(%arg0: i32, %arg1: i32, %arg2: memref<16x64xbf16, #tpu.memory_space<vmem>>, %arg3: memref<64x32xf32, #tpu.memory_space<vmem>>, %arg4: memref<1x32xf32, #tpu.memory_space<vmem>>, %arg5: memref<16x32xf32, #tpu.memory_space<vmem>>, %arg6: memref<1x32xf32, #tpu.memory_space<vmem>>, %arg7: memref<1x32xf32, #tpu.memory_space<vmem>>, %arg8: memref<16x32xf32, #tpu.memory_space<vmem>>, %arg9: memref<16x32xbf16, #tpu.memory_space<vmem>>, %arg10: memref<16x32xf32, #tpu.memory_space<vmem>>) attributes {dimension_semantics = [#tpu.dimension_semantics<parallel>, #tpu.dimension_semantics<arbitrary>], iteration_bounds = array<i64: 1, 1>, scalar_prefetch = 0 : i64, scratch_operands = 1 : i64, tpu.core_type = #tpu.core_type<tc>, window_params = [{transform_indices = @transform_0, window_bounds = array<i64: 16, 64>}, {transform_indices = @transform_1, window_bounds = array<i64: 64, 32>}, {pipeline_mode = #tpu.pipeline_mode<synchronous>, transform_indices = @transform_2, window_bounds = array<i64: 1, 32>}, {transform_indices = @transform_3, window_bounds = array<i64: 16, 32>}, {pipeline_mode = #tpu.pipeline_mode<synchronous>, transform_indices = @transform_4, window_bounds = array<i64: 1, 32>}, {pipeline_mode = #tpu.pipeline_mode<synchronous>, transform_indices = @transform_5, window_bounds = array<i64: 1, 32>}, {transform_indices = @transform_6, window_bounds = array<i64: 16, 32>}, {transform_indices = @transform_7, window_bounds = array<i64: 16, 32>}]} {
    %c0_i32 = arith.constant 0 : i32
    %0 = arith.cmpi eq, %arg1, %c0_i32 : i32
    %1 = arith.extui %0 : i1 to i32
    %c0_i32_0 = arith.constant 0 : i32
    %2 = arith.cmpi ne, %1, %c0_i32_0 : i32
    scf.if %2 {
      %cst_10 = arith.constant 0.000000e+00 : f32
      %13 = vector.broadcast %cst_10 : f32 to vector<16x32xf32>
      %c0_11 = arith.constant 0 : index
      %c0_12 = arith.constant 0 : index
      %14 = vector.load %arg10[%c0_11, %c0_12] : memref<16x32xf32, #tpu.memory_space<vmem>>, vector<16x32xf32>
      tpu.vector_store %arg10[%c0_11, %c0_12], %13 {strides = array<i32>} : memref<16x32xf32, #tpu.memory_space<vmem>>, vector<16x32xf32>,
    } else {
    }
    %c0 = arith.constant 0 : index
    %c0_1 = arith.constant 0 : index
    %3 = vector.load %arg10[%c0, %c0_1] : memref<16x32xf32, #tpu.memory_space<vmem>>, vector<16x32xf32>
    %c0_2 = arith.constant 0 : index
    %c0_3 = arith.constant 0 : index
    %4 = vector.load %arg2[%c0_2, %c0_3] : memref<16x64xbf16, #tpu.memory_space<vmem>>, vector<16x64xbf16>
    %c0_4 = arith.constant 0 : index
    %c0_5 = arith.constant 0 : index
    %5 = vector.load %arg3[%c0_4, %c0_5] : memref<64x32xf32, #tpu.memory_space<vmem>>, vector<64x32xf32>
    %6 = arith.truncf %5 : vector<64x32xf32> to vector<64x32xbf16>
    %cst = arith.constant dense<0.000000e+00> : vector<16x32xf32>
    %7 = tpu.matmul %4, %6, %cst {dimension_numbers = #tpu.dot_dimension_numbers<[1], [0], [0], [1], [0, 0, 1, 1], [], []>} : vector<16x64xbf16>, vector<64x32xbf16>, vector<16x32xf32> -> vector<16x32xf32>
    %8 = arith.addf %3, %7 : vector<16x32xf32>
    %c0_6 = arith.constant 0 : index
    %c0_7 = arith.constant 0 : index
    %9 = vector.load %arg10[%c0_6, %c0_7] : memref<16x32xf32, #tpu.memory_space<vmem>>, vector<16x32xf32>
    tpu.vector_store %arg10[%c0_6, %c0_7], %8 {strides = array<i32>} : memref<16x32xf32, #tpu.memory_space<vmem>>, vector<16x32xf32>,
    %c0_i32_8 = arith.constant 0 : i32
    %10 = arith.cmpi eq, %arg1, %c0_i32_8 : i32
    %11 = arith.extui %10 : i1 to i32
    %c0_i32_9 = arith.constant 0 : i32
    %12 = arith.cmpi ne, %11, %c0_i32_9 : i32
    scf.if %12 {
      %c0_10 = arith.constant 0 : index
      %c0_11 = arith.constant 0 : index
      %13 = vector.load %arg10[%c0_10, %c0_11] : memref<16x32xf32, #tpu.memory_space<vmem>>, vector<16x32xf32>
      %c0_12 = arith.constant 0 : index
      %c0_13 = arith.constant 0 : index
      %14 = vector.load %arg4[%c0_12, %c0_13] : memref<1x32xf32, #tpu.memory_space<vmem>>, vector<1x32xf32>
      %15 = vector.broadcast %14 : vector<1x32xf32> to vector<16x32xf32>
      %16 = arith.addf %13, %15 : vector<16x32xf32>
      %c0_14 = arith.constant 0 : index
      %c0_15 = arith.constant 0 : index
      %17 = vector.load %arg5[%c0_14, %c0_15] : memref<16x32xf32, #tpu.memory_space<vmem>>, vector<16x32xf32>
      %18 = arith.addf %16, %17 : vector<16x32xf32>
      %cst_16 = arith.constant dense<0.000000e+00> : vector<16xf32>
      %19 = vector.multi_reduction <add>, %18, %cst_16 [1] : vector<16x32xf32> to vector<16xf32>
      %20 = vector.shape_cast %19 : vector<16xf32> to vector<16x1xf32>
      %cst_17 = arith.constant 3.200000e+01 : f32
      %21 = vector.broadcast %cst_17 : f32 to vector<16x1xf32>
      %22 = arith.divf %20, %21 : vector<16x1xf32>
      %23 = vector.broadcast %22 : vector<16x1xf32> to vector<16x32xf32>
      %24 = arith.subf %18, %23 : vector<16x32xf32>
      %25 = arith.mulf %24, %24 : vector<16x32xf32>
      %cst_18 = arith.constant dense<0.000000e+00> : vector<16xf32>
      %26 = vector.multi_reduction <add>, %25, %cst_18 [1] : vector<16x32xf32> to vector<16xf32>
      %27 = vector.shape_cast %26 : vector<16xf32> to vector<16x1xf32>
      %cst_19 = arith.constant 3.200000e+01 : f32
      %28 = vector.broadcast %cst_19 : f32 to vector<16x1xf32>
      %29 = arith.divf %27, %28 : vector<16x1xf32>
      %cst_20 = arith.constant 9.99999974E-6 : f32
      %30 = vector.broadcast %cst_20 : f32 to vector<16x1xf32>
      %31 = arith.addf %29, %30 : vector<16x1xf32>
      %32 = math.rsqrt %31 : vector<16x1xf32>
      %33 = vector.broadcast %32 : vector<16x1xf32> to vector<16x32xf32>
      %34 = arith.mulf %24, %33 : vector<16x32xf32>
      %c0_21 = arith.constant 0 : index
      %c0_22 = arith.constant 0 : index
      %35 = vector.load %arg6[%c0_21, %c0_22] : memref<1x32xf32, #tpu.memory_space<vmem>>, vector<1x32xf32>
      %36 = vector.broadcast %35 : vector<1x32xf32> to vector<16x32xf32>
      %37 = arith.mulf %34, %36 : vector<16x32xf32>
      %c0_23 = arith.constant 0 : index
      %c0_24 = arith.constant 0 : index
      %38 = vector.load %arg7[%c0_23, %c0_24] : memref<1x32xf32, #tpu.memory_space<vmem>>, vector<1x32xf32>
      %39 = vector.broadcast %38 : vector<1x32xf32> to vector<16x32xf32>
      %40 = arith.addf %37, %39 : vector<16x32xf32>
      %c0_25 = arith.constant 0 : index
      %c0_26 = arith.constant 0 : index
      %41 = vector.load %arg8[%c0_25, %c0_26] : memref<16x32xf32, #tpu.memory_space<vmem>>, vector<16x32xf32>
      tpu.vector_store %arg8[%c0_25, %c0_26], %18 {strides = array<i32>} : memref<16x32xf32, #tpu.memory_space<vmem>>, vector<16x32xf32>,
      %42 = arith.truncf %40 : vector<16x32xf32> to vector<16x32xbf16>
      %c0_27 = arith.constant 0 : index
      %c0_28 = arith.constant 0 : index
      %43 = vector.load %arg9[%c0_27, %c0_28] : memref<16x32xbf16, #tpu.memory_space<vmem>>, vector<16x32xbf16>
      tpu.vector_store %arg9[%c0_27, %c0_28], %42 {strides = array<i32>} : memref<16x32xbf16, #tpu.memory_space<vmem>>, vector<16x32xbf16>,
    } else {
    }
    return
  }
  func.func @transform_0(%arg0: i32, %arg1: i32) -> (i32, i32) {
    %c0_i32 = arith.constant 0 : i32
    return %arg0, %arg1 : i32, i32
  }
  func.func @transform_1(%arg0: i32, %arg1: i32) -> (i32, i32) {
    %c0_i32 = arith.constant 0 : i32
    %c0_i32_0 = arith.constant 0 : i32
    return %arg1, %c0_i32 : i32, i32
  }
  func.func @transform_2(%arg0: i32, %arg1: i32) -> (i32, i32) {
    %c0_i32 = arith.constant 0 : i32
    %c0_i32_0 = arith.constant 0 : i32
    %c0_i32_1 = arith.constant 0 : i32
    return %c0_i32, %c0_i32_0 : i32, i32
  }
  func.func @transform_3(%arg0: i32, %arg1: i32) -> (i32, i32) {
    %c0_i32 = arith.constant 0 : i32
    %c0_i32_0 = arith.constant 0 : i32
    return %arg0, %c0_i32 : i32, i32
  }
  func.func @transform_4(%arg0: i32, %arg1: i32) -> (i32, i32) {
    %c0_i32 = arith.constant 0 : i32
    %c0_i32_0 = arith.constant 0 : i32
    %c0_i32_1 = arith.constant 0 : i32
    return %c0_i32, %c0_i32_0 : i32, i32
  }
  func.func @transform_5(%arg0: i32, %arg1: i32) -> (i32, i32) {
    %c0_i32 = arith.constant 0 : i32
    %c0_i32_0 = arith.constant 0 : i32
    %c0_i32_1 = arith.constant 0 : i32
    return %c0_i32, %c0_i32_0 : i32, i32
  }
  func.func @transform_6(%arg0: i32, %arg1: i32) -> (i32, i32) {
    %c0_i32 = arith.constant 0 : i32
    %c0_i32_0 = arith.constant 0 : i32
    return %arg0, %c0_i32 : i32, i32
  }
  func.func @transform_7(%arg0: i32, %arg1: i32) -> (i32, i32) {
    %c0_i32 = arith.constant 0 : i32
    %c0_i32_0 = arith.constant 0 : i32
    return %arg0, %c0_i32 : i32, i32
  }
}

module attributes {stable_mosaic.version = 11 : i64} {
  func.func @_matmul_res_ln_kernel(%arg0: i32, %arg1: i32, %arg2: memref<16x64xbf16, #tpu.memory_space<vmem>>, %arg3: memref<64x32xf32, #tpu.memory_space<vmem>>, %arg4: memref<1x32xf32, #tpu.memory_space<vmem>>, %arg5: memref<16x32xf32, #tpu.memory_space<vmem>>, %arg6: memref<1x32xf32, #tpu.memory_space<vmem>>, %arg7: memref<1x32xf32, #tpu.memory_space<vmem>>, %arg8: memref<16x32xf32, #tpu.memory_space<vmem>>, %arg9: memref<16x32xf32, #tpu.memory_space<vmem>>, %arg10: memref<16x32xf32, #tpu.memory_space<vmem>>) attributes {dimension_semantics = [#tpu.dimension_semantics<parallel>, #tpu.dimension_semantics<arbitrary>], iteration_bounds = array<i64: 1, 1>, scalar_prefetch = 0 : i64, scratch_operands = 1 : i64, tpu.core_type = #tpu.core_type<tc>, window_params = [{transform_indices = @transform_0, window_bounds = array<i64: 16, 64>}, {transform_indices = @transform_1, window_bounds = array<i64: 64, 32>}, {pipeline_mode = #tpu.pipeline_mode<synchronous>, transform_indices = @transform_2, window_bounds = array<i64: 1, 32>}, {transform_indices = @transform_3, window_bounds = array<i64: 16, 32>}, {pipeline_mode = #tpu.pipeline_mode<synchronous>, transform_indices = @transform_4, window_bounds = array<i64: 1, 32>}, {pipeline_mode = #tpu.pipeline_mode<synchronous>, transform_indices = @transform_5, window_bounds = array<i64: 1, 32>}, {transform_indices = @transform_6, window_bounds = array<i64: 16, 32>}, {transform_indices = @transform_7, window_bounds = array<i64: 16, 32>}]} {
    %c0_i32 = arith.constant 0 : i32
    %0 = arith.cmpi eq, %arg1, %c0_i32 : i32
    %1 = arith.extui %0 : i1 to i32
    %c0_i32_0 = arith.constant 0 : i32
    %2 = arith.cmpi ne, %1, %c0_i32_0 : i32
    scf.if %2 {
      %cst_10 = arith.constant 0.000000e+00 : f32
      %13 = vector.broadcast %cst_10 : f32 to vector<16x32xf32>
      %c0_11 = arith.constant 0 : index
      %c0_12 = arith.constant 0 : index
      %14 = vector.load %arg10[%c0_11, %c0_12] : memref<16x32xf32, #tpu.memory_space<vmem>>, vector<16x32xf32>
      tpu.vector_store %arg10[%c0_11, %c0_12], %13 {strides = array<i32>} : memref<16x32xf32, #tpu.memory_space<vmem>>, vector<16x32xf32>,
    } else {
    }
    %c0 = arith.constant 0 : index
    %c0_1 = arith.constant 0 : index
    %3 = vector.load %arg10[%c0, %c0_1] : memref<16x32xf32, #tpu.memory_space<vmem>>, vector<16x32xf32>
    %c0_2 = arith.constant 0 : index
    %c0_3 = arith.constant 0 : index
    %4 = vector.load %arg2[%c0_2, %c0_3] : memref<16x64xbf16, #tpu.memory_space<vmem>>, vector<16x64xbf16>
    %c0_4 = arith.constant 0 : index
    %c0_5 = arith.constant 0 : index
    %5 = vector.load %arg3[%c0_4, %c0_5] : memref<64x32xf32, #tpu.memory_space<vmem>>, vector<64x32xf32>
    %6 = arith.truncf %5 : vector<64x32xf32> to vector<64x32xbf16>
    %cst = arith.constant dense<0.000000e+00> : vector<16x32xf32>
    %7 = tpu.matmul %4, %6, %cst {dimension_numbers = #tpu.dot_dimension_numbers<[1], [0], [0], [1], [0, 0, 1, 1], [], []>} : vector<16x64xbf16>, vector<64x32xbf16>, vector<16x32xf32> -> vector<16x32xf32>
    %8 = arith.addf %3, %7 : vector<16x32xf32>
    %c0_6 = arith.constant 0 : index
    %c0_7 = arith.constant 0 : index
    %9 = vector.load %arg10[%c0_6, %c0_7] : memref<16x32xf32, #tpu.memory_space<vmem>>, vector<16x32xf32>
    tpu.vector_store %arg10[%c0_6, %c0_7], %8 {strides = array<i32>} : memref<16x32xf32, #tpu.memory_space<vmem>>, vector<16x32xf32>,
    %c0_i32_8 = arith.constant 0 : i32
    %10 = arith.cmpi eq, %arg1, %c0_i32_8 : i32
    %11 = arith.extui %10 : i1 to i32
    %c0_i32_9 = arith.constant 0 : i32
    %12 = arith.cmpi ne, %11, %c0_i32_9 : i32
    scf.if %12 {
      %c0_10 = arith.constant 0 : index
      %c0_11 = arith.constant 0 : index
      %13 = vector.load %arg10[%c0_10, %c0_11] : memref<16x32xf32, #tpu.memory_space<vmem>>, vector<16x32xf32>
      %c0_12 = arith.constant 0 : index
      %c0_13 = arith.constant 0 : index
      %14 = vector.load %arg4[%c0_12, %c0_13] : memref<1x32xf32, #tpu.memory_space<vmem>>, vector<1x32xf32>
      %15 = vector.broadcast %14 : vector<1x32xf32> to vector<16x32xf32>
      %16 = arith.addf %13, %15 : vector<16x32xf32>
      %c0_14 = arith.constant 0 : index
      %c0_15 = arith.constant 0 : index
      %17 = vector.load %arg5[%c0_14, %c0_15] : memref<16x32xf32, #tpu.memory_space<vmem>>, vector<16x32xf32>
      %18 = arith.addf %16, %17 : vector<16x32xf32>
      %cst_16 = arith.constant dense<0.000000e+00> : vector<16xf32>
      %19 = vector.multi_reduction <add>, %18, %cst_16 [1] : vector<16x32xf32> to vector<16xf32>
      %20 = vector.shape_cast %19 : vector<16xf32> to vector<16x1xf32>
      %cst_17 = arith.constant 3.200000e+01 : f32
      %21 = vector.broadcast %cst_17 : f32 to vector<16x1xf32>
      %22 = arith.divf %20, %21 : vector<16x1xf32>
      %23 = vector.broadcast %22 : vector<16x1xf32> to vector<16x32xf32>
      %24 = arith.subf %18, %23 : vector<16x32xf32>
      %25 = arith.mulf %24, %24 : vector<16x32xf32>
      %cst_18 = arith.constant dense<0.000000e+00> : vector<16xf32>
      %26 = vector.multi_reduction <add>, %25, %cst_18 [1] : vector<16x32xf32> to vector<16xf32>
      %27 = vector.shape_cast %26 : vector<16xf32> to vector<16x1xf32>
      %cst_19 = arith.constant 3.200000e+01 : f32
      %28 = vector.broadcast %cst_19 : f32 to vector<16x1xf32>
      %29 = arith.divf %27, %28 : vector<16x1xf32>
      %cst_20 = arith.constant 9.99999974E-6 : f32
      %30 = vector.broadcast %cst_20 : f32 to vector<16x1xf32>
      %31 = arith.addf %29, %30 : vector<16x1xf32>
      %32 = math.rsqrt %31 : vector<16x1xf32>
      %33 = vector.broadcast %32 : vector<16x1xf32> to vector<16x32xf32>
      %34 = arith.mulf %24, %33 : vector<16x32xf32>
      %c0_21 = arith.constant 0 : index
      %c0_22 = arith.constant 0 : index
      %35 = vector.load %arg6[%c0_21, %c0_22] : memref<1x32xf32, #tpu.memory_space<vmem>>, vector<1x32xf32>
      %36 = vector.broadcast %35 : vector<1x32xf32> to vector<16x32xf32>
      %37 = arith.mulf %34, %36 : vector<16x32xf32>
      %c0_23 = arith.constant 0 : index
      %c0_24 = arith.constant 0 : index
      %38 = vector.load %arg7[%c0_23, %c0_24] : memref<1x32xf32, #tpu.memory_space<vmem>>, vector<1x32xf32>
      %39 = vector.broadcast %38 : vector<1x32xf32> to vector<16x32xf32>
      %40 = arith.addf %37, %39 : vector<16x32xf32>
      %c0_25 = arith.constant 0 : index
      %c0_26 = arith.constant 0 : index
      %41 = vector.load %arg8[%c0_25, %c0_26] : memref<16x32xf32, #tpu.memory_space<vmem>>, vector<16x32xf32>
      tpu.vector_store %arg8[%c0_25, %c0_26], %18 {strides = array<i32>} : memref<16x32xf32, #tpu.memory_space<vmem>>, vector<16x32xf32>,
      %c0_27 = arith.constant 0 : index
      %c0_28 = arith.constant 0 : index
      %42 = vector.load %arg9[%c0_27, %c0_28] : memref<16x32xf32, #tpu.memory_space<vmem>>, vector<16x32xf32>
      tpu.vector_store %arg9[%c0_27, %c0_28], %40 {strides = array<i32>} : memref<16x32xf32, #tpu.memory_space<vmem>>, vector<16x32xf32>,
    } else {
    }
    return
  }
  func.func @transform_0(%arg0: i32, %arg1: i32) -> (i32, i32) {
    %c0_i32 = arith.constant 0 : i32
    return %arg0, %arg1 : i32, i32
  }
  func.func @transform_1(%arg0: i32, %arg1: i32) -> (i32, i32) {
    %c0_i32 = arith.constant 0 : i32
    %c0_i32_0 = arith.constant 0 : i32
    return %arg1, %c0_i32 : i32, i32
  }
  func.func @transform_2(%arg0: i32, %arg1: i32) -> (i32, i32) {
    %c0_i32 = arith.constant 0 : i32
    %c0_i32_0 = arith.constant 0 : i32
    %c0_i32_1 = arith.constant 0 : i32
    return %c0_i32, %c0_i32_0 : i32, i32
  }
  func.func @transform_3(%arg0: i32, %arg1: i32) -> (i32, i32) {
    %c0_i32 = arith.constant 0 : i32
    %c0_i32_0 = arith.constant 0 : i32
    return %arg0, %c0_i32 : i32, i32
  }
  func.func @transform_4(%arg0: i32, %arg1: i32) -> (i32, i32) {
    %c0_i32 = arith.constant 0 : i32
    %c0_i32_0 = arith.constant 0 : i32
    %c0_i32_1 = arith.constant 0 : i32
    return %c0_i32, %c0_i32_0 : i32, i32
  }
  func.func @transform_5(%arg0: i32, %arg1: i32) -> (i32, i32) {
    %c0_i32 = arith.constant 0 : i32
    %c0_i32_0 = arith.constant 0 : i32
    %c0_i32_1 = arith.constant 0 : i32
    return %c0_i32, %c0_i32_0 : i32, i32
  }
  func.func @transform_6(%arg0: i32, %arg1: i32) -> (i32, i32) {
    %c0_i32 = arith.constant 0 : i32
    %c0_i32_0 = arith.constant 0 : i32
    return %arg0, %c0_i32 : i32, i32
  }
  func.func @transform_7(%arg0: i32, %arg1: i32) -> (i32, i32) {
    %c0_i32 = arith.constant 0 : i32
    %c0_i32_0 = arith.constant 0 : i32
    return %arg0, %c0_i32 : i32, i32
  }
}

</mosaic_0001>

<llo_original>
// kernel: encoder_forward.11
$region0: #{encoder_forward.11}
  #allocation0 [shape = 'u32[]', space=smem, size = 0x4, offset = 0x4, fixed_abs, tag = 'smem constant byte address 0x4 - core index']
  #allocation1 [shape = 'u32[144,128]{1,0:T(1,128)}', space=vmem, size = 0x12000, scoped, tag = 'internal scratch']
  %s0 = inlined_call_operand.hbm [shape: f32[2,8,32], index: 0, kind: input, shape index: {}]
  %s1 = inlined_call_operand.vmem [shape: f32[1,8,32], index: 1, kind: input, shape index: {}]
  %s2 = inlined_call_operand.vmem [shape: f32[1,1,32], index: 2, kind: input, shape index: {}]
  %s3 = inlined_call_operand.vmem [shape: f32[1,1,32], index: 3, kind: input, shape index: {}]
  %s4 = inlined_call_operand.vmem [shape: f32[2,8,32], index: 4, kind: output, shape index: {0}]
  %s5 = inlined_call_operand.vmem [shape: bf16[2,8,32], index: 5, kind: output, shape index: {1}]
  %6 = xla_tuple %s4, %s5
  %s7 = sld [smem:[#allocation0]]
  $region61: #{encoder_forward.11} parent=0
    _
  %s9 = ssub.s32 1, %s7
  %s10 = scalar_select 0, %s9, %s7
  $region1: #{encoder_forward.11} parent=0
    #allocation2 [shape = 'u8[8192]{0}', space=vmem, size = 0x2000, scoped, tag = 'input window, operand 0']
    #allocation3 [shape = 's32[2]{0}', space=sflag, size = 0x8, scoped, tag = 'scoped memory for encoder_forward.11']
    %11 = vsyncpa [#allocation3], 0
    %s12 = scalar_lea.sflag [#allocation3], 1
    %13 = vsyncpa %s12, 0
    loop: start=0, step=1, limit=4
    $region2: #{encoder_forward.11} parent=1 // loop_pre_header
      _
    $region3: #{encoder_forward.11} parent=1 // loop_header
      %s15 = sphi 0, %s19
      %p16 = scmp.ge.s32.totalorder %s15, 4
      %s22 = sphi 0, %s34
      %s23 = sphi 0, %s30
      %s24 = sphi 0, %s22
      %s25 = sphi 0, %s23
      %s26 = sphi 0, %s24
      %s27 = sphi 0, %s25
      %s39 = sphi 0, %s41
      %s42 = sphi 0, %s39
      %s43 = sphi 0, %s42
      %s59 = sphi 0, %s43
      %s65 = sphi 0, %s67
      %s68 = sphi 0, %s65
      %s69 = sphi 0, %s68
      %s85 = sphi 0, %s69
      %s89 = sphi 0, %s89
      %s91 = sphi 0, %s89
      %s92 = sphi 0, %s91
      %s106 = sphi 0, %s92
      %s110 = sphi 0, %s110
      %s112 = sphi 0, %s110
      %s113 = sphi 0, %s112
      %s127 = sphi 0, %s113
      %s135 = sphi 0, %s137
      %s138 = sphi 0, %s135
      %s139 = sphi 0, %s138
      %s155 = sphi 0, %s139
      %s163 = sphi 0, %s165
      %s166 = sphi 0, %s163
      %s167 = sphi 0, %s166
      %s183 = sphi 0, %s167
    $region4: #{encoder_forward.11} parent=1 // loop_header_branch
      %18 = sbr.rel (%p16) target = $region8
    $region5: #{encoder_forward.11} parent=1 // loop_body
      %s20 = ssub.s32 %s15, 1
      %s21 = ssub.s32 %s15, 2
      %s28 = sadd.s32 1, %s23
      %p29 = scmp.ge.s32.totalorder %s28, 1
      %s30 = scalar_select %p29, 0, %s28
      %s31 = sadd.s32 1, %s22
      %s32 = scalar_select %p29, %s31, %s22
      %p33 = scmp.ge.s32.totalorder %s32, 2
      %s34 = scalar_select %p33, 0, %s32
      %s35 = ssub.s32 %s22, %s34
      %s36 = ssub.s32 %s23, %s30
      %s37 = sor.u32 %s35, %s36
      %p38 = scmp.eq.s32.totalorder %s37, 0
      %s40 = sadd.s32 %s39, 1
      %s41 = scalar_select %p38, %s39, %s40
      %p44 = pneg %p38
      %p45 = scmp.eq.s32.totalorder %s15, 1
      %p46 = por %p44, %p45
      %p47 = scmp.ne.s32.totalorder %s39, %s42
      %p48 = scmp.eq.s32.totalorder %s15, 0
      %p49 = por %p47, %p48
      %p50 = scmp.ne.s32.totalorder %s39, %s42
      %p51 = scmp.eq.s32.totalorder %s20, 1
      %p52 = por %p50, %p51
      %p53 = scmp.ne.s32.totalorder %s42, %s43
      %p54 = scmp.eq.s32.totalorder %s20, 0
      %p55 = por %p53, %p54
      %p56 = scmp.ne.s32.totalorder %s42, %s43
      %p57 = scmp.eq.s32.totalorder %s21, 1
      %p58 = por %p56, %p57
      %p60 = scmp.ne.s32.totalorder %s43, %s59
      %p61 = scmp.eq.s32.totalorder %s21, 0
      %p62 = por %p60, %p61
      %s63 = ssub.s32 %s23, %s30
      %p64 = scmp.eq.s32.totalorder %s63, 0
      %s66 = sadd.s32 %s65, 1
      %s67 = scalar_select %p64, %s65, %s66
      %p70 = pneg %p64
      %p71 = scmp.eq.s32.totalorder %s15, 1
      %p72 = por %p70, %p71
      %p73 = scmp.ne.s32.totalorder %s65, %s68
      %p74 = scmp.eq.s32.totalorder %s15, 0
      %p75 = por %p73, %p74
      %p76 = scmp.ne.s32.totalorder %s65, %s68
      %p77 = scmp.eq.s32.totalorder %s20, 1
      %p78 = por %p76, %p77
      %p79 = scmp.ne.s32.totalorder %s68, %s69
      %p80 = scmp.eq.s32.totalorder %s20, 0
      %p81 = por %p79, %p80
      %p82 = scmp.ne.s32.totalorder %s68, %s69
      %p83 = scmp.eq.s32.totalorder %s21, 1
      %p84 = por %p82, %p83
      %p86 = scmp.ne.s32.totalorder %s69, %s85
      %p87 = scmp.eq.s32.totalorder %s21, 0
      %p88 = por %p86, %p87
      %s90 = sadd.s32 %s89, 1
      %p93 = scmp.eq.s32.totalorder %s15, 1
      %p94 = scmp.ne.s32.totalorder %s89, %s91
      %p95 = scmp.eq.s32.totalorder %s15, 0
      %p96 = por %p94, %p95
      %p97 = scmp.ne.s32.totalorder %s89, %s91
      %p98 = scmp.eq.s32.totalorder %s20, 1
      %p99 = por %p97, %p98
      %p100 = scmp.ne.s32.totalorder %s91, %s92
      %p101 = scmp.eq.s32.totalorder %s20, 0
      %p102 = por %p100, %p101
      %p103 = scmp.ne.s32.totalorder %s91, %s92
      %p104 = scmp.eq.s32.totalorder %s21, 1
      %p105 = por %p103, %p104
      %p107 = scmp.ne.s32.totalorder %s92, %s106
      %p108 = scmp.eq.s32.totalorder %s21, 0
      %p109 = por %p107, %p108
      %s111 = sadd.s32 %s110, 1
      %p114 = scmp.eq.s32.totalorder %s15, 1
      %p115 = scmp.ne.s32.totalorder %s110, %s112
      %p116 = scmp.eq.s32.totalorder %s15, 0
      %p117 = por %p115, %p116
      %p118 = scmp.ne.s32.totalorder %s110, %s112
      %p119 = scmp.eq.s32.totalorder %s20, 1
      %p120 = por %p118, %p119
      %p121 = scmp.ne.s32.totalorder %s112, %s113
      %p122 = scmp.eq.s32.totalorder %s20, 0
      %p123 = por %p121, %p122
      %p124 = scmp.ne.s32.totalorder %s112, %s113
      %p125 = scmp.eq.s32.totalorder %s21, 1
      %p126 = por %p124, %p125
      %p128 = scmp.ne.s32.totalorder %s113, %s127
      %p129 = scmp.eq.s32.totalorder %s21, 0
      %p130 = por %p128, %p129
      %s131 = ssub.s32 %s22, %s34
      %s132 = ssub.s32 %s23, %s30
      %s133 = sor.u32 %s131, %s132
      %p134 = scmp.eq.s32.totalorder %s133, 0
      %s136 = sadd.s32 %s135, 1
      %s137 = scalar_select %p134, %s135, %s136
      %p140 = pneg %p134
      %p141 = scmp.eq.s32.totalorder %s15, 1
      %p142 = por %p140, %p141
      %p143 = scmp.ne.s32.totalorder %s135, %s138
      %p144 = scmp.eq.s32.totalorder %s15, 0
      %p145 = por %p143, %p144
      %p146 = scmp.ne.s32.totalorder %s135, %s138
      %p147 = scmp.eq.s32.totalorder %s20, 1
      %p148 = por %p146, %p147
      %p149 = scmp.ne.s32.totalorder %s138, %s139
      %p150 = scmp.eq.s32.totalorder %s20, 0
      %p151 = por %p149, %p150
      %p152 = scmp.ne.s32.totalorder %s138, %s139
      %p153 = scmp.eq.s32.totalorder %s21, 1
      %p154 = por %p152, %p153
      %p156 = scmp.ne.s32.totalorder %s139, %s155
      %p157 = scmp.eq.s32.totalorder %s21, 0
      %p158 = por %p156, %p157
      %s159 = ssub.s32 %s22, %s34
      %s160 = ssub.s32 %s23, %s30
      %s161 = sor.u32 %s159, %s160
      %p162 = scmp.eq.s32.totalorder %s161, 0
      %s164 = sadd.s32 %s163, 1
      %s165 = scalar_select %p162, %s163, %s164
      %p168 = pneg %p162
      %p169 = scmp.eq.s32.totalorder %s15, 1
      %p170 = por %p168, %p169
      %p171 = scmp.ne.s32.totalorder %s163, %s166
      %p172 = scmp.eq.s32.totalorder %s15, 0
      %p173 = por %p171, %p172
      %p174 = scmp.ne.s32.totalorder %s163, %s166
      %p175 = scmp.eq.s32.totalorder %s20, 1
      %p176 = por %p174, %p175
      %p177 = scmp.ne.s32.totalorder %s166, %s167
      %p178 = scmp.eq.s32.totalorder %s20, 0
      %p179 = por %p177, %p178
      %p180 = scmp.ne.s32.totalorder %s166, %s167
      %p181 = scmp.eq.s32.totalorder %s21, 1
      %p182 = por %p180, %p181
      %p184 = scmp.ne.s32.totalorder %s167, %s183
      %p185 = scmp.eq.s32.totalorder %s21, 0
      %p186 = por %p184, %p185
      %p187 = scmp.le.s32.totalorder 1, %s15
      %p188 = scmp.lt.s32.totalorder %s15, 3
      %p189 = pnand %p187, %p188
      %p190 = pneg %p189
      // Predicated region
      $region9: #{encoder_forward.11} parent=5 // pred_check
        _
      $region10: #{encoder_forward.11} parent=5 // pred_check_branch
        %192 = sbr.rel (%p189) target = $region12
      $region11: #{encoder_forward.11} parent=5 // pred_region
        %s193 = ssub.s32 %s15, 1
        // Predicated region
        $region13: #{encoder_forward.11} parent=11 // pred_check
          %p194 = pneg %p81
        $region14: #{encoder_forward.11} parent=11 // pred_check_branch
          %196 = sbr.rel (%p194) target = $region16
        $region15: #{encoder_forward.11} parent=11 // pred_region
          %p197 = scmp.lt.s32.totalorder %s25, 0
          %s198 = scalar_select %p197, %s25, 0
          %s199 = smul.addr %s198, 8
          %s200 = scalar_lea.vmem %s1, %s199
        $region16: #{encoder_forward.11} parent=11 // pred_fallthru
          _
        // Predicated region
        $region17: #{encoder_forward.11} parent=11 // pred_check
          %p201 = pneg %p102
        $region18: #{encoder_forward.11} parent=11 // pred_check_branch
          %203 = sbr.rel (%p201) target = $region20
        $region19: #{encoder_forward.11} parent=11 // pred_region
          _
        $region20: #{encoder_forward.11} parent=11 // pred_fallthru
          _
        // Predicated region
        $region21: #{encoder_forward.11} parent=11 // pred_check
          %p204 = pneg %p123
        $region22: #{encoder_forward.11} parent=11 // pred_check_branch
          %206 = sbr.rel (%p204) target = $region24
        $region23: #{encoder_forward.11} parent=11 // pred_region
          _
        $region24: #{encoder_forward.11} parent=11 // pred_fallthru
          _
      $region12: #{encoder_forward.11} parent=5 // pred_fallthru
        _
      %p207 = scmp.lt.s32.totalorder %s15, 2
      // Predicated region
      $region25: #{encoder_forward.11} parent=5 // pred_check
        %p208 = pneg %p207
      $region26: #{encoder_forward.11} parent=5 // pred_check_branch
        %210 = sbr.rel (%p208) target = $region28
      $region27: #{encoder_forward.11} parent=5 // pred_region
        // Predicated region
        $region29: #{encoder_forward.11} parent=27 // pred_check
          %p211 = pneg %p49
        $region30: #{encoder_forward.11} parent=27 // pred_check_branch
          %213 = sbr.rel (%p211) target = $region32
        $region31: #{encoder_forward.11} parent=27 // pred_region
          %s214 = sand.u32 %s39, 1
          %s215 = scalar_lea.sflag [#allocation3], %s214
          %s216 = sand.u32 %s39, 1
          %s217 = smul.addr %s216, 8
          %s218 = scalar_lea.vmem [#allocation2], %s217
          %s220 = ssub.s32 128, 128
          %221 = vsyncadd %s215, %s220
          %s222 = sadd.s32 %s23, %s22
          %s223 = smul.addr %s222, 128
          %s224 = scalar_lea.hbm %s0, %s223
          %s226 = sshll.u32 %s218, 4
          %s227 = int_to_ptr.vmem [resolvable:$true] %s226
          %229 = dma.hbm_to_vmem [thread:$0]  %s224, 128, %s227, %s215
        $region32: #{encoder_forward.11} parent=27 // pred_fallthru
          _
      $region28: #{encoder_forward.11} parent=5 // pred_fallthru
        _
      %p230 = scmp.le.s32.totalorder 1, %s15
      %p231 = scmp.lt.s32.totalorder %s15, 3
      %p232 = pnand %p230, %p231
      %p233 = pneg %p232
      // Predicated region
      $region33: #{encoder_forward.11} parent=5 // pred_check
        _
      $region34: #{encoder_forward.11} parent=5 // pred_check_branch
        %235 = sbr.rel (%p232) target = $region36
      $region35: #{encoder_forward.11} parent=5 // pred_region
        %s236 = ssub.s32 %s15, 1
        %s237 = sand.u32 %s42, 1
        %s238 = scalar_lea.sflag [#allocation3], %s237
        %s239 = sand.u32 %s42, 1
        %s240 = smul.addr %s239, 8
        %s241 = scalar_lea.vmem [#allocation2], %s240
        // Predicated region
        $region37: #{encoder_forward.11} parent=35 // pred_check
          %p242 = pneg %p55
        $region38: #{encoder_forward.11} parent=35 // pred_check_branch
          %244 = sbr.rel (%p242) target = $region40
        $region39: #{encoder_forward.11} parent=35 // pred_region
          %245 = dma.done %s238, 128
        $region40: #{encoder_forward.11} parent=35 // pred_fallthru
          _
        %s246 = sand.u32 %s42, 1
        %s247 = scalar_lea.sflag [#allocation3], %s246
        %s248 = sand.u32 %s42, 1
        %s249 = smul.addr %s248, 8
        %s250 = scalar_lea.vmem [#allocation2], %s249
        %p251 = pneg %p55
        %p252 = pneg %p52
        %p253 = scmp.lt.s32.totalorder %s25, 0
        %s254 = scalar_select %p253, %s25, 0
        %s255 = smul.addr %s254, 8
        %s256 = scalar_lea.vmem %s1, %s255
        %p257 = pneg %p81
        %p258 = pneg %p78
        %p259 = pneg %p102
        %p260 = pneg %p99
        %p261 = pneg %p123
        %p262 = pneg %p120
        %p263 = pneg %p151
        %p264 = pneg %p148
        %p265 = scmp.lt.s32.totalorder %s24, 1
        %s266 = scalar_select %p265, %s24, 1
        %p267 = scmp.lt.s32.totalorder %s25, 0
        %s268 = scalar_select %p267, %s25, 0
        %s269 = sadd.s32 %s268, %s266
        %s270 = smul.addr %s269, 8
        %s271 = scalar_lea.vmem %s4, %s270
        %p272 = pneg %p179
        %p273 = pneg %p176
        %p274 = scmp.lt.s32.totalorder %s24, 1
        %s275 = scalar_select %p274, %s24, 1
        %p276 = scmp.lt.s32.totalorder %s25, 0
        %s277 = scalar_select %p276, %s25, 0
        %s278 = sadd.s32 %s277, %s275
        %s279 = smul.addr %s278, 4
        %s280 = scalar_lea.vmem %s5, %s279
        %p281 = scmp.lt.s32.totalorder %s25, 0
        %s282 = scalar_select %p281, %s25, 0
        %s283 = smul.addr %s282, 8
        %s284 = scalar_lea.vmem %s1, %s283
        %p285 = scmp.lt.s32.totalorder %s24, 1
        %s286 = scalar_select %p285, %s24, 1
        %p287 = scmp.lt.s32.totalorder %s25, 0
        %s288 = scalar_select %p287, %s25, 0
        %s289 = sadd.s32 %s288, %s286
        %s290 = smul.addr %s289, 8
        %s291 = scalar_lea.vmem %s4, %s290
        %p292 = scmp.lt.s32.totalorder %s24, 1
        %s293 = scalar_select %p292, %s24, 1
        %p294 = scmp.lt.s32.totalorder %s25, 0
        %s295 = scalar_select %p294, %s25, 0
        %s296 = sadd.s32 %s295, %s293
        %s297 = smul.addr %s296, 4
        %s298 = scalar_lea.vmem %s5, %s297
        %v299 = vld [vmem:[%s241] sm:$0xff]
        %v300 = vld [vmem:[%s284] sm:$0xff]
        %v301 = vadd.f32 %v299, %v300
        %vm302 = vcmask 261120
        %v303 = vsel %vm302, %v301, 0.0
        %304 = vadd.xlane.f32.xlu0 %v303
        %v305 = vpop.xlane.xlu0 %304
        %v306 = vrcp.pop 32.0
        %v307 = vmul.f32 %v305, %v306
        %v308 = vsub.f32 %v301, %v307
        %v309 = vmul.f32 %v308, %v308
        %v310 = vsel %vm302, %v309, 0.0
        %311 = vadd.xlane.f32.xlu0 %v310
        %v312 = vpop.xlane.xlu0 %311
        %v313 = vmul.f32 %v312, %v306
        %v314 = vadd.f32 %v313, 1e-05
        %v315 = vrsqrt.pop %v314
        %v316 = vmul.f32 %v308, %v315
        %v317 = vld [vmem:[%s2] sm:$0x1]
        %v319 = vlaneseq
        %v320 = vshrl.u32 %v319, 7
        %v321 = vsub.s32 0, %v320
        %v322 = vrot.slane %v317, %v321
        %v324 = vmul.f32 %v316, %v322
        %v325 = vld [vmem:[%s3] sm:$0x1]
        %v327 = vlaneseq
        %v328 = vshrl.u32 %v327, 7
        %v329 = vsub.s32 0, %v328
        %v330 = vrot.slane %v325, %v329
        %v332 = vadd.f32 %v324, %v330
        %333 = vst.msk [vmem:[%s291] sm:$0xff] %vm302, %v301
        %v334 = vpack.c.bf16 %v332, %v332
        %vm335 = vcmask 257024
        %336 = vst.msk [vmem:[%s298] sm:$0xf] %vm335, %v334
        %p337 = scmp.lt.s32.totalorder %s24, 1
        %s338 = scalar_select %p337, %s24, 1
        %p339 = scmp.lt.s32.totalorder %s25, 0
        %s340 = scalar_select %p339, %s25, 0
        %s341 = sadd.s32 %s340, %s338
        %s342 = smul.addr %s341, 8
        %s343 = scalar_lea.vmem %s4, %s342
        %p344 = scmp.lt.s32.totalorder %s24, 1
        %s345 = scalar_select %p344, %s24, 1
        %p346 = scmp.lt.s32.totalorder %s25, 0
        %s347 = scalar_select %p346, %s25, 0
        %s348 = sadd.s32 %s347, %s345
        %s349 = smul.addr %s348, 4
        %s350 = scalar_lea.vmem %s5, %s349
        // Predicated region
        $region41: #{encoder_forward.11} parent=35 // pred_check
          %p351 = pneg %p148
        $region42: #{encoder_forward.11} parent=35 // pred_check_branch
          %353 = sbr.rel (%p351) target = $region44
        $region43: #{encoder_forward.11} parent=35 // pred_region
          _
        $region44: #{encoder_forward.11} parent=35 // pred_fallthru
          _
        // Predicated region
        $region45: #{encoder_forward.11} parent=35 // pred_check
          %p354 = pneg %p176
        $region46: #{encoder_forward.11} parent=35 // pred_check_branch
          %356 = sbr.rel (%p354) target = $region48
        $region47: #{encoder_forward.11} parent=35 // pred_region
          _
        $region48: #{encoder_forward.11} parent=35 // pred_fallthru
          _
      $region36: #{encoder_forward.11} parent=5 // pred_fallthru
        _
      %p357 = scmp.le.s32.totalorder 2, %s15
      // Predicated region
      $region49: #{encoder_forward.11} parent=5 // pred_check
        %p358 = pneg %p357
      $region50: #{encoder_forward.11} parent=5 // pred_check_branch
        %360 = sbr.rel (%p358) target = $region52
      $region51: #{encoder_forward.11} parent=5 // pred_region
        %s361 = ssub.s32 %s15, 2
        // Predicated region
        $region53: #{encoder_forward.11} parent=51 // pred_check
          %p362 = pneg %p154
        $region54: #{encoder_forward.11} parent=51 // pred_check_branch
          %364 = sbr.rel (%p362) target = $region56
        $region55: #{encoder_forward.11} parent=51 // pred_region
          %p365 = scmp.lt.s32.totalorder %s26, 1
          %s366 = scalar_select %p365, %s26, 1
          %p367 = scmp.lt.s32.totalorder %s27, 0
          %s368 = scalar_select %p367, %s27, 0
          %s369 = sadd.s32 %s368, %s366
          %s370 = smul.addr %s369, 8
          %s371 = scalar_lea.vmem %s4, %s370
        $region56: #{encoder_forward.11} parent=51 // pred_fallthru
          _
        // Predicated region
        $region57: #{encoder_forward.11} parent=51 // pred_check
          %p372 = pneg %p182
        $region58: #{encoder_forward.11} parent=51 // pred_check_branch
          %374 = sbr.rel (%p372) target = $region60
        $region59: #{encoder_forward.11} parent=51 // pred_region
          %p375 = scmp.lt.s32.totalorder %s26, 1
          %s376 = scalar_select %p375, %s26, 1
          %p377 = scmp.lt.s32.totalorder %s27, 0
          %s378 = scalar_select %p377, %s27, 0
          %s379 = sadd.s32 %s378, %s376
          %s380 = smul.addr %s379, 4
          %s381 = scalar_lea.vmem %s5, %s380
        $region60: #{encoder_forward.11} parent=51 // pred_fallthru
          _
      $region52: #{encoder_forward.11} parent=5 // pred_fallthru
        _
    $region6: #{encoder_forward.11} parent=1 // loop_footer
      %s19 = sadd.s32 1, %s15
    $region7: #{encoder_forward.11} parent=1 // loop_footer_branch
      %14 = sbr.rel target = $region3
    $region8: #{encoder_forward.11} parent=1 // loop_exit
      _
    %382 = vsyncpa [#allocation3], 1
    %s383 = scalar_lea.sflag [#allocation3], 1
    %384 = vsyncpa %s383, 1

// kernel: encoder_forward.14
$region0: #{encoder_forward.14}
  #allocation0 [shape = 'u32[]', space=smem, size = 0x4, offset = 0x4, fixed_abs, tag = 'smem constant byte address 0x4 - core index']
  #allocation1 [shape = 'u32[144,128]{1,0:T(1,128)}', space=vmem, size = 0x12000, scoped, tag = 'internal scratch']
  #allocation2 [shape = 'f32[16,32]{1,0:T(8,128)}', space=vmem, size = 0x2000, scoped, tag = 'scratch operand']
  %s0 = inlined_call_operand.vmem [shape: bf16[16,32], index: 0, kind: input, shape index: {}]
  %s1 = inlined_call_operand.vmem [shape: f32[32,32], index: 1, kind: input, shape index: {}]
  %s2 = inlined_call_operand.vmem [shape: f32[1,32], index: 2, kind: input, shape index: {}]
  %s3 = inlined_call_operand.vmem [shape: f32[16,32], index: 3, kind: input, shape index: {}]
  %s4 = inlined_call_operand.vmem [shape: f32[1,32], index: 4, kind: input, shape index: {}]
  %s5 = inlined_call_operand.vmem [shape: f32[1,32], index: 5, kind: input, shape index: {}]
  %s6 = inlined_call_operand.vmem [shape: f32[16,32], index: 6, kind: output, shape index: {0}]
  %s7 = inlined_call_operand.vmem [shape: bf16[16,32], index: 7, kind: output, shape index: {1}]
  %8 = xla_tuple %s6, %s7
  %s9 = sld [smem:[#allocation0]]
  $region50: #{encoder_forward.14} parent=0
    _
  %s11 = ssub.s32 1, %s9
  %s12 = scalar_select 0, %s11, %s9
  // Predicated region
  $region2: #{encoder_forward.14} parent=0 // pred_check
    _
  $region3: #{encoder_forward.14} parent=0 // pred_check_branch
    %14 = sbr.rel (0) target = $region5
  $region4: #{encoder_forward.14} parent=0 // pred_region
    _
  $region5: #{encoder_forward.14} parent=0 // pred_fallthru
    _
  // Predicated region
  $region6: #{encoder_forward.14} parent=0 // pred_check
    _
  $region7: #{encoder_forward.14} parent=0 // pred_check_branch
    %16 = sbr.rel (0) target = $region9
  $region8: #{encoder_forward.14} parent=0 // pred_region
    _
  $region9: #{encoder_forward.14} parent=0 // pred_fallthru
    _
  // Predicated region
  $region10: #{encoder_forward.14} parent=0 // pred_check
    _
  $region11: #{encoder_forward.14} parent=0 // pred_check_branch
    %18 = sbr.rel (0) target = $region13
  $region12: #{encoder_forward.14} parent=0 // pred_region
    _
  $region13: #{encoder_forward.14} parent=0 // pred_fallthru
    _
  // Predicated region
  $region14: #{encoder_forward.14} parent=0 // pred_check
    _
  $region15: #{encoder_forward.14} parent=0 // pred_check_branch
    %20 = sbr.rel (0) target = $region17
  $region16: #{encoder_forward.14} parent=0 // pred_region
    _
  $region17: #{encoder_forward.14} parent=0 // pred_fallthru
    _
  // Predicated region
  $region18: #{encoder_forward.14} parent=0 // pred_check
    _
  $region19: #{encoder_forward.14} parent=0 // pred_check_branch
    %22 = sbr.rel (0) target = $region21
  $region20: #{encoder_forward.14} parent=0 // pred_region
    _
  $region21: #{encoder_forward.14} parent=0 // pred_fallthru
    _
  // Predicated region
  $region22: #{encoder_forward.14} parent=0 // pred_check
    _
  $region23: #{encoder_forward.14} parent=0 // pred_check_branch
    %24 = sbr.rel (0) target = $region25
  $region24: #{encoder_forward.14} parent=0 // pred_region
    _
  $region25: #{encoder_forward.14} parent=0 // pred_fallthru
    _
  %p26 = scmp.eq.s32.totalorder 0, 0
  // Predicated region
  $region26: #{encoder_forward.14} parent=0 // pred_check
    %p27 = pneg %p26
  $region27: #{encoder_forward.14} parent=0 // pred_check_branch
    %29 = sbr.rel (%p27) target = $region29
  $region28: #{encoder_forward.14} parent=0 // pred_region
    %vm30 = vcmask 261120
    %31 = vst.msk [vmem:[#allocation2] sm:$0xff] %vm30, 0.0
    %32 = vst.msk [vmem:[#allocation2 + $0x8] sm:$0xff] %vm30, 0.0
  $region29: #{encoder_forward.14} parent=0 // pred_fallthru
    _
  %v33 = vld [vmem:[#allocation2] sm:$0xff]
  %v34 = vld [vmem:[#allocation2 + $0x8] sm:$0xff]
  %v35 = vld [vmem:[%s0] sm:$0xf]
  %v36 = vld [vmem:[%s0 + $0x4] sm:$0xf]
  %v37 = vld [vmem:[%s1] sm:$0xff]
  %v38 = vld [vmem:[%s1 + $0x8] sm:$0xff]
  %v39 = vld [vmem:[%s1 + $0x10] sm:$0xff]
  %v40 = vld [vmem:[%s1 + $0x18] sm:$0xff]
  %v41 = vpack.c.bf16 %v38, %v37
  %v42 = vpack.c.bf16 %v40, %v39
  %v45 = vunpack.c.l.b16 %v35
  %v46 = vunpack.c.l.b16 %v36
  %v47 = vpack.c.b16 %v46, %v45
  %vm48 = vcmask 261120
  %v50 = vsel %vm48, %v47, 0
  %52 = vmatprep.subr.bf16.mxu0 0
  %53 = vmatpush1.bf16.msra.mxu0 0
  %54 = vmatprep.subr.bf16.mxu0 0
  %55 = vmatpush1.bf16.msra.mxu0 0
  %56 = vmatprep.subr.bf16.mxu0 0
  %57 = vmatpush1.bf16.msra.mxu0 0
  %58 = vmatprep.subr.bf16.mxu0 0
  %59 = vmatpush1.bf16.msra.mxu0 0
  %60 = vmatprep.subr.bf16.mxu0 0
  %61 = vmatpush1.bf16.msra.mxu0 0
  %62 = vmatprep.subr.bf16.mxu0 0
  %63 = vmatpush1.bf16.msra.mxu0 0
  %64 = vmatprep.subr.bf16.mxu0 0
  %65 = vmatpush1.bf16.msra.mxu0 %v42
  %66 = vmatprep.subr.bf16.mxu0 0
  %67 = vmatpush1.bf16.msra.mxu0 %v41
  %68 = vmatprep.subr.bf16.mxu0 0
  %69 = vmatpush2.bf16.msra.mxu0 0
  %70 = vmatprep.subr.bf16.mxu0 0
  %71 = vmatpush2.bf16.msra.mxu0 0
  %72 = vmatprep.subr.bf16.mxu0 0
  %73 = vmatpush2.bf16.msra.mxu0 0
  %74 = vmatprep.subr.bf16.mxu0 0
  %75 = vmatpush2.bf16.msra.mxu0 0
  %76 = vmatprep.subr.bf16.mxu0 0
  %77 = vmatpush2.bf16.msra.mxu0 0
  %78 = vmatprep.subr.bf16.mxu0 0
  %79 = vmatpush2.bf16.msra.mxu0 0
  %80 = vmatprep.subr.bf16.mxu0 0
  %81 = vmatpush2.bf16.msra.mxu0 0
  %82 = vmatprep.subr.bf16.mxu0 0
  %83 = vmatpush2.bf16.msra.mxu0 0
  %84 = vmatprep.mubr.bf16.mxu0 0
  %85 = vmatmul.mubr.bf16.gmra.mxu0 %v50
  %v86 = vpop.f32.mrf.mxu0
  %v87 = vadd.f32 0.0, %v86
  %v88 = vpop.f32.mrf.mxu0
  %v89 = vpop.f32.mrf.mxu0
  %v90 = vadd.f32 0.0, %v89
  %v91 = vpop.f32.mrf.mxu0
  %92 = vdwg.mxu0
  %v93 = vadd.f32 %v33, %v87
  %v94 = vadd.f32 %v34, %v90
  %95 = vst.msk [vmem:[#allocation2] sm:$0xff] %vm48, %v93
  %96 = vst.msk [vmem:[#allocation2 + $0x8] sm:$0xff] %vm48, %v94
  // Predicated region
  $region30: #{encoder_forward.14} parent=0 // pred_check
    %p97 = pneg %p26
  $region31: #{encoder_forward.14} parent=0 // pred_check_branch
    %99 = sbr.rel (%p97) target = $region33
  $region32: #{encoder_forward.14} parent=0 // pred_region
    %v100 = vld [vmem:[#allocation2] sm:$0xff]
    %v101 = vld [vmem:[#allocation2 + $0x8] sm:$0xff]
    %v102 = vld [vmem:[%s2] sm:$0x1]
    %v104 = vlaneseq
    %v105 = vshrl.u32 %v104, 7
    %v106 = vsub.s32 0, %v105
    %v107 = vrot.slane %v102, %v106
    %v109 = vadd.f32 %v100, %v107
    %v110 = vadd.f32 %v101, %v107
    %v111 = vld [vmem:[%s3] sm:$0xff]
    %v112 = vld [vmem:[%s3 + $0x8] sm:$0xff]
    %v113 = vadd.f32 %v109, %v111
    %v114 = vadd.f32 %v110, %v112
    %v115 = vsel %vm48, %v113, 0.0
    %116 = vadd.xlane.f32.xlu0 %v115
    %v117 = vpop.xlane.xlu0 %116
    %v118 = vsel %vm48, %v114, 0.0
    %119 = vadd.xlane.f32.xlu0 %v118
    %v120 = vpop.xlane.xlu0 %119
    %v121 = vrcp.pop 32.0
    %v122 = vmul.f32 %v117, %v121
    %v123 = vmul.f32 %v120, %v121
    %v124 = vsub.f32 %v113, %v122
    %v125 = vsub.f32 %v114, %v123
    %v126 = vmul.f32 %v124, %v124
    %v127 = vmul.f32 %v125, %v125
    %v128 = vsel %vm48, %v126, 0.0
    %129 = vadd.xlane.f32.xlu0 %v128
    %v130 = vpop.xlane.xlu0 %129
    %v131 = vsel %vm48, %v127, 0.0
    %132 = vadd.xlane.f32.xlu0 %v131
    %v133 = vpop.xlane.xlu0 %132
    %v134 = vmul.f32 %v130, %v121
    %v135 = vmul.f32 %v133, %v121
    %v136 = vadd.f32 %v134, 1e-05
    %v137 = vadd.f32 %v135, 1e-05
    %v138 = vrsqrt.pop %v136
    %v139 = vrsqrt.pop %v137
    %v140 = vmul.f32 %v124, %v138
    %v141 = vmul.f32 %v125, %v139
    %v142 = vld [vmem:[%s4] sm:$0x1]
    %v144 = vlaneseq
    %v145 = vshrl.u32 %v144, 7
    %v146 = vsub.s32 0, %v145
    %v147 = vrot.slane %v142, %v146
    %v149 = vmul.f32 %v140, %v147
    %v150 = vmul.f32 %v141, %v147
    %v151 = vld [vmem:[%s5] sm:$0x1]
    %v153 = vlaneseq
    %v154 = vshrl.u32 %v153, 7
    %v155 = vsub.s32 0, %v154
    %v156 = vrot.slane %v151, %v155
    %v158 = vadd.f32 %v149, %v156
    %v159 = vadd.f32 %v150, %v156
    %160 = vst.msk [vmem:[%s6] sm:$0xff] %vm48, %v113
    %161 = vst.msk [vmem:[%s6 + $0x8] sm:$0xff] %vm48, %v114
    %v162 = vpack.c.bf16 %v159, %v158
    %v164 = vunpack.c.l.b16 %v162
    %v165 = vunpack.c.h.b16 %v162
    %v166 = vpack.c.b16 %v164, %v164
    %v167 = vpack.c.b16 %v165, %v165
    %vm170 = vcmask 257024
    %171 = vst.msk [vmem:[%s7] sm:$0xf] %vm170, %v166
    %172 = vst.msk [vmem:[%s7 + $0x4] sm:$0xf] %vm170, %v167
  $region33: #{encoder_forward.14} parent=0 // pred_fallthru
    _
  // Predicated region
  $region34: #{encoder_forward.14} parent=0 // pred_check
    _
  $region35: #{encoder_forward.14} parent=0 // pred_check_branch
    %174 = sbr.rel (0) target = $region37
  $region36: #{encoder_forward.14} parent=0 // pred_region
    _
  $region37: #{encoder_forward.14} parent=0 // pred_fallthru
    _
  // Predicated region
  $region38: #{encoder_forward.14} parent=0 // pred_check
    _
  $region39: #{encoder_forward.14} parent=0 // pred_check_branch
    %176 = sbr.rel (0) target = $region41
  $region40: #{encoder_forward.14} parent=0 // pred_region
    _
  $region41: #{encoder_forward.14} parent=0 // pred_fallthru
    _
  // Predicated region
  $region42: #{encoder_forward.14} parent=0 // pred_check
    _
  $region43: #{encoder_forward.14} parent=0 // pred_check_branch
    %178 = sbr.rel (0) target = $region45
  $region44: #{encoder_forward.14} parent=0 // pred_region
    _
  $region45: #{encoder_forward.14} parent=0 // pred_fallthru
    _
  // Predicated region
  $region46: #{encoder_forward.14} parent=0 // pred_check
    _
  $region47: #{encoder_forward.14} parent=0 // pred_check_branch
    %180 = sbr.rel (0) target = $region49
  $region48: #{encoder_forward.14} parent=0 // pred_region
    _
  $region49: #{encoder_forward.14} parent=0 // pred_fallthru
    _

// kernel: encoder_forward.12
$region0: #{encoder_forward.12}
  #allocation0 [shape = 'u32[]', space=smem, size = 0x4, offset = 0x4, fixed_abs, tag = 'smem constant byte address 0x4 - core index']
  #allocation1 [shape = 'u32[144,128]{1,0:T(1,128)}', space=vmem, size = 0x12000, scoped, tag = 'internal scratch']
  #allocation2 [shape = 'f32[16,96]{1,0:T(8,128)}', space=vmem, size = 0x2000, scoped, tag = 'scratch operand']
  %s0 = inlined_call_operand.vmem [shape: bf16[16,32], index: 0, kind: input, shape index: {}]
  %s1 = inlined_call_operand.vmem [shape: f32[32,96], index: 1, kind: input, shape index: {}]
  %s2 = inlined_call_operand.vmem [shape: bf16[16,96], index: 2, kind: output, shape index: {}]
  %s3 = sld [smem:[#allocation0]]
  $region26: #{encoder_forward.12} parent=0
    _
  %s5 = ssub.s32 1, %s3
  %s6 = scalar_select 0, %s5, %s3
  // Predicated region
  $region2: #{encoder_forward.12} parent=0 // pred_check
    _
  $region3: #{encoder_forward.12} parent=0 // pred_check_branch
    %8 = sbr.rel (0) target = $region5
  $region4: #{encoder_forward.12} parent=0 // pred_region
    _
  $region5: #{encoder_forward.12} parent=0 // pred_fallthru
    _
  // Predicated region
  $region6: #{encoder_forward.12} parent=0 // pred_check
    _
  $region7: #{encoder_forward.12} parent=0 // pred_check_branch
    %10 = sbr.rel (0) target = $region9
  $region8: #{encoder_forward.12} parent=0 // pred_region
    _
  $region9: #{encoder_forward.12} parent=0 // pred_fallthru
    _
  %p12 = scmp.eq.s32.totalorder 0, 0
  // Predicated region
  $region10: #{encoder_forward.12} parent=0 // pred_check
    %p13 = pneg %p12
  $region11: #{encoder_forward.12} parent=0 // pred_check_branch
    %15 = sbr.rel (%p13) target = $region13
  $region12: #{encoder_forward.12} parent=0 // pred_region
    %vm16 = vcmask 785408
    %17 = vst.msk [vmem:[#allocation2] sm:$0xff] %vm16, 0.0
    %18 = vst.msk [vmem:[#allocation2 + $0x8] sm:$0xff] %vm16, 0.0
  $region13: #{encoder_forward.12} parent=0 // pred_fallthru
    _
  %v19 = vld [vmem:[#allocation2] sm:$0xff]
  %v20 = vld [vmem:[#allocation2 + $0x8] sm:$0xff]
  %v21 = vld [vmem:[%s0] sm:$0xf]
  %v22 = vld [vmem:[%s0 + $0x4] sm:$0xf]
  %v23 = vld [vmem:[%s1] sm:$0xff]
  %v24 = vld [vmem:[%s1 + $0x8] sm:$0xff]
  %v25 = vld [vmem:[%s1 + $0x10] sm:$0xff]
  %v26 = vld [vmem:[%s1 + $0x18] sm:$0xff]
  %v27 = vpack.c.bf16 %v24, %v23
  %v28 = vpack.c.bf16 %v26, %v25
  %v31 = vunpack.c.l.b16 %v21
  %v32 = vunpack.c.l.b16 %v22
  %v33 = vpack.c.b16 %v32, %v31
  %vm34 = vcmask 261120
  %v36 = vsel %vm34, %v33, 0
  %38 = vmatprep.subr.bf16.mxu0 0
  %39 = vmatpush1.bf16.msra.mxu0 0
  %40 = vmatprep.subr.bf16.mxu0 0
  %41 = vmatpush1.bf16.msra.mxu0 0
  %42 = vmatprep.subr.bf16.mxu0 0
  %43 = vmatpush1.bf16.msra.mxu0 0
  %44 = vmatprep.subr.bf16.mxu0 0
  %45 = vmatpush1.bf16.msra.mxu0 0
  %46 = vmatprep.subr.bf16.mxu0 0
  %47 = vmatpush1.bf16.msra.mxu0 0
  %48 = vmatprep.subr.bf16.mxu0 0
  %49 = vmatpush1.bf16.msra.mxu0 0
  %50 = vmatprep.subr.bf16.mxu0 0
  %51 = vmatpush1.bf16.msra.mxu0 %v28
  %52 = vmatprep.subr.bf16.mxu0 0
  %53 = vmatpush1.bf16.msra.mxu0 %v27
  %54 = vmatprep.subr.bf16.mxu0 0
  %55 = vmatpush2.bf16.msra.mxu0 0
  %56 = vmatprep.subr.bf16.mxu0 0
  %57 = vmatpush2.bf16.msra.mxu0 0
  %58 = vmatprep.subr.bf16.mxu0 0
  %59 = vmatpush2.bf16.msra.mxu0 0
  %60 = vmatprep.subr.bf16.mxu0 0
  %61 = vmatpush2.bf16.msra.mxu0 0
  %62 = vmatprep.subr.bf16.mxu0 0
  %63 = vmatpush2.bf16.msra.mxu0 0
  %64 = vmatprep.subr.bf16.mxu0 0
  %65 = vmatpush2.bf16.msra.mxu0 0
  %66 = vmatprep.subr.bf16.mxu0 0
  %67 = vmatpush2.bf16.msra.mxu0 0
  %68 = vmatprep.subr.bf16.mxu0 0
  %69 = vmatpush2.bf16.msra.mxu0 0
  %70 = vmatprep.mubr.bf16.mxu0 0
  %71 = vmatmul.mubr.bf16.gmra.mxu0 %v36
  %v72 = vpop.f32.mrf.mxu0
  %v73 = vadd.f32 0.0, %v72
  %v74 = vpop.f32.mrf.mxu0
  %v75 = vpop.f32.mrf.mxu0
  %v76 = vadd.f32 0.0, %v75
  %v77 = vpop.f32.mrf.mxu0
  %78 = vdwg.mxu0
  %v79 = vadd.f32 %v19, %v73
  %v80 = vadd.f32 %v20, %v76
  %vm81 = vcmask 785408
  %82 = vst.msk [vmem:[#allocation2] sm:$0xff] %vm81, %v79
  %83 = vst.msk [vmem:[#allocation2 + $0x8] sm:$0xff] %vm81, %v80
  // Predicated region
  $region14: #{encoder_forward.12} parent=0 // pred_check
    %p84 = pneg %p12
  $region15: #{encoder_forward.12} parent=0 // pred_check_branch
    %86 = sbr.rel (%p84) target = $region17
  $region16: #{encoder_forward.12} parent=0 // pred_region
    %v87 = vld [vmem:[#allocation2] sm:$0xff]
    %v88 = vld [vmem:[#allocation2 + $0x8] sm:$0xff]
    %v89 = vpack.c.bf16 %v88, %v87
    %v91 = vunpack.c.l.b16 %v89
    %v92 = vunpack.c.h.b16 %v89
    %v93 = vpack.c.b16 %v91, %v91
    %v94 = vpack.c.b16 %v92, %v92
    %vm97 = vcmask 781312
    %98 = vst.msk [vmem:[%s2] sm:$0xf] %vm97, %v93
    %99 = vst.msk [vmem:[%s2 + $0x4] sm:$0xf] %vm97, %v94
  $region17: #{encoder_forward.12} parent=0 // pred_fallthru
    _
  // Predicated region
  $region18: #{encoder_forward.12} parent=0 // pred_check
    _
  $region19: #{encoder_forward.12} parent=0 // pred_check_branch
    %101 = sbr.rel (0) target = $region21
  $region20: #{encoder_forward.12} parent=0 // pred_region
    _
  $region21: #{encoder_forward.12} parent=0 // pred_fallthru
    _
  // Predicated region
  $region22: #{encoder_forward.12} parent=0 // pred_check
    _
  $region23: #{encoder_forward.12} parent=0 // pred_check_branch
    %103 = sbr.rel (0) target = $region25
  $region24: #{encoder_forward.12} parent=0 // pred_region
    _
  $region25: #{encoder_forward.12} parent=0 // pred_fallthru
    _

// kernel: encoder_forward.13
$region0: #{encoder_forward.13}
  #allocation0 [shape = 'u32[]', space=smem, size = 0x4, offset = 0x4, fixed_abs, tag = 'smem constant byte address 0x4 - core index']
  #allocation1 [shape = 'u32[144,128]{1,0:T(1,128)}', space=vmem, size = 0x12000, scoped, tag = 'internal scratch']
  %s0 = inlined_call_operand.vmem [shape: bf16[2,8,96], index: 0, kind: input, shape index: {}]
  %s1 = inlined_call_operand.vmem [shape: bf16[2,8,32], index: 1, kind: output, shape index: {}]
  %s2 = sld [smem:[#allocation0]]
  $region37: #{encoder_forward.13} parent=0
    _
  %s4 = ssub.s32 1, %s2
  %s5 = scalar_select 0, %s4, %s2
  loop: start=0, step=1, limit=4
  $region2: #{encoder_forward.13} parent=0 // loop_pre_header
    _
  $region3: #{encoder_forward.13} parent=0 // loop_header
    %s7 = sphi 0, %s11
    %p8 = scmp.ge.s32.totalorder %s7, 4
    %s17 = sphi 0, %s19
    %s20 = sphi 0, %s17
    %s21 = sphi 0, %s20
    %s37 = sphi 0, %s21
    %s43 = sphi 0, %s45
    %s46 = sphi 0, %s43
    %s47 = sphi 0, %s46
    %s63 = sphi 0, %s47
  $region4: #{encoder_forward.13} parent=0 // loop_header_branch
    %10 = sbr.rel (%p8) target = $region8
  $region5: #{encoder_forward.13} parent=0 // loop_body
    %s12 = ssub.s32 %s7, 1
    %s13 = ssub.s32 %s7, 2
    %s14 = sadd.s32 %s7, 1
    %s15 = ssub.s32 %s7, %s14
    %p16 = scmp.eq.s32.totalorder %s15, 0
    %s18 = sadd.s32 %s17, 1
    %s19 = scalar_select %p16, %s17, %s18
    %p22 = pneg %p16
    %p23 = scmp.eq.s32.totalorder %s7, 1
    %p24 = por %p22, %p23
    %p25 = scmp.ne.s32.totalorder %s17, %s20
    %p26 = scmp.eq.s32.totalorder %s7, 0
    %p27 = por %p25, %p26
    %p28 = scmp.ne.s32.totalorder %s17, %s20
    %p29 = scmp.eq.s32.totalorder %s12, 1
    %p30 = por %p28, %p29
    %p31 = scmp.ne.s32.totalorder %s20, %s21
    %p32 = scmp.eq.s32.totalorder %s12, 0
    %p33 = por %p31, %p32
    %p34 = scmp.ne.s32.totalorder %s20, %s21
    %p35 = scmp.eq.s32.totalorder %s13, 1
    %p36 = por %p34, %p35
    %p38 = scmp.ne.s32.totalorder %s21, %s37
    %p39 = scmp.eq.s32.totalorder %s13, 0
    %p40 = por %p38, %p39
    %s41 = ssub.s32 %s7, %s14
    %p42 = scmp.eq.s32.totalorder %s41, 0
    %s44 = sadd.s32 %s43, 1
    %s45 = scalar_select %p42, %s43, %s44
    %p48 = pneg %p42
    %p49 = scmp.eq.s32.totalorder %s7, 1
    %p50 = por %p48, %p49
    %p51 = scmp.ne.s32.totalorder %s43, %s46
    %p52 = scmp.eq.s32.totalorder %s7, 0
    %p53 = por %p51, %p52
    %p54 = scmp.ne.s32.totalorder %s43, %s46
    %p55 = scmp.eq.s32.totalorder %s12, 1
    %p56 = por %p54, %p55
    %p57 = scmp.ne.s32.totalorder %s46, %s47
    %p58 = scmp.eq.s32.totalorder %s12, 0
    %p59 = por %p57, %p58
    %p60 = scmp.ne.s32.totalorder %s46, %s47
    %p61 = scmp.eq.s32.totalorder %s13, 1
    %p62 = por %p60, %p61
    %p64 = scmp.ne.s32.totalorder %s47, %s63
    %p65 = scmp.eq.s32.totalorder %s13, 0
    %p66 = por %p64, %p65
    %p67 = scmp.le.s32.totalorder 1, %s7
    %p68 = scmp.lt.s32.totalorder %s7, 3
    %p69 = pnand %p67, %p68
    %p70 = pneg %p69
    // Predicated region
    $region9: #{encoder_forward.13} parent=5 // pred_check
      _
    $region10: #{encoder_forward.13} parent=5 // pred_check_branch
      %72 = sbr.rel (%p69) target = $region12
    $region11: #{encoder_forward.13} parent=5 // pred_region
      %s73 = ssub.s32 %s7, 1
    $region12: #{encoder_forward.13} parent=5 // pred_fallthru
      _
    %p74 = scmp.lt.s32.totalorder %s7, 2
    // Predicated region
    $region13: #{encoder_forward.13} parent=5 // pred_check
      %p75 = pneg %p74
    $region14: #{encoder_forward.13} parent=5 // pred_check_branch
      %77 = sbr.rel (%p75) target = $region16
    $region15: #{encoder_forward.13} parent=5 // pred_region
      // Predicated region
      $region17: #{encoder_forward.13} parent=15 // pred_check
        %p78 = pneg %p27
      $region18: #{encoder_forward.13} parent=15 // pred_check_branch
        %80 = sbr.rel (%p78) target = $region20
      $region19: #{encoder_forward.13} parent=15 // pred_region
        %p81 = scmp.lt.s32.totalorder %s7, 1
        %s82 = scalar_select %p81, %s7, 1
        %s83 = smul.addr %s82, 4
        %s84 = scalar_lea.vmem %s0, %s83
      $region20: #{encoder_forward.13} parent=15 // pred_fallthru
        _
    $region16: #{encoder_forward.13} parent=5 // pred_fallthru
      _
    %p85 = scmp.le.s32.totalorder 1, %s7
    %p86 = scmp.lt.s32.totalorder %s7, 3
    %p87 = pnand %p85, %p86
    %p88 = pneg %p87
    // Predicated region
    $region21: #{encoder_forward.13} parent=5 // pred_check
      _
    $region22: #{encoder_forward.13} parent=5 // pred_check_branch
      %90 = sbr.rel (%p87) target = $region24
    $region23: #{encoder_forward.13} parent=5 // pred_region
      %s91 = ssub.s32 %s7, 1
      %p92 = scmp.lt.s32.totalorder %s12, 1
      %s93 = scalar_select %p92, %s12, 1
      %s94 = smul.addr %s93, 4
      %s95 = scalar_lea.vmem %s0, %s94
      %p96 = pneg %p33
      %p97 = pneg %p30
      %p98 = pneg %p59
      %p99 = pneg %p56
      %p100 = scmp.lt.s32.totalorder %s12, 1
      %s101 = scalar_select %p100, %s12, 1
      %s102 = smul.addr %s101, 4
      %s103 = scalar_lea.vmem %s1, %s102
      %p104 = scmp.lt.s32.totalorder %s12, 1
      %s105 = scalar_select %p104, %s12, 1
      %s106 = smul.addr %s105, 4
      %s107 = scalar_lea.vmem %s0, %s106
      %p108 = scmp.lt.s32.totalorder %s12, 1
      %s109 = scalar_select %p108, %s12, 1
      %s110 = smul.addr %s109, 4
      %s111 = scalar_lea.vmem %s1, %s110
      %v113 = vld [vmem:[%s107] sm:$0xf]
      %v115 = vunpack.c.l.b16 %v113
      %v116 = vpack.c.b16 %v115, %v115
      %117 = vrot.lane.b32.xlu0 %v116, 96
      %v118 = vpop.permute.xlu0 %117
      %vm119 = vcmask 64512
      %v121 = vsel %vm119, %v113, 0
      %v124 = vsel %vm119, %v118, 0
      %126 = vmatprep.subr.bf16.mxu0 0
      %127 = vmatpush1.bf16.xpose.msra.mxu0 0
      %128 = vmatprep.subr.bf16.mxu0 0
      %129 = vmatpush1.bf16.xpose.msra.mxu0 0
      %130 = vmatprep.subr.bf16.mxu0 0
      %131 = vmatpush1.bf16.xpose.msra.mxu0 0
      %132 = vmatprep.subr.bf16.mxu0 0
      %133 = vmatpush1.bf16.xpose.msra.mxu0 0
      %134 = vmatprep.subr.bf16.mxu0 0
      %135 = vmatpush1.bf16.xpose.msra.mxu0 0
      %136 = vmatprep.subr.bf16.mxu0 0
      %137 = vmatpush1.bf16.xpose.msra.mxu0 0
      %138 = vmatprep.subr.bf16.mxu0 0
      %139 = vmatpush1.bf16.xpose.msra.mxu0 0
      %140 = vmatprep.subr.bf16.mxu0 0
      %141 = vmatpush1.bf16.xpose.msra.mxu0 %v124
      %142 = vmatprep.subr.bf16.mxu0 0
      %143 = vmatpush2.bf16.xpose.msra.mxu0 0
      %144 = vmatprep.subr.bf16.mxu0 0
      %145 = vmatpush2.bf16.xpose.msra.mxu0 0
      %146 = vmatprep.subr.bf16.mxu0 0
      %147 = vmatpush2.bf16.xpose.msra.mxu0 0
      %148 = vmatprep.subr.bf16.mxu0 0
      %149 = vmatpush2.bf16.xpose.msra.mxu0 0
      %150 = vmatprep.subr.bf16.mxu0 0
      %151 = vmatpush2.bf16.xpose.msra.mxu0 0
      %152 = vmatprep.subr.bf16.mxu0 0
      %153 = vmatpush2.bf16.xpose.msra.mxu0 0
      %154 = vmatprep.subr.bf16.mxu0 0
      %155 = vmatpush2.bf16.xpose.msra.mxu0 0
      %156 = vmatprep.subr.bf16.mxu0 0
      %157 = vmatpush2.bf16.xpose.msra.mxu0 0
      %158 = vmatprep.mubr.bf16.mxu0 0
      %159 = vmatmul.mubr.bf16.gmra.mxu0 %v121
      %v160 = vpop.f32.mrf.mxu0
      %v161 = vadd.f32 0.0, %v160
      %v162 = vpop.f32.mrf.mxu0
      %v163 = vpop.f32.mrf.mxu0
      %v164 = vpop.f32.mrf.mxu0
      %165 = vdwg.mxu0
      %v166 = vmul.f32 %v161, 0.35355338
      %v167 = vsel %vm119, %v166, -inf
      %168 = vmax.xlane.f32.xlu0 %v167
      %v169 = vpop.xlane.xlu0 %168
      %v170 = vsub.f32 %v166, %v169
      %v171 = vmul.f32 %v170, 1.442695
      %v172 = vpow.pop %v171
      %v173 = vsel %vm119, %v172, 0.0
      %174 = vadd.xlane.f32.xlu0 %v173
      %v175 = vpop.xlane.xlu0 %174
      %v176 = vrcp.pop %v175
      %v177 = vmul.f32 %v172, %v176
      %v178 = vpack.c.bf16 %v177, %v177
      %179 = vrot.lane.b32.xlu0 %v116, 64
      %v180 = vpop.permute.xlu0 %179
      %v182 = vsel %vm119, %v178, 0
      %vm184 = vcmask 1043456
      %v186 = vsel %vm184, %v180, 0
      %188 = vmatprep.subr.bf16.mxu0 0
      %189 = vmatpush1.bf16.msra.mxu0 0
      %190 = vmatprep.subr.bf16.mxu0 0
      %191 = vmatpush1.bf16.msra.mxu0 0
      %192 = vmatprep.subr.bf16.mxu0 0
      %193 = vmatpush1.bf16.msra.mxu0 0
      %194 = vmatprep.subr.bf16.mxu0 0
      %195 = vmatpush1.bf16.msra.mxu0 0
      %196 = vmatprep.subr.bf16.mxu0 0
      %197 = vmatpush1.bf16.msra.mxu0 0
      %198 = vmatprep.subr.bf16.mxu0 0
      %199 = vmatpush1.bf16.msra.mxu0 0
      %200 = vmatprep.subr.bf16.mxu0 0
      %201 = vmatpush1.bf16.msra.mxu0 0
      %202 = vmatprep.subr.bf16.mxu0 0
      %203 = vmatpush1.bf16.msra.mxu0 %v186
      %204 = vmatprep.subr.bf16.mxu0 0
      %205 = vmatpush2.bf16.msra.mxu0 0
      %206 = vmatprep.subr.bf16.mxu0 0
      %207 = vmatpush2.bf16.msra.mxu0 0
      %208 = vmatprep.subr.bf16.mxu0 0
      %209 = vmatpush2.bf16.msra.mxu0 0
      %210 = vmatprep.subr.bf16.mxu0 0
      %211 = vmatpush2.bf16.msra.mxu0 0
      %212 = vmatprep.subr.bf16.mxu0 0
      %213 = vmatpush2.bf16.msra.mxu0 0
      %214 = vmatprep.subr.bf16.mxu0 0
      %215 = vmatpush2.bf16.msra.mxu0 0
      %216 = vmatprep.subr.bf16.mxu0 0
      %217 = vmatpush2.bf16.msra.mxu0 0
      %218 = vmatprep.subr.bf16.mxu0 0
      %219 = vmatpush2.bf16.msra.mxu0 0
      %220 = vmatprep.mubr.bf16.mxu0 0
      %221 = vmatmul.mubr.bf16.gmra.mxu0 %v182
      %v222 = vpop.f32.mrf.mxu0
      %v223 = vadd.f32 0.0, %v222
      %v224 = vpop.f32.mrf.mxu0
      %v225 = vpop.f32.mrf.mxu0
      %v226 = vpop.f32.mrf.mxu0
      %227 = vdwg.mxu0
      %v228 = vpack.c.bf16 %v223, %v223
      %vm229 = vcmask 60416
      %230 = vst.msk [vmem:[%s111] sm:$0xf] %vm229, %v228
      %v231 = vld [vmem:[%s107] sm:$0xf]
      %v233 = vunpack.c.l.b16 %v231
      %v234 = vpack.c.b16 %v233, %v233
      %235 = vrot.lane.b32.xlu0 %v234, 120
      %v236 = vpop.permute.xlu0 %235
      %237 = vrot.lane.b32.xlu0 %v234, 88
      %v238 = vpop.permute.xlu0 %237
      %v240 = vsel %vm119, %v236, 0
      %v243 = vsel %vm119, %v238, 0
      %245 = vmatprep.subr.bf16.mxu0 0
      %246 = vmatpush1.bf16.xpose.msra.mxu0 0
      %247 = vmatprep.subr.bf16.mxu0 0
      %248 = vmatpush1.bf16.xpose.msra.mxu0 0
      %249 = vmatprep.subr.bf16.mxu0 0
      %250 = vmatpush1.bf16.xpose.msra.mxu0 0
      %251 = vmatprep.subr.bf16.mxu0 0
      %252 = vmatpush1.bf16.xpose.msra.mxu0 0
      %253 = vmatprep.subr.bf16.mxu0 0
      %254 = vmatpush1.bf16.xpose.msra.mxu0 0
      %255 = vmatprep.subr.bf16.mxu0 0
      %256 = vmatpush1.bf16.xpose.msra.mxu0 0
      %257 = vmatprep.subr.bf16.mxu0 0
      %258 = vmatpush1.bf16.xpose.msra.mxu0 0
      %259 = vmatprep.subr.bf16.mxu0 0
      %260 = vmatpush1.bf16.xpose.msra.mxu0 %v243
      %261 = vmatprep.subr.bf16.mxu0 0
      %262 = vmatpush2.bf16.xpose.msra.mxu0 0
      %263 = vmatprep.subr.bf16.mxu0 0
      %264 = vmatpush2.bf16.xpose.msra.mxu0 0
      %265 = vmatprep.subr.bf16.mxu0 0
      %266 = vmatpush2.bf16.xpose.msra.mxu0 0
      %267 = vmatprep.subr.bf16.mxu0 0
      %268 = vmatpush2.bf16.xpose.msra.mxu0 0
      %269 = vmatprep.subr.bf16.mxu0 0
      %270 = vmatpush2.bf16.xpose.msra.mxu0 0
      %271 = vmatprep.subr.bf16.mxu0 0
      %272 = vmatpush2.bf16.xpose.msra.mxu0 0
      %273 = vmatprep.subr.bf16.mxu0 0
      %274 = vmatpush2.bf16.xpose.msra.mxu0 0
      %275 = vmatprep.subr.bf16.mxu0 0
      %276 = vmatpush2.bf16.xpose.msra.mxu0 0
      %277 = vmatprep.mubr.bf16.mxu0 0
      %278 = vmatmul.mubr.bf16.gmra.mxu0 %v240
      %v279 = vpop.f32.mrf.mxu0
      %v280 = vadd.f32 0.0, %v279
      %v281 = vpop.f32.mrf.mxu0
      %v282 = vpop.f32.mrf.mxu0
      %v283 = vpop.f32.mrf.mxu0
      %284 = vdwg.mxu0
      %v285 = vmul.f32 %v280, 0.35355338
      %v286 = vsel %vm119, %v285, -inf
      %287 = vmax.xlane.f32.xlu0 %v286
      %v288 = vpop.xlane.xlu0 %287
      %v289 = vsub.f32 %v285, %v288
      %v290 = vmul.f32 %v289, 1.442695
      %v291 = vpow.pop %v290
      %v292 = vsel %vm119, %v291, 0.0
      %293 = vadd.xlane.f32.xlu0 %v292
      %v294 = vpop.xlane.xlu0 %293
      %v295 = vrcp.pop %v294
      %v296 = vmul.f32 %v291, %v295
      %v297 = vpack.c.bf16 %v296, %v296
      %298 = vrot.lane.b32.xlu0 %v234, 56
      %v299 = vpop.permute.xlu0 %298
      %v301 = vsel %vm119, %v297, 0
      %v304 = vsel %vm184, %v299, 0
      %306 = vmatprep.subr.bf16.mxu0 0
      %307 = vmatpush1.bf16.msra.mxu0 0
      %308 = vmatprep.subr.bf16.mxu0 0
      %309 = vmatpush1.bf16.msra.mxu0 0
      %310 = vmatprep.subr.bf16.mxu0 0
      %311 = vmatpush1.bf16.msra.mxu0 0
      %312 = vmatprep.subr.bf16.mxu0 0
      %313 = vmatpush1.bf16.msra.mxu0 0
      %314 = vmatprep.subr.bf16.mxu0 0
      %315 = vmatpush1.bf16.msra.mxu0 0
      %316 = vmatprep.subr.bf16.mxu0 0
      %317 = vmatpush1.bf16.msra.mxu0 0
      %318 = vmatprep.subr.bf16.mxu0 0
      %319 = vmatpush1.bf16.msra.mxu0 0
      %320 = vmatprep.subr.bf16.mxu0 0
      %321 = vmatpush1.bf16.msra.mxu0 %v304
      %322 = vmatprep.subr.bf16.mxu0 0
      %323 = vmatpush2.bf16.msra.mxu0 0
      %324 = vmatprep.subr.bf16.mxu0 0
      %325 = vmatpush2.bf16.msra.mxu0 0
      %326 = vmatprep.subr.bf16.mxu0 0
      %327 = vmatpush2.bf16.msra.mxu0 0
      %328 = vmatprep.subr.bf16.mxu0 0
      %329 = vmatpush2.bf16.msra.mxu0 0
      %330 = vmatprep.subr.bf16.mxu0 0
      %331 = vmatpush2.bf16.msra.mxu0 0
      %332 = vmatprep.subr.bf16.mxu0 0
      %333 = vmatpush2.bf16.msra.mxu0 0
      %334 = vmatprep.subr.bf16.mxu0 0
      %335 = vmatpush2.bf16.msra.mxu0 0
      %336 = vmatprep.subr.bf16.mxu0 0
      %337 = vmatpush2.bf16.msra.mxu0 0
      %338 = vmatprep.mubr.bf16.mxu0 0
      %339 = vmatmul.mubr.bf16.gmra.mxu0 %v301
      %v340 = vpop.f32.mrf.mxu0
      %v341 = vadd.f32 0.0, %v340
      %v342 = vpop.f32.mrf.mxu0
      %v343 = vpop.f32.mrf.mxu0
      %v344 = vpop.f32.mrf.mxu0
      %345 = vdwg.mxu0
      %v346 = vpack.c.bf16 %v341, %v341
      %v348 = vunpack.c.l.b16 %v346
      %v349 = vpack.c.b16 %v348, %v348
      %350 = vrot.lane.b32.xlu0 %v349, 8
      %v351 = vpop.permute.xlu0 %350
      %vm353 = vcmask 126016
      %354 = vst.msk [vmem:[%s111] sm:$0xf] %vm353, %v351
      %v355 = vld [vmem:[%s107] sm:$0xf]
      %v357 = vunpack.c.l.b16 %v355
      %v358 = vpack.c.b16 %v357, %v357
      %359 = vrot.lane.b32.xlu0 %v358, 112
      %v360 = vpop.permute.xlu0 %359
      %361 = vrot.lane.b32.xlu0 %v358, 80
      %v362 = vpop.permute.xlu0 %361
      %v364 = vsel %vm119, %v360, 0
      %v367 = vsel %vm119, %v362, 0
      %369 = vmatprep.subr.bf16.mxu0 0
      %370 = vmatpush1.bf16.xpose.msra.mxu0 0
      %371 = vmatprep.subr.bf16.mxu0 0
      %372 = vmatpush1.bf16.xpose.msra.mxu0 0
      %373 = vmatprep.subr.bf16.mxu0 0
      %374 = vmatpush1.bf16.xpose.msra.mxu0 0
      %375 = vmatprep.subr.bf16.mxu0 0
      %376 = vmatpush1.bf16.xpose.msra.mxu0 0
      %377 = vmatprep.subr.bf16.mxu0 0
      %378 = vmatpush1.bf16.xpose.msra.mxu0 0
      %379 = vmatprep.subr.bf16.mxu0 0
      %380 = vmatpush1.bf16.xpose.msra.mxu0 0
      %381 = vmatprep.subr.bf16.mxu0 0
      %382 = vmatpush1.bf16.xpose.msra.mxu0 0
      %383 = vmatprep.subr.bf16.mxu0 0
      %384 = vmatpush1.bf16.xpose.msra.mxu0 %v367
      %385 = vmatprep.subr.bf16.mxu0 0
      %386 = vmatpush2.bf16.xpose.msra.mxu0 0
      %387 = vmatprep.subr.bf16.mxu0 0
      %388 = vmatpush2.bf16.xpose.msra.mxu0 0
      %389 = vmatprep.subr.bf16.mxu0 0
      %390 = vmatpush2.bf16.xpose.msra.mxu0 0
      %391 = vmatprep.subr.bf16.mxu0 0
      %392 = vmatpush2.bf16.xpose.msra.mxu0 0
      %393 = vmatprep.subr.bf16.mxu0 0
      %394 = vmatpush2.bf16.xpose.msra.mxu0 0
      %395 = vmatprep.subr.bf16.mxu0 0
      %396 = vmatpush2.bf16.xpose.msra.mxu0 0
      %397 = vmatprep.subr.bf16.mxu0 0
      %398 = vmatpush2.bf16.xpose.msra.mxu0 0
      %399 = vmatprep.subr.bf16.mxu0 0
      %400 = vmatpush2.bf16.xpose.msra.mxu0 0
      %401 = vmatprep.mubr.bf16.mxu0 0
      %402 = vmatmul.mubr.bf16.gmra.mxu0 %v364
      %v403 = vpop.f32.mrf.mxu0
      %v404 = vadd.f32 0.0, %v403
      %v405 = vpop.f32.mrf.mxu0
      %v406 = vpop.f32.mrf.mxu0
      %v407 = vpop.f32.mrf.mxu0
      %408 = vdwg.mxu0
      %v409 = vmul.f32 %v404, 0.35355338
      %v410 = vsel %vm119, %v409, -inf
      %411 = vmax.xlane.f32.xlu0 %v410
      %v412 = vpop.xlane.xlu0 %411
      %v413 = vsub.f32 %v409, %v412
      %v414 = vmul.f32 %v413, 1.442695
      %v415 = vpow.pop %v414
      %v416 = vsel %vm119, %v415, 0.0
      %417 = vadd.xlane.f32.xlu0 %v416
      %v418 = vpop.xlane.xlu0 %417
      %v419 = vrcp.pop %v418
      %v420 = vmul.f32 %v415, %v419
      %v421 = vpack.c.bf16 %v420, %v420
      %422 = vrot.lane.b32.xlu0 %v358, 48
      %v423 = vpop.permute.xlu0 %422
      %v425 = vsel %vm119, %v421, 0
      %v428 = vsel %vm184, %v423, 0
      %430 = vmatprep.subr.bf16.mxu0 0
      %431 = vmatpush1.bf16.msra.mxu0 0
      %432 = vmatprep.subr.bf16.mxu0 0
      %433 = vmatpush1.bf16.msra.mxu0 0
      %434 = vmatprep.subr.bf16.mxu0 0
      %435 = vmatpush1.bf16.msra.mxu0 0
      %436 = vmatprep.subr.bf16.mxu0 0
      %437 = vmatpush1.bf16.msra.mxu0 0
      %438 = vmatprep.subr.bf16.mxu0 0
      %439 = vmatpush1.bf16.msra.mxu0 0
      %440 = vmatprep.subr.bf16.mxu0 0
      %441 = vmatpush1.bf16.msra.mxu0 0
      %442 = vmatprep.subr.bf16.mxu0 0
      %443 = vmatpush1.bf16.msra.mxu0 0
      %444 = vmatprep.subr.bf16.mxu0 0
      %445 = vmatpush1.bf16.msra.mxu0 %v428
      %446 = vmatprep.subr.bf16.mxu0 0
      %447 = vmatpush2.bf16.msra.mxu0 0
      %448 = vmatprep.subr.bf16.mxu0 0
      %449 = vmatpush2.bf16.msra.mxu0 0
      %450 = vmatprep.subr.bf16.mxu0 0
      %451 = vmatpush2.bf16.msra.mxu0 0
      %452 = vmatprep.subr.bf16.mxu0 0
      %453 = vmatpush2.bf16.msra.mxu0 0
      %454 = vmatprep.subr.bf16.mxu0 0
      %455 = vmatpush2.bf16.msra.mxu0 0
      %456 = vmatprep.subr.bf16.mxu0 0
      %457 = vmatpush2.bf16.msra.mxu0 0
      %458 = vmatprep.subr.bf16.mxu0 0
      %459 = vmatpush2.bf16.msra.mxu0 0
      %460 = vmatprep.subr.bf16.mxu0 0
      %461 = vmatpush2.bf16.msra.mxu0 0
      %462 = vmatprep.mubr.bf16.mxu0 0
      %463 = vmatmul.mubr.bf16.gmra.mxu0 %v425
      %v464 = vpop.f32.mrf.mxu0
      %v465 = vadd.f32 0.0, %v464
      %v466 = vpop.f32.mrf.mxu0
      %v467 = vpop.f32.mrf.mxu0
      %v468 = vpop.f32.mrf.mxu0
      %469 = vdwg.mxu0
      %v470 = vpack.c.bf16 %v465, %v465
      %v472 = vunpack.c.l.b16 %v470
      %v473 = vpack.c.b16 %v472, %v472
      %474 = vrot.lane.b32.xlu0 %v473, 16
      %v475 = vpop.permute.xlu0 %474
      %vm477 = vcmask 191616
      %478 = vst.msk [vmem:[%s111] sm:$0xf] %vm477, %v475
      %v479 = vld [vmem:[%s107] sm:$0xf]
      %v481 = vunpack.c.l.b16 %v479
      %v482 = vpack.c.b16 %v481, %v481
      %483 = vrot.lane.b32.xlu0 %v482, 104
      %v484 = vpop.permute.xlu0 %483
      %485 = vrot.lane.b32.xlu0 %v482, 72
      %v486 = vpop.permute.xlu0 %485
      %v488 = vsel %vm119, %v484, 0
      %v491 = vsel %vm119, %v486, 0
      %493 = vmatprep.subr.bf16.mxu0 0
      %494 = vmatpush1.bf16.xpose.msra.mxu0 0
      %495 = vmatprep.subr.bf16.mxu0 0
      %496 = vmatpush1.bf16.xpose.msra.mxu0 0
      %497 = vmatprep.subr.bf16.mxu0 0
      %498 = vmatpush1.bf16.xpose.msra.mxu0 0
      %499 = vmatprep.subr.bf16.mxu0 0
      %500 = vmatpush1.bf16.xpose.msra.mxu0 0
      %501 = vmatprep.subr.bf16.mxu0 0
      %502 = vmatpush1.bf16.xpose.msra.mxu0 0
      %503 = vmatprep.subr.bf16.mxu0 0
      %504 = vmatpush1.bf16.xpose.msra.mxu0 0
      %505 = vmatprep.subr.bf16.mxu0 0
      %506 = vmatpush1.bf16.xpose.msra.mxu0 0
      %507 = vmatprep.subr.bf16.mxu0 0
      %508 = vmatpush1.bf16.xpose.msra.mxu0 %v491
      %509 = vmatprep.subr.bf16.mxu0 0
      %510 = vmatpush2.bf16.xpose.msra.mxu0 0
      %511 = vmatprep.subr.bf16.mxu0 0
      %512 = vmatpush2.bf16.xpose.msra.mxu0 0
      %513 = vmatprep.subr.bf16.mxu0 0
      %514 = vmatpush2.bf16.xpose.msra.mxu0 0
      %515 = vmatprep.subr.bf16.mxu0 0
      %516 = vmatpush2.bf16.xpose.msra.mxu0 0
      %517 = vmatprep.subr.bf16.mxu0 0
      %518 = vmatpush2.bf16.xpose.msra.mxu0 0
      %519 = vmatprep.subr.bf16.mxu0 0
      %520 = vmatpush2.bf16.xpose.msra.mxu0 0
      %521 = vmatprep.subr.bf16.mxu0 0
      %522 = vmatpush2.bf16.xpose.msra.mxu0 0
      %523 = vmatprep.subr.bf16.mxu0 0
      %524 = vmatpush2.bf16.xpose.msra.mxu0 0
      %525 = vmatprep.mubr.bf16.mxu0 0
      %526 = vmatmul.mubr.bf16.gmra.mxu0 %v488
      %v527 = vpop.f32.mrf.mxu0
      %v528 = vadd.f32 0.0, %v527
      %v529 = vpop.f32.mrf.mxu0
      %v530 = vpop.f32.mrf.mxu0
      %v531 = vpop.f32.mrf.mxu0
      %532 = vdwg.mxu0
      %v533 = vmul.f32 %v528, 0.35355338
      %v534 = vsel %vm119, %v533, -inf
      %535 = vmax.xlane.f32.xlu0 %v534
      %v536 = vpop.xlane.xlu0 %535
      %v537 = vsub.f32 %v533, %v536
      %v538 = vmul.f32 %v537, 1.442695
      %v539 = vpow.pop %v538
      %v540 = vsel %vm119, %v539, 0.0
      %541 = vadd.xlane.f32.xlu0 %v540
      %v542 = vpop.xlane.xlu0 %541
      %v543 = vrcp.pop %v542
      %v544 = vmul.f32 %v539, %v543
      %v545 = vpack.c.bf16 %v544, %v544
      %546 = vrot.lane.b32.xlu0 %v482, 40
      %v547 = vpop.permute.xlu0 %546
      %v549 = vsel %vm119, %v545, 0
      %v552 = vsel %vm184, %v547, 0
      %554 = vmatprep.subr.bf16.mxu0 0
      %555 = vmatpush1.bf16.msra.mxu0 0
      %556 = vmatprep.subr.bf16.mxu0 0
      %557 = vmatpush1.bf16.msra.mxu0 0
      %558 = vmatprep.subr.bf16.mxu0 0
      %559 = vmatpush1.bf16.msra.mxu0 0
      %560 = vmatprep.subr.bf16.mxu0 0
      %561 = vmatpush1.bf16.msra.mxu0 0
      %562 = vmatprep.subr.bf16.mxu0 0
      %563 = vmatpush1.bf16.msra.mxu0 0
      %564 = vmatprep.subr.bf16.mxu0 0
      %565 = vmatpush1.bf16.msra.mxu0 0
      %566 = vmatprep.subr.bf16.mxu0 0
      %567 = vmatpush1.bf16.msra.mxu0 0
      %568 = vmatprep.subr.bf16.mxu0 0
      %569 = vmatpush1.bf16.msra.mxu0 %v552
      %570 = vmatprep.subr.bf16.mxu0 0
      %571 = vmatpush2.bf16.msra.mxu0 0
      %572 = vmatprep.subr.bf16.mxu0 0
      %573 = vmatpush2.bf16.msra.mxu0 0
      %574 = vmatprep.subr.bf16.mxu0 0
      %575 = vmatpush2.bf16.msra.mxu0 0
      %576 = vmatprep.subr.bf16.mxu0 0
      %577 = vmatpush2.bf16.msra.mxu0 0
      %578 = vmatprep.subr.bf16.mxu0 0
      %579 = vmatpush2.bf16.msra.mxu0 0
      %580 = vmatprep.subr.bf16.mxu0 0
      %581 = vmatpush2.bf16.msra.mxu0 0
      %582 = vmatprep.subr.bf16.mxu0 0
      %583 = vmatpush2.bf16.msra.mxu0 0
      %584 = vmatprep.subr.bf16.mxu0 0
      %585 = vmatpush2.bf16.msra.mxu0 0
      %586 = vmatprep.mubr.bf16.mxu0 0
      %587 = vmatmul.mubr.bf16.gmra.mxu0 %v549
      %v588 = vpop.f32.mrf.mxu0
      %v589 = vadd.f32 0.0, %v588
      %v590 = vpop.f32.mrf.mxu0
      %v591 = vpop.f32.mrf.mxu0
      %v592 = vpop.f32.mrf.mxu0
      %593 = vdwg.mxu0
      %v594 = vpack.c.bf16 %v589, %v589
      %v596 = vunpack.c.l.b16 %v594
      %v597 = vpack.c.b16 %v596, %v596
      %598 = vrot.lane.b32.xlu0 %v597, 24
      %v599 = vpop.permute.xlu0 %598
      %vm601 = vcmask 257216
      %602 = vst.msk [vmem:[%s111] sm:$0xf] %vm601, %v599
      %p603 = scmp.lt.s32.totalorder %s12, 1
      %s604 = scalar_select %p603, %s12, 1
      %s605 = smul.addr %s604, 4
      %s606 = scalar_lea.vmem %s1, %s605
      // Predicated region
      $region25: #{encoder_forward.13} parent=23 // pred_check
        %p607 = pneg %p56
      $region26: #{encoder_forward.13} parent=23 // pred_check_branch
        %609 = sbr.rel (%p607) target = $region28
      $region27: #{encoder_forward.13} parent=23 // pred_region
        _
      $region28: #{encoder_forward.13} parent=23 // pred_fallthru
        _
    $region24: #{encoder_forward.13} parent=5 // pred_fallthru
      _
    %p610 = scmp.le.s32.totalorder 2, %s7
    // Predicated region
    $region29: #{encoder_forward.13} parent=5 // pred_check
      %p611 = pneg %p610
    $region30: #{encoder_forward.13} parent=5 // pred_check_branch
      %613 = sbr.rel (%p611) target = $region32
    $region31: #{encoder_forward.13} parent=5 // pred_region
      %s614 = ssub.s32 %s7, 2
      // Predicated region
      $region33: #{encoder_forward.13} parent=31 // pred_check
        %p615 = pneg %p62
      $region34: #{encoder_forward.13} parent=31 // pred_check_branch
        %617 = sbr.rel (%p615) target = $region36
      $region35: #{encoder_forward.13} parent=31 // pred_region
        %p618 = scmp.lt.s32.totalorder %s13, 1
        %s619 = scalar_select %p618, %s13, 1
        %s620 = smul.addr %s619, 4
        %s621 = scalar_lea.vmem %s1, %s620
      $region36: #{encoder_forward.13} parent=31 // pred_fallthru
        _
    $region32: #{encoder_forward.13} parent=5 // pred_fallthru
      _
  $region6: #{encoder_forward.13} parent=0 // loop_footer
    %s11 = sadd.s32 1, %s7
  $region7: #{encoder_forward.13} parent=0 // loop_footer_branch
    %6 = sbr.rel target = $region3
  $region8: #{encoder_forward.13} parent=0 // loop_exit
    _

// kernel: encoder_forward.15
$region0: #{encoder_forward.15}
  #allocation0 [shape = 'u32[]', space=smem, size = 0x4, offset = 0x4, fixed_abs, tag = 'smem constant byte address 0x4 - core index']
  #allocation1 [shape = 'u32[144,128]{1,0:T(1,128)}', space=vmem, size = 0x12000, scoped, tag = 'internal scratch']
  #allocation2 [shape = 'f32[16,64]{1,0:T(8,128)}', space=vmem, size = 0x2000, scoped, tag = 'scratch operand']
  %s0 = inlined_call_operand.vmem [shape: bf16[16,32], index: 0, kind: input, shape index: {}]
  %s1 = inlined_call_operand.vmem [shape: f32[32,64], index: 1, kind: input, shape index: {}]
  %s2 = inlined_call_operand.vmem [shape: f32[1,64], index: 2, kind: input, shape index: {}]
  %s3 = inlined_call_operand.vmem [shape: bf16[16,64], index: 3, kind: output, shape index: {}]
  %s4 = sld [smem:[#allocation0]]
  $region30: #{encoder_forward.15} parent=0
    _
  %s6 = ssub.s32 1, %s4
  %s7 = scalar_select 0, %s6, %s4
  // Predicated region
  $region2: #{encoder_forward.15} parent=0 // pred_check
    _
  $region3: #{encoder_forward.15} parent=0 // pred_check_branch
    %9 = sbr.rel (0) target = $region5
  $region4: #{encoder_forward.15} parent=0 // pred_region
    _
  $region5: #{encoder_forward.15} parent=0 // pred_fallthru
    _
  // Predicated region
  $region6: #{encoder_forward.15} parent=0 // pred_check
    _
  $region7: #{encoder_forward.15} parent=0 // pred_check_branch
    %11 = sbr.rel (0) target = $region9
  $region8: #{encoder_forward.15} parent=0 // pred_region
    _
  $region9: #{encoder_forward.15} parent=0 // pred_fallthru
    _
  // Predicated region
  $region10: #{encoder_forward.15} parent=0 // pred_check
    _
  $region11: #{encoder_forward.15} parent=0 // pred_check_branch
    %13 = sbr.rel (0) target = $region13
  $region12: #{encoder_forward.15} parent=0 // pred_region
    _
  $region13: #{encoder_forward.15} parent=0 // pred_fallthru
    _
  %p15 = scmp.eq.s32.totalorder 0, 0
  // Predicated region
  $region14: #{encoder_forward.15} parent=0 // pred_check
    %p16 = pneg %p15
  $region15: #{encoder_forward.15} parent=0 // pred_check_branch
    %18 = sbr.rel (%p16) target = $region17
  $region16: #{encoder_forward.15} parent=0 // pred_region
    %vm19 = vcmask 523264
    %20 = vst.msk [vmem:[#allocation2] sm:$0xff] %vm19, 0.0
    %21 = vst.msk [vmem:[#allocation2 + $0x8] sm:$0xff] %vm19, 0.0
  $region17: #{encoder_forward.15} parent=0 // pred_fallthru
    _
  %v22 = vld [vmem:[#allocation2] sm:$0xff]
  %v23 = vld [vmem:[#allocation2 + $0x8] sm:$0xff]
  %v24 = vld [vmem:[%s0] sm:$0xf]
  %v25 = vld [vmem:[%s0 + $0x4] sm:$0xf]
  %v26 = vld [vmem:[%s1] sm:$0xff]
  %v27 = vld [vmem:[%s1 + $0x8] sm:$0xff]
  %v28 = vld [vmem:[%s1 + $0x10] sm:$0xff]
  %v29 = vld [vmem:[%s1 + $0x18] sm:$0xff]
  %v30 = vpack.c.bf16 %v27, %v26
  %v31 = vpack.c.bf16 %v29, %v28
  %v34 = vunpack.c.l.b16 %v24
  %v35 = vunpack.c.l.b16 %v25
  %v36 = vpack.c.b16 %v35, %v34
  %vm37 = vcmask 261120
  %v39 = vsel %vm37, %v36, 0
  %41 = vmatprep.subr.bf16.mxu0 0
  %42 = vmatpush1.bf16.msra.mxu0 0
  %43 = vmatprep.subr.bf16.mxu0 0
  %44 = vmatpush1.bf16.msra.mxu0 0
  %45 = vmatprep.subr.bf16.mxu0 0
  %46 = vmatpush1.bf16.msra.mxu0 0
  %47 = vmatprep.subr.bf16.mxu0 0
  %48 = vmatpush1.bf16.msra.mxu0 0
  %49 = vmatprep.subr.bf16.mxu0 0
  %50 = vmatpush1.bf16.msra.mxu0 0
  %51 = vmatprep.subr.bf16.mxu0 0
  %52 = vmatpush1.bf16.msra.mxu0 0
  %53 = vmatprep.subr.bf16.mxu0 0
  %54 = vmatpush1.bf16.msra.mxu0 %v31
  %55 = vmatprep.subr.bf16.mxu0 0
  %56 = vmatpush1.bf16.msra.mxu0 %v30
  %57 = vmatprep.subr.bf16.mxu0 0
  %58 = vmatpush2.bf16.msra.mxu0 0
  %59 = vmatprep.subr.bf16.mxu0 0
  %60 = vmatpush2.bf16.msra.mxu0 0
  %61 = vmatprep.subr.bf16.mxu0 0
  %62 = vmatpush2.bf16.msra.mxu0 0
  %63 = vmatprep.subr.bf16.mxu0 0
  %64 = vmatpush2.bf16.msra.mxu0 0
  %65 = vmatprep.subr.bf16.mxu0 0
  %66 = vmatpush2.bf16.msra.mxu0 0
  %67 = vmatprep.subr.bf16.mxu0 0
  %68 = vmatpush2.bf16.msra.mxu0 0
  %69 = vmatprep.subr.bf16.mxu0 0
  %70 = vmatpush2.bf16.msra.mxu0 0
  %71 = vmatprep.subr.bf16.mxu0 0
  %72 = vmatpush2.bf16.msra.mxu0 0
  %73 = vmatprep.mubr.bf16.mxu0 0
  %74 = vmatmul.mubr.bf16.gmra.mxu0 %v39
  %v75 = vpop.f32.mrf.mxu0
  %v76 = vadd.f32 0.0, %v75
  %v77 = vpop.f32.mrf.mxu0
  %v78 = vpop.f32.mrf.mxu0
  %v79 = vadd.f32 0.0, %v78
  %v80 = vpop.f32.mrf.mxu0
  %81 = vdwg.mxu0
  %v82 = vadd.f32 %v22, %v76
  %v83 = vadd.f32 %v23, %v79
  %vm84 = vcmask 523264
  %85 = vst.msk [vmem:[#allocation2] sm:$0xff] %vm84, %v82
  %86 = vst.msk [vmem:[#allocation2 + $0x8] sm:$0xff] %vm84, %v83
  // Predicated region
  $region18: #{encoder_forward.15} parent=0 // pred_check
    %p87 = pneg %p15
  $region19: #{encoder_forward.15} parent=0 // pred_check_branch
    %89 = sbr.rel (%p87) target = $region21
  $region20: #{encoder_forward.15} parent=0 // pred_region
    %v90 = vld [vmem:[#allocation2] sm:$0xff]
    %v91 = vld [vmem:[#allocation2 + $0x8] sm:$0xff]
    %v92 = vld [vmem:[%s2] sm:$0x1]
    %v94 = vlaneseq
    %v95 = vshrl.u32 %v94, 7
    %v96 = vsub.s32 0, %v95
    %v97 = vrot.slane %v92, %v96
    %v99 = vadd.f32 %v90, %v97
    %v100 = vadd.f32 %v91, %v97
    %v101 = vmul.f32 %v99, %v99
    %v102 = vmul.f32 %v100, %v100
    %v103 = vmul.f32 %v99, %v101
    %v104 = vmul.f32 %v100, %v102
    %v105 = vmul.f32 %v103, 0.044715
    %v106 = vmul.f32 %v104, 0.044715
    %v107 = vadd.f32 %v99, %v105
    %v108 = vadd.f32 %v100, %v106
    %v109 = vmul.f32 %v107, 0.7978846
    %v110 = vmul.f32 %v108, 0.7978846
    %v111 = vtanh.pop %v109
    %v112 = vtanh.pop %v110
    %v113 = vadd.f32 %v111, 1.0
    %v114 = vadd.f32 %v112, 1.0
    %v115 = vmul.f32 %v113, 0.5
    %v116 = vmul.f32 %v114, 0.5
    %v117 = vmul.f32 %v99, %v115
    %v118 = vmul.f32 %v100, %v116
    %v119 = vpack.c.bf16 %v118, %v117
    %v121 = vunpack.c.l.b16 %v119
    %v122 = vunpack.c.h.b16 %v119
    %v123 = vpack.c.b16 %v121, %v121
    %v124 = vpack.c.b16 %v122, %v122
    %vm127 = vcmask 519168
    %128 = vst.msk [vmem:[%s3] sm:$0xf] %vm127, %v123
    %129 = vst.msk [vmem:[%s3 + $0x4] sm:$0xf] %vm127, %v124
  $region21: #{encoder_forward.15} parent=0 // pred_fallthru
    _
  // Predicated region
  $region22: #{encoder_forward.15} parent=0 // pred_check
    _
  $region23: #{encoder_forward.15} parent=0 // pred_check_branch
    %131 = sbr.rel (0) target = $region25
  $region24: #{encoder_forward.15} parent=0 // pred_region
    _
  $region25: #{encoder_forward.15} parent=0 // pred_fallthru
    _
  // Predicated region
  $region26: #{encoder_forward.15} parent=0 // pred_check
    _
  $region27: #{encoder_forward.15} parent=0 // pred_check_branch
    %133 = sbr.rel (0) target = $region29
  $region28: #{encoder_forward.15} parent=0 // pred_region
    _
  $region29: #{encoder_forward.15} parent=0 // pred_fallthru
    _

// kernel: encoder_forward.16
$region0: #{encoder_forward.16}
  #allocation0 [shape = 'u32[]', space=smem, size = 0x4, offset = 0x4, fixed_abs, tag = 'smem constant byte address 0x4 - core index']
  #allocation1 [shape = 'u32[144,128]{1,0:T(1,128)}', space=vmem, size = 0x12000, scoped, tag = 'internal scratch']
  #allocation2 [shape = 'f32[16,32]{1,0:T(8,128)}', space=vmem, size = 0x2000, scoped, tag = 'scratch operand']
  %s0 = inlined_call_operand.vmem [shape: bf16[16,64], index: 0, kind: input, shape index: {}]
  %s1 = inlined_call_operand.vmem [shape: f32[64,32], index: 1, kind: input, shape index: {}]
  %s2 = inlined_call_operand.vmem [shape: f32[1,32], index: 2, kind: input, shape index: {}]
  %s3 = inlined_call_operand.vmem [shape: f32[16,32], index: 3, kind: input, shape index: {}]
  %s4 = inlined_call_operand.vmem [shape: f32[1,32], index: 4, kind: input, shape index: {}]
  %s5 = inlined_call_operand.vmem [shape: f32[1,32], index: 5, kind: input, shape index: {}]
  %s6 = inlined_call_operand.vmem [shape: f32[16,32], index: 6, kind: output, shape index: {0}]
  %s7 = inlined_call_operand.vmem [shape: bf16[16,32], index: 7, kind: output, shape index: {1}]
  %8 = xla_tuple %s6, %s7
  %s9 = sld [smem:[#allocation0]]
  $region50: #{encoder_forward.16} parent=0
    _
  %s11 = ssub.s32 1, %s9
  %s12 = scalar_select 0, %s11, %s9
  // Predicated region
  $region2: #{encoder_forward.16} parent=0 // pred_check
    _
  $region3: #{encoder_forward.16} parent=0 // pred_check_branch
    %14 = sbr.rel (0) target = $region5
  $region4: #{encoder_forward.16} parent=0 // pred_region
    _
  $region5: #{encoder_forward.16} parent=0 // pred_fallthru
    _
  // Predicated region
  $region6: #{encoder_forward.16} parent=0 // pred_check
    _
  $region7: #{encoder_forward.16} parent=0 // pred_check_branch
    %16 = sbr.rel (0) target = $region9
  $region8: #{encoder_forward.16} parent=0 // pred_region
    _
  $region9: #{encoder_forward.16} parent=0 // pred_fallthru
    _
  // Predicated region
  $region10: #{encoder_forward.16} parent=0 // pred_check
    _
  $region11: #{encoder_forward.16} parent=0 // pred_check_branch
    %18 = sbr.rel (0) target = $region13
  $region12: #{encoder_forward.16} parent=0 // pred_region
    _
  $region13: #{encoder_forward.16} parent=0 // pred_fallthru
    _
  // Predicated region
  $region14: #{encoder_forward.16} parent=0 // pred_check
    _
  $region15: #{encoder_forward.16} parent=0 // pred_check_branch
    %20 = sbr.rel (0) target = $region17
  $region16: #{encoder_forward.16} parent=0 // pred_region
    _
  $region17: #{encoder_forward.16} parent=0 // pred_fallthru
    _
  // Predicated region
  $region18: #{encoder_forward.16} parent=0 // pred_check
    _
  $region19: #{encoder_forward.16} parent=0 // pred_check_branch
    %22 = sbr.rel (0) target = $region21
  $region20: #{encoder_forward.16} parent=0 // pred_region
    _
  $region21: #{encoder_forward.16} parent=0 // pred_fallthru
    _
  // Predicated region
  $region22: #{encoder_forward.16} parent=0 // pred_check
    _
  $region23: #{encoder_forward.16} parent=0 // pred_check_branch
    %24 = sbr.rel (0) target = $region25
  $region24: #{encoder_forward.16} parent=0 // pred_region
    _
  $region25: #{encoder_forward.16} parent=0 // pred_fallthru
    _
  %p26 = scmp.eq.s32.totalorder 0, 0
  // Predicated region
  $region26: #{encoder_forward.16} parent=0 // pred_check
    %p27 = pneg %p26
  $region27: #{encoder_forward.16} parent=0 // pred_check_branch
    %29 = sbr.rel (%p27) target = $region29
  $region28: #{encoder_forward.16} parent=0 // pred_region
    %vm30 = vcmask 261120
    %31 = vst.msk [vmem:[#allocation2] sm:$0xff] %vm30, 0.0
    %32 = vst.msk [vmem:[#allocation2 + $0x8] sm:$0xff] %vm30, 0.0
  $region29: #{encoder_forward.16} parent=0 // pred_fallthru
    _
  %v33 = vld [vmem:[#allocation2] sm:$0xff]
  %v34 = vld [vmem:[#allocation2 + $0x8] sm:$0xff]
  %v35 = vld [vmem:[%s0] sm:$0xf]
  %v36 = vld [vmem:[%s0 + $0x4] sm:$0xf]
  %v37 = vld [vmem:[%s1] sm:$0xff]
  %v38 = vld [vmem:[%s1 + $0x8] sm:$0xff]
  %v39 = vld [vmem:[%s1 + $0x10] sm:$0xff]
  %v40 = vld [vmem:[%s1 + $0x18] sm:$0xff]
  %v41 = vld [vmem:[%s1 + $0x20] sm:$0xff]
  %v42 = vld [vmem:[%s1 + $0x28] sm:$0xff]
  %v43 = vld [vmem:[%s1 + $0x30] sm:$0xff]
  %v44 = vld [vmem:[%s1 + $0x38] sm:$0xff]
  %v45 = vpack.c.bf16 %v38, %v37
  %v46 = vpack.c.bf16 %v40, %v39
  %v47 = vpack.c.bf16 %v42, %v41
  %v48 = vpack.c.bf16 %v44, %v43
  %v51 = vunpack.c.l.b16 %v35
  %v52 = vunpack.c.l.b16 %v36
  %v53 = vpack.c.b16 %v52, %v51
  %vm54 = vcmask 523264
  %v56 = vsel %vm54, %v53, 0
  %58 = vmatprep.subr.bf16.mxu0 0
  %59 = vmatpush1.bf16.msra.mxu0 0
  %60 = vmatprep.subr.bf16.mxu0 0
  %61 = vmatpush1.bf16.msra.mxu0 0
  %62 = vmatprep.subr.bf16.mxu0 0
  %63 = vmatpush1.bf16.msra.mxu0 0
  %64 = vmatprep.subr.bf16.mxu0 0
  %65 = vmatpush1.bf16.msra.mxu0 0
  %66 = vmatprep.subr.bf16.mxu0 0
  %67 = vmatpush1.bf16.msra.mxu0 %v48
  %68 = vmatprep.subr.bf16.mxu0 0
  %69 = vmatpush1.bf16.msra.mxu0 %v47
  %70 = vmatprep.subr.bf16.mxu0 0
  %71 = vmatpush1.bf16.msra.mxu0 %v46
  %72 = vmatprep.subr.bf16.mxu0 0
  %73 = vmatpush1.bf16.msra.mxu0 %v45
  %74 = vmatprep.subr.bf16.mxu0 0
  %75 = vmatpush2.bf16.msra.mxu0 0
  %76 = vmatprep.subr.bf16.mxu0 0
  %77 = vmatpush2.bf16.msra.mxu0 0
  %78 = vmatprep.subr.bf16.mxu0 0
  %79 = vmatpush2.bf16.msra.mxu0 0
  %80 = vmatprep.subr.bf16.mxu0 0
  %81 = vmatpush2.bf16.msra.mxu0 0
  %82 = vmatprep.subr.bf16.mxu0 0
  %83 = vmatpush2.bf16.msra.mxu0 0
  %84 = vmatprep.subr.bf16.mxu0 0
  %85 = vmatpush2.bf16.msra.mxu0 0
  %86 = vmatprep.subr.bf16.mxu0 0
  %87 = vmatpush2.bf16.msra.mxu0 0
  %88 = vmatprep.subr.bf16.mxu0 0
  %89 = vmatpush2.bf16.msra.mxu0 0
  %90 = vmatprep.mubr.bf16.mxu0 0
  %91 = vmatmul.mubr.bf16.gmra.mxu0 %v56
  %v92 = vpop.f32.mrf.mxu0
  %v93 = vadd.f32 0.0, %v92
  %v94 = vpop.f32.mrf.mxu0
  %v95 = vpop.f32.mrf.mxu0
  %v96 = vadd.f32 0.0, %v95
  %v97 = vpop.f32.mrf.mxu0
  %98 = vdwg.mxu0
  %v99 = vadd.f32 %v33, %v93
  %v100 = vadd.f32 %v34, %v96
  %vm101 = vcmask 261120
  %102 = vst.msk [vmem:[#allocation2] sm:$0xff] %vm101, %v99
  %103 = vst.msk [vmem:[#allocation2 + $0x8] sm:$0xff] %vm101, %v100
  // Predicated region
  $region30: #{encoder_forward.16} parent=0 // pred_check
    %p104 = pneg %p26
  $region31: #{encoder_forward.16} parent=0 // pred_check_branch
    %106 = sbr.rel (%p104) target = $region33
  $region32: #{encoder_forward.16} parent=0 // pred_region
    %v107 = vld [vmem:[#allocation2] sm:$0xff]
    %v108 = vld [vmem:[#allocation2 + $0x8] sm:$0xff]
    %v109 = vld [vmem:[%s2] sm:$0x1]
    %v111 = vlaneseq
    %v112 = vshrl.u32 %v111, 7
    %v113 = vsub.s32 0, %v112
    %v114 = vrot.slane %v109, %v113
    %v116 = vadd.f32 %v107, %v114
    %v117 = vadd.f32 %v108, %v114
    %v118 = vld [vmem:[%s3] sm:$0xff]
    %v119 = vld [vmem:[%s3 + $0x8] sm:$0xff]
    %v120 = vadd.f32 %v116, %v118
    %v121 = vadd.f32 %v117, %v119
    %v122 = vsel %vm101, %v120, 0.0
    %123 = vadd.xlane.f32.xlu0 %v122
    %v124 = vpop.xlane.xlu0 %123
    %v125 = vsel %vm101, %v121, 0.0
    %126 = vadd.xlane.f32.xlu0 %v125
    %v127 = vpop.xlane.xlu0 %126
    %v128 = vrcp.pop 32.0
    %v129 = vmul.f32 %v124, %v128
    %v130 = vmul.f32 %v127, %v128
    %v131 = vsub.f32 %v120, %v129
    %v132 = vsub.f32 %v121, %v130
    %v133 = vmul.f32 %v131, %v131
    %v134 = vmul.f32 %v132, %v132
    %v135 = vsel %vm101, %v133, 0.0
    %136 = vadd.xlane.f32.xlu0 %v135
    %v137 = vpop.xlane.xlu0 %136
    %v138 = vsel %vm101, %v134, 0.0
    %139 = vadd.xlane.f32.xlu0 %v138
    %v140 = vpop.xlane.xlu0 %139
    %v141 = vmul.f32 %v137, %v128
    %v142 = vmul.f32 %v140, %v128
    %v143 = vadd.f32 %v141, 1e-05
    %v144 = vadd.f32 %v142, 1e-05
    %v145 = vrsqrt.pop %v143
    %v146 = vrsqrt.pop %v144
    %v147 = vmul.f32 %v131, %v145
    %v148 = vmul.f32 %v132, %v146
    %v149 = vld [vmem:[%s4] sm:$0x1]
    %v151 = vlaneseq
    %v152 = vshrl.u32 %v151, 7
    %v153 = vsub.s32 0, %v152
    %v154 = vrot.slane %v149, %v153
    %v156 = vmul.f32 %v147, %v154
    %v157 = vmul.f32 %v148, %v154
    %v158 = vld [vmem:[%s5] sm:$0x1]
    %v160 = vlaneseq
    %v161 = vshrl.u32 %v160, 7
    %v162 = vsub.s32 0, %v161
    %v163 = vrot.slane %v158, %v162
    %v165 = vadd.f32 %v156, %v163
    %v166 = vadd.f32 %v157, %v163
    %167 = vst.msk [vmem:[%s6] sm:$0xff] %vm101, %v120
    %168 = vst.msk [vmem:[%s6 + $0x8] sm:$0xff] %vm101, %v121
    %v169 = vpack.c.bf16 %v166, %v165
    %v171 = vunpack.c.l.b16 %v169
    %v172 = vunpack.c.h.b16 %v169
    %v173 = vpack.c.b16 %v171, %v171
    %v174 = vpack.c.b16 %v172, %v172
    %vm177 = vcmask 257024
    %178 = vst.msk [vmem:[%s7] sm:$0xf] %vm177, %v173
    %179 = vst.msk [vmem:[%s7 + $0x4] sm:$0xf] %vm177, %v174
  $region33: #{encoder_forward.16} parent=0 // pred_fallthru
    _
  // Predicated region
  $region34: #{encoder_forward.16} parent=0 // pred_check
    _
  $region35: #{encoder_forward.16} parent=0 // pred_check_branch
    %181 = sbr.rel (0) target = $region37
  $region36: #{encoder_forward.16} parent=0 // pred_region
    _
  $region37: #{encoder_forward.16} parent=0 // pred_fallthru
    _
  // Predicated region
  $region38: #{encoder_forward.16} parent=0 // pred_check
    _
  $region39: #{encoder_forward.16} parent=0 // pred_check_branch
    %183 = sbr.rel (0) target = $region41
  $region40: #{encoder_forward.16} parent=0 // pred_region
    _
  $region41: #{encoder_forward.16} parent=0 // pred_fallthru
    _
  // Predicated region
  $region42: #{encoder_forward.16} parent=0 // pred_check
    _
  $region43: #{encoder_forward.16} parent=0 // pred_check_branch
    %185 = sbr.rel (0) target = $region45
  $region44: #{encoder_forward.16} parent=0 // pred_region
    _
  $region45: #{encoder_forward.16} parent=0 // pred_fallthru
    _
  // Predicated region
  $region46: #{encoder_forward.16} parent=0 // pred_check
    _
  $region47: #{encoder_forward.16} parent=0 // pred_check_branch
    %187 = sbr.rel (0) target = $region49
  $region48: #{encoder_forward.16} parent=0 // pred_region
    _
  $region49: #{encoder_forward.16} parent=0 // pred_fallthru
    _

// kernel: encoder_forward.21
$region0: #{encoder_forward.21}
  #allocation0 [shape = 'u32[]', space=smem, size = 0x4, offset = 0x4, fixed_abs, tag = 'smem constant byte address 0x4 - core index']
  #allocation1 [shape = 'u32[144,128]{1,0:T(1,128)}', space=vmem, size = 0x12000, scoped, tag = 'internal scratch']
  #allocation2 [shape = 'f32[16,32]{1,0:T(8,128)}', space=vmem, size = 0x2000, scoped, tag = 'scratch operand']
  %s0 = inlined_call_operand.vmem [shape: bf16[16,64], index: 0, kind: input, shape index: {}]
  %s1 = inlined_call_operand.vmem [shape: f32[64,32], index: 1, kind: input, shape index: {}]
  %s2 = inlined_call_operand.vmem [shape: f32[1,32], index: 2, kind: input, shape index: {}]
  %s3 = inlined_call_operand.vmem [shape: f32[16,32], index: 3, kind: input, shape index: {}]
  %s4 = inlined_call_operand.vmem [shape: f32[1,32], index: 4, kind: input, shape index: {}]
  %s5 = inlined_call_operand.vmem [shape: f32[1,32], index: 5, kind: input, shape index: {}]
  %s6 = inlined_call_operand.hbm [shape: f32[16,32], index: 6, kind: output, shape index: {0}]
  %s7 = inlined_call_operand.hbm [shape: f32[16,32], index: 7, kind: output, shape index: {1}]
  %8 = xla_tuple %s6, %s7
  %s9 = sld [smem:[#allocation0]]
  $region50: #{encoder_forward.21} parent=0
    _
  %s11 = ssub.s32 1, %s9
  %s12 = scalar_select 0, %s11, %s9
  $region1: #{encoder_forward.21} parent=0
    #allocation3 [shape = 'u8[8192]{0}', space=vmem, size = 0x2000, scoped, tag = 'output window, operand 0, single buffered']
    #allocation4 [shape = 's32[1]{0}', space=sflag, size = 0x4, scoped, tag = 'scoped memory for encoder_forward.21']
    #allocation5 [shape = 'u8[8192]{0}', space=vmem, size = 0x2000, scoped, tag = 'output window, operand 1, single buffered']
    #allocation6 [shape = 's32[1]{0}', space=sflag, size = 0x4, scoped, tag = 'scoped memory for encoder_forward.21']
    %13 = vsyncpa [#allocation4], 0
    %14 = vsyncpa [#allocation6], 0
    // Predicated region
    $region2: #{encoder_forward.21} parent=1 // pred_check
      _
    $region3: #{encoder_forward.21} parent=1 // pred_check_branch
      %16 = sbr.rel (0) target = $region5
    $region4: #{encoder_forward.21} parent=1 // pred_region
      _
    $region5: #{encoder_forward.21} parent=1 // pred_fallthru
      _
    // Predicated region
    $region6: #{encoder_forward.21} parent=1 // pred_check
      _
    $region7: #{encoder_forward.21} parent=1 // pred_check_branch
      %18 = sbr.rel (0) target = $region9
    $region8: #{encoder_forward.21} parent=1 // pred_region
      _
    $region9: #{encoder_forward.21} parent=1 // pred_fallthru
      _
    // Predicated region
    $region10: #{encoder_forward.21} parent=1 // pred_check
      _
    $region11: #{encoder_forward.21} parent=1 // pred_check_branch
      %20 = sbr.rel (0) target = $region13
    $region12: #{encoder_forward.21} parent=1 // pred_region
      _
    $region13: #{encoder_forward.21} parent=1 // pred_fallthru
      _
    // Predicated region
    $region14: #{encoder_forward.21} parent=1 // pred_check
      _
    $region15: #{encoder_forward.21} parent=1 // pred_check_branch
      %22 = sbr.rel (0) target = $region17
    $region16: #{encoder_forward.21} parent=1 // pred_region
      _
    $region17: #{encoder_forward.21} parent=1 // pred_fallthru
      _
    // Predicated region
    $region18: #{encoder_forward.21} parent=1 // pred_check
      _
    $region19: #{encoder_forward.21} parent=1 // pred_check_branch
      %24 = sbr.rel (0) target = $region21
    $region20: #{encoder_forward.21} parent=1 // pred_region
      _
    $region21: #{encoder_forward.21} parent=1 // pred_fallthru
      _
    // Predicated region
    $region22: #{encoder_forward.21} parent=1 // pred_check
      _
    $region23: #{encoder_forward.21} parent=1 // pred_check_branch
      %26 = sbr.rel (0) target = $region25
    $region24: #{encoder_forward.21} parent=1 // pred_region
      _
    $region25: #{encoder_forward.21} parent=1 // pred_fallthru
      _
    %p28 = scmp.eq.s32.totalorder 0, 0
    // Predicated region
    $region26: #{encoder_forward.21} parent=1 // pred_check
      %p29 = pneg %p28
    $region27: #{encoder_forward.21} parent=1 // pred_check_branch
      %31 = sbr.rel (%p29) target = $region29
    $region28: #{encoder_forward.21} parent=1 // pred_region
      %vm32 = vcmask 261120
      %33 = vst.msk [vmem:[#allocation2] sm:$0xff] %vm32, 0.0
      %34 = vst.msk [vmem:[#allocation2 + $0x8] sm:$0xff] %vm32, 0.0
    $region29: #{encoder_forward.21} parent=1 // pred_fallthru
      _
    %v35 = vld [vmem:[#allocation2] sm:$0xff]
    %v36 = vld [vmem:[#allocation2 + $0x8] sm:$0xff]
    %v37 = vld [vmem:[%s0] sm:$0xf]
    %v38 = vld [vmem:[%s0 + $0x4] sm:$0xf]
    %v39 = vld [vmem:[%s1] sm:$0xff]
    %v40 = vld [vmem:[%s1 + $0x8] sm:$0xff]
    %v41 = vld [vmem:[%s1 + $0x10] sm:$0xff]
    %v42 = vld [vmem:[%s1 + $0x18] sm:$0xff]
    %v43 = vld [vmem:[%s1 + $0x20] sm:$0xff]
    %v44 = vld [vmem:[%s1 + $0x28] sm:$0xff]
    %v45 = vld [vmem:[%s1 + $0x30] sm:$0xff]
    %v46 = vld [vmem:[%s1 + $0x38] sm:$0xff]
    %v47 = vpack.c.bf16 %v40, %v39
    %v48 = vpack.c.bf16 %v42, %v41
    %v49 = vpack.c.bf16 %v44, %v43
    %v50 = vpack.c.bf16 %v46, %v45
    %v53 = vunpack.c.l.b16 %v37
    %v54 = vunpack.c.l.b16 %v38
    %v55 = vpack.c.b16 %v54, %v53
    %vm56 = vcmask 523264
    %v58 = vsel %vm56, %v55, 0
    %60 = vmatprep.subr.bf16.mxu0 0
    %61 = vmatpush1.bf16.msra.mxu0 0
    %62 = vmatprep.subr.bf16.mxu0 0
    %63 = vmatpush1.bf16.msra.mxu0 0
    %64 = vmatprep.subr.bf16.mxu0 0
    %65 = vmatpush1.bf16.msra.mxu0 0
    %66 = vmatprep.subr.bf16.mxu0 0
    %67 = vmatpush1.bf16.msra.mxu0 0
    %68 = vmatprep.subr.bf16.mxu0 0
    %69 = vmatpush1.bf16.msra.mxu0 %v50
    %70 = vmatprep.subr.bf16.mxu0 0
    %71 = vmatpush1.bf16.msra.mxu0 %v49
    %72 = vmatprep.subr.bf16.mxu0 0
    %73 = vmatpush1.bf16.msra.mxu0 %v48
    %74 = vmatprep.subr.bf16.mxu0 0
    %75 = vmatpush1.bf16.msra.mxu0 %v47
    %76 = vmatprep.subr.bf16.mxu0 0
    %77 = vmatpush2.bf16.msra.mxu0 0
    %78 = vmatprep.subr.bf16.mxu0 0
    %79 = vmatpush2.bf16.msra.mxu0 0
    %80 = vmatprep.subr.bf16.mxu0 0
    %81 = vmatpush2.bf16.msra.mxu0 0
    %82 = vmatprep.subr.bf16.mxu0 0
    %83 = vmatpush2.bf16.msra.mxu0 0
    %84 = vmatprep.subr.bf16.mxu0 0
    %85 = vmatpush2.bf16.msra.mxu0 0
    %86 = vmatprep.subr.bf16.mxu0 0
    %87 = vmatpush2.bf16.msra.mxu0 0
    %88 = vmatprep.subr.bf16.mxu0 0
    %89 = vmatpush2.bf16.msra.mxu0 0
    %90 = vmatprep.subr.bf16.mxu0 0
    %91 = vmatpush2.bf16.msra.mxu0 0
    %92 = vmatprep.mubr.bf16.mxu0 0
    %93 = vmatmul.mubr.bf16.gmra.mxu0 %v58
    %v94 = vpop.f32.mrf.mxu0
    %v95 = vadd.f32 0.0, %v94
    %v96 = vpop.f32.mrf.mxu0
    %v97 = vpop.f32.mrf.mxu0
    %v98 = vadd.f32 0.0, %v97
    %v99 = vpop.f32.mrf.mxu0
    %100 = vdwg.mxu0
    %v101 = vadd.f32 %v35, %v95
    %v102 = vadd.f32 %v36, %v98
    %vm103 = vcmask 261120
    %104 = vst.msk [vmem:[#allocation2] sm:$0xff] %vm103, %v101
    %105 = vst.msk [vmem:[#allocation2 + $0x8] sm:$0xff] %vm103, %v102
    // Predicated region
    $region30: #{encoder_forward.21} parent=1 // pred_check
      %p106 = pneg %p28
    $region31: #{encoder_forward.21} parent=1 // pred_check_branch
      %108 = sbr.rel (%p106) target = $region33
    $region32: #{encoder_forward.21} parent=1 // pred_region
      %v109 = vld [vmem:[#allocation2] sm:$0xff]
      %v110 = vld [vmem:[#allocation2 + $0x8] sm:$0xff]
      %v111 = vld [vmem:[%s2] sm:$0x1]
      %v113 = vlaneseq
      %v114 = vshrl.u32 %v113, 7
      %v115 = vsub.s32 0, %v114
      %v116 = vrot.slane %v111, %v115
      %v118 = vadd.f32 %v109, %v116
      %v119 = vadd.f32 %v110, %v116
      %v120 = vld [vmem:[%s3] sm:$0xff]
      %v121 = vld [vmem:[%s3 + $0x8] sm:$0xff]
      %v122 = vadd.f32 %v118, %v120
      %v123 = vadd.f32 %v119, %v121
      %v124 = vsel %vm103, %v122, 0.0
      %125 = vadd.xlane.f32.xlu0 %v124
      %v126 = vpop.xlane.xlu0 %125
      %v127 = vsel %vm103, %v123, 0.0
      %128 = vadd.xlane.f32.xlu0 %v127
      %v129 = vpop.xlane.xlu0 %128
      %v130 = vrcp.pop 32.0
      %v131 = vmul.f32 %v126, %v130
      %v132 = vmul.f32 %v129, %v130
      %v133 = vsub.f32 %v122, %v131
      %v134 = vsub.f32 %v123, %v132
      %v135 = vmul.f32 %v133, %v133
      %v136 = vmul.f32 %v134, %v134
      %v137 = vsel %vm103, %v135, 0.0
      %138 = vadd.xlane.f32.xlu0 %v137
      %v139 = vpop.xlane.xlu0 %138
      %v140 = vsel %vm103, %v136, 0.0
      %141 = vadd.xlane.f32.xlu0 %v140
      %v142 = vpop.xlane.xlu0 %141
      %v143 = vmul.f32 %v139, %v130
      %v144 = vmul.f32 %v142, %v130
      %v145 = vadd.f32 %v143, 1e-05
      %v146 = vadd.f32 %v144, 1e-05
      %v147 = vrsqrt.pop %v145
      %v148 = vrsqrt.pop %v146
      %v149 = vmul.f32 %v133, %v147
      %v150 = vmul.f32 %v134, %v148
      %v151 = vld [vmem:[%s4] sm:$0x1]
      %v153 = vlaneseq
      %v154 = vshrl.u32 %v153, 7
      %v155 = vsub.s32 0, %v154
      %v156 = vrot.slane %v151, %v155
      %v158 = vmul.f32 %v149, %v156
      %v159 = vmul.f32 %v150, %v156
      %v160 = vld [vmem:[%s5] sm:$0x1]
      %v162 = vlaneseq
      %v163 = vshrl.u32 %v162, 7
      %v164 = vsub.s32 0, %v163
      %v165 = vrot.slane %v160, %v164
      %v167 = vadd.f32 %v158, %v165
      %v168 = vadd.f32 %v159, %v165
      %169 = vst.msk [vmem:[#allocation3] sm:$0xff] %vm103, %v122
      %170 = vst.msk [vmem:[#allocation3 + $0x8] sm:$0xff] %vm103, %v123
      %171 = vst.msk [vmem:[#allocation5] sm:$0xff] %vm103, %v167
      %172 = vst.msk [vmem:[#allocation5 + $0x8] sm:$0xff] %vm103, %v168
    $region33: #{encoder_forward.21} parent=1 // pred_fallthru
      _
    // Predicated region
    $region34: #{encoder_forward.21} parent=1 // pred_check
      _
    $region35: #{encoder_forward.21} parent=1 // pred_check_branch
      %174 = sbr.rel (0) target = $region37
    $region36: #{encoder_forward.21} parent=1 // pred_region
      %s176 = ssub.s32 256, 256
      %177 = vsyncadd [#allocation4], %s176
      %s178 = sshll.u32 [#allocation3], 4
      %s179 = int_to_ptr.vmem [resolvable:$true] %s178
      %184 = dma.vmem_to_hbm [thread:$0]  %s179, 256, %s6, [#allocation4], 128, 128, 8
    $region37: #{encoder_forward.21} parent=1 // pred_fallthru
      _
    // Predicated region
    $region38: #{encoder_forward.21} parent=1 // pred_check
      _
    $region39: #{encoder_forward.21} parent=1 // pred_check_branch
      %186 = sbr.rel (0) target = $region41
    $region40: #{encoder_forward.21} parent=1 // pred_region
      %s188 = ssub.s32 256, 256
      %189 = vsyncadd [#allocation6], %s188
      %s190 = sshll.u32 [#allocation5], 4
      %s191 = int_to_ptr.vmem [resolvable:$true] %s190
      %196 = dma.vmem_to_hbm [thread:$0]  %s191, 256, %s7, [#allocation6], 128, 128, 8
    $region41: #{encoder_forward.21} parent=1 // pred_fallthru
      _
    // Predicated region
    $region42: #{encoder_forward.21} parent=1 // pred_check
      _
    $region43: #{encoder_forward.21} parent=1 // pred_check_branch
      %198 = sbr.rel (0) target = $region45
    $region44: #{encoder_forward.21} parent=1 // pred_region
      %199 = dma.done [#allocation4], 256
    $region45: #{encoder_forward.21} parent=1 // pred_fallthru
      _
    // Predicated region
    $region46: #{encoder_forward.21} parent=1 // pred_check
      _
    $region47: #{encoder_forward.21} parent=1 // pred_check_branch
      %201 = sbr.rel (0) target = $region49
    $region48: #{encoder_forward.21} parent=1 // pred_region
      %202 = dma.done [#allocation6], 256
    $region49: #{encoder_forward.21} parent=1 // pred_fallthru
      _
    %203 = vsyncpa [#allocation4], 1
    %204 = vsyncpa [#allocation6], 1

</llo_original>
